<compile_context>
chip_gen: v5e
topology: v5e:2x2
jax: 0.10.0
libtpu: 0.0.40
codegen_flags: <defaults>
</compile_context>

<pallas_src>
import functools

import jax
import jax.numpy as jnp
from jax.experimental import pallas as pl
from jax.experimental.pallas import tpu as pltpu

_EPS = 1e-12                      # F.normalize default eps
_VMEM_BUDGET = 24 * 1024 * 1024   # live tile bytes; conservative for v7x 64 MiB/TC
_VMEM_LIMIT = 40 * 1024 * 1024    # explicit scoped-VMEM limit (v5e default is 16 MiB)


def _round_up(a, b):
    return (a + b - 1) // b * b


def _footprint_bytes(tm, tn, tk, in_bytes):
    """Approximate live VMEM of the pipelined kernel (double-buffered I/O)."""
    x_b = 2 * tm * tk * in_bytes        # x tile, double-buffered
    w_b = 2 * tk * tn * in_bytes        # w tile, double-buffered
    o_b = 2 * tm * tn * 4               # f32 output tile (doubles as accumulator)
    xi_b = 2 * tm * 128 * 4             # (tm, 1) f32 block pads to 128 lanes
    wi_b = 2 * 8 * tn * 4               # (1, tn) f32 block pads to 8 sublanes
    return x_b + w_b + o_b + xi_b + wi_b


def _normed_linear_kernel(x_ref, w_ref, xinv_ref, winv_ref, o_ref):
    """o[i,j] = (sum_k x[i,k] * w[k,j]) * (1/||x_i||) * (1/||w_j||)."""
    k = pl.program_id(2)

    @pl.when(k == 0)
    def _():
        o_ref[...] = jnp.zeros_like(o_ref)

    # bf16 x bf16 -> f32 accumulate on the MXU, directly into the resident
    # f32 output tile (block index constant across the K axis).
    o_ref[...] += jnp.dot(x_ref[...], w_ref[...],
                          preferred_element_type=jnp.float32)

    @pl.when(k == pl.num_programs(2) - 1)
    def _():
        # Fold the exact precomputed row / column inverse norms into the
        # finished tile.
        o_ref[...] = (o_ref[...] * xinv_ref[...] * winv_ref[...]
                      ).astype(o_ref.dtype)


@functools.partial(jax.jit, static_argnames=("tm", "tn", "tk", "compute_dtype"))
def _normed_linear_pallas(x, weight, *, tm, tn, tk, compute_dtype):
    B, F_in = x.shape
    _, F_out = weight.shape
    in_bytes = jnp.dtype(compute_dtype).itemsize

    # ---- Exact inverse norms over the FULL reduction axis (f32, once).
    x32 = x.astype(jnp.float32)
    w32 = weight.astype(jnp.float32)
    x_inv = 1.0 / jnp.maximum(
        jnp.sqrt(jnp.sum(x32 * x32, axis=1, keepdims=True)), _EPS)   # (B, 1)
    w_inv = 1.0 / jnp.maximum(
        jnp.sqrt(jnp.sum(w32 * w32, axis=0, keepdims=True)), _EPS)   # (1, F_out)

    # ---- Tile selection: lane-dense (128-multiples), big-as-fits.
    Bp128 = _round_up(B, 128)
    Np128 = _round_up(F_out, 128)
    Kp128 = _round_up(F_in, 128)

    tm_e = min(tm, Bp128)
    tn_e = min(tn, Np128)
    tk_e = min(tk, Kp128)   # default tk=2048: typical F_in -> single K step

    # Shrink to the VMEM budget (v7x has only 64 MiB per TensorCore).
    while _footprint_bytes(tm_e, tn_e, tk_e, in_bytes) > _VMEM_BUDGET:
        if tk_e > 512:
            tk_e = _round_up(tk_e // 2, 128)
        elif tn_e > 256:
            tn_e = _round_up(tn_e // 2, 128)
        elif tm_e > 256:
            tm_e = _round_up(tm_e // 2, 128)
        else:
            break

    # v7x megacore: guarantee >=2 blocks across the parallel (M, N) axes
    # whenever the problem is big enough to split.
    if (_round_up(B, tm_e) // tm_e) * (_round_up(F_out, tn_e) // tn_e) == 1:
        if Np128 >= 256:
            tn_e = _round_up(Np128 // 2, 128)
        elif Bp128 >= 256:
            tm_e = _round_up(Bp128 // 2, 128)

    Bp = _round_up(B, tm_e)
    Np = _round_up(F_out, tn_e)
    Kp = _round_up(F_in, tk_e)
    grid = (Bp // tm_e, Np // tn_e, Kp // tk_e)

    # ---- Cast once; pad only when the dims are not already tile multiples.
    # Zero-padded K contributes nothing to the dot; padded rows/cols get
    # inverse-norm 0 and are sliced off below.
    x_c = x.astype(compute_dtype)
    if (Bp, Kp) != (B, F_in):
        x_c = jnp.pad(x_c, ((0, Bp - B), (0, Kp - F_in)))
    w_c = weight.astype(compute_dtype)
    if (Kp, Np) != (F_in, F_out):
        w_c = jnp.pad(w_c, ((0, Kp - F_in), (0, Np - F_out)))
    if Bp != B:
        x_inv = jnp.pad(x_inv, ((0, Bp - B), (0, 0)))
    if Np != F_out:
        w_inv = jnp.pad(w_inv, ((0, 0), (0, Np - F_out)))

    cost = pl.CostEstimate(
        flops=2 * Bp * Np * Kp,
        transcendentals=0,
        bytes_accessed=(Bp * Kp * in_bytes * grid[1]      # x re-read per N tile
                        + Kp * Np * in_bytes * grid[0]    # w re-read per M tile
                        + Bp * Np * 4),                   # f32 output writeback
    )

    out = pl.pallas_call(
        _normed_linear_kernel,
        out_shape=jax.ShapeDtypeStruct((Bp, Np), jnp.float32),
        grid_spec=pltpu.PrefetchScalarGridSpec(
            num_scalar_prefetch=0,
            grid=grid,
            in_specs=[
                pl.BlockSpec((tm_e, tk_e), lambda i, j, k: (i, k)),
                pl.BlockSpec((tk_e, tn_e), lambda i, j, k: (k, j)),
                pl.BlockSpec((tm_e, 1), lambda i, j, k: (i, 0)),
                pl.BlockSpec((1, tn_e), lambda i, j, k: (0, j)),
            ],
            out_specs=pl.BlockSpec((tm_e, tn_e), lambda i, j, k: (i, j)),
        ),
        compiler_params=pltpu.CompilerParams(
            # M/N independent (shardable across v7x's two TCs); K = reduction.
            dimension_semantics=("parallel", "parallel", "arbitrary"),
            vmem_limit_bytes=_VMEM_LIMIT,
        ),
        cost_estimate=cost,
    )(x_c, w_c, x_inv, w_inv)

    return out[:B, :F_out]


def _normed_linear_reference(x, weight):
    """Pure-JAX fused reference (also the tiny-shape fallback path)."""
    x32 = x.astype(jnp.float32)
    w32 = weight.astype(jnp.float32)
    xn = x32 / jnp.maximum(jnp.linalg.norm(x32, axis=1, keepdims=True), _EPS)
    wn = w32 / jnp.maximum(jnp.linalg.norm(w32, axis=0, keepdims=True), _EPS)
    return xn @ wn


def normed_linear(x, weight, *, tm=512, tn=1024, tk=2048,
                  compute_dtype=jnp.bfloat16):
    """out = F.normalize(x, dim=1) @ F.normalize(weight, dim=0)."""
    B, F_in = x.shape
    F_in_w, F_out = weight.shape
    assert F_in == F_in_w
    # Degenerate tiny shapes: launch/DMA overhead dominates and sub-(8,128)
    # tiles waste most of every vreg -- let XLA's fused matmul handle it.
    if B < 8 or F_in < 128 or F_out < 128:
        return _normed_linear_reference(x, weight)
    return _normed_linear_pallas(x, weight, tm=tm, tn=tn, tk=tk,
                                 compute_dtype=compute_dtype)


def init_normed_linear_weight(key, in_features, out_features):
    """Emulates: Tensor(in, out).uniform_(-1,1).renorm_(2, 1, 1e-5).mul_(1e5)."""
    w = jax.random.uniform(
        key, (in_features, out_features), minval=-1.0, maxval=1.0,
        dtype=jnp.float32,
    )
    col_norm = jnp.linalg.norm(w, axis=0, keepdims=True)            # (1, out)
    maxnorm = 1e-5
    # PyTorch renorm scales by maxnorm / (norm + 1e-7) when norm > maxnorm.
    scale = jnp.where(col_norm > maxnorm, maxnorm / (col_norm + 1e-7), 1.0)
    return w * scale * 1e5


if __name__ == "__main__":
    key = jax.random.PRNGKey(0)
    k_x, k_w, k_x2, k_w2, k_x3, k_w3 = jax.random.split(key, 6)

    # --- 1) Default big-tile path: single K step, output-padding + the
    #        ">=2 parallel blocks" N split, f32 output used as accumulator.
    B, F_in, F_out = 256, 1024, 384
    x = jax.random.normal(k_x, (B, F_in), dtype=jnp.float32)
    w = init_normed_linear_weight(k_w, F_in, F_out)

    out = jax.block_until_ready(normed_linear(x, w))
    assert out.shape == (B, F_out)
    ref = _normed_linear_reference(x, w)
    # bf16 MXU operands -> ~1e-4-class error on cosine sims; norms are exact f32.
    assert jnp.allclose(out, ref, atol=5e-3, rtol=5e-3), float(
        jnp.max(jnp.abs(out - ref)))

    # --- 2) Force a multi-step K reduction and a multi-block M/N grid
    #        (exercises the resident-output accumulation across K).
    out_multik = jax.block_until_ready(
        normed_linear(x, w, tm=128, tn=128, tk=256))
    assert jnp.allclose(out_multik, ref, atol=5e-3, rtol=5e-3)

    # --- 3) Misaligned shape: pads B / F_in / F_out and splits N for megacore.
    B3, F_in3, F_out3 = 100, 1000, 200
    x3 = jax.random.normal(k_x3, (B3, F_in3), dtype=jnp.float32)
    w3 = init_normed_linear_weight(k_w3, F_in3, F_out3)
    out3 = jax.block_until_ready(normed_linear(x3, w3))
    ref3 = _normed_linear_reference(x3, w3)
    assert out3.shape == (B3, F_out3)
    assert jnp.allclose(out3, ref3, atol=5e-3, rtol=5e-3)

    # --- 4) Tiny CIFAR-head shape (in=64, out=10): fused XLA fallback, exact f32.
    xs = jax.random.normal(k_x2, (4, 64), dtype=jnp.float32)
    ws = init_normed_linear_weight(k_w2, 64, 10)
    outs = jax.block_until_ready(normed_linear(xs, ws))
    refs = _normed_linear_reference(xs, ws)
    assert jnp.allclose(outs, refs, atol=1e-5, rtol=1e-5)

    print("KERNEL_OK")
</pallas_src>

<mosaic_0001>
module attributes {stable_mosaic.version = 11 : i64} {
  func.func @_normed_linear_kernel(%arg0: i32, %arg1: i32, %arg2: i32, %arg3: memref<256x1024xbf16, #tpu.memory_space<vmem>>, %arg4: memref<1024x256xbf16, #tpu.memory_space<vmem>>, %arg5: memref<256x1xf32, #tpu.memory_space<vmem>>, %arg6: memref<1x256xf32, #tpu.memory_space<vmem>>, %arg7: memref<256x256xf32, #tpu.memory_space<vmem>>) attributes {dimension_semantics = [#tpu.dimension_semantics<parallel>, #tpu.dimension_semantics<parallel>, #tpu.dimension_semantics<arbitrary>], iteration_bounds = array<i64: 1, 2, 1>, scalar_prefetch = 0 : i64, scratch_operands = 0 : i64, tpu.core_type = #tpu.core_type<tc>, window_params = [{transform_indices = @transform_0, window_bounds = array<i64: 256, 1024>}, {transform_indices = @transform_1, window_bounds = array<i64: 1024, 256>}, {transform_indices = @transform_2, window_bounds = array<i64: 256, 1>}, {transform_indices = @transform_3, window_bounds = array<i64: 1, 256>}, {transform_indices = @transform_4, window_bounds = array<i64: 256, 256>}]} {
    %c0_i32 = arith.constant 0 : i32
    %0 = arith.cmpi eq, %arg2, %c0_i32 : i32
    %1 = arith.extui %0 : i1 to i32
    %c0_i32_0 = arith.constant 0 : i32
    %2 = arith.cmpi ne, %1, %c0_i32_0 : i32
    scf.if %2 {
      %cst_10 = arith.constant 0.000000e+00 : f32
      %12 = vector.broadcast %cst_10 : f32 to vector<256x256xf32>
      %c0_11 = arith.constant 0 : index
      %c0_12 = arith.constant 0 : index
      %13 = vector.load %arg7[%c0_11, %c0_12] : memref<256x256xf32, #tpu.memory_space<vmem>>, vector<256x256xf32>
      tpu.vector_store %arg7[%c0_11, %c0_12], %12 {strides = array<i32>} : memref<256x256xf32, #tpu.memory_space<vmem>>, vector<256x256xf32>,
    } else {
    }
    %c0 = arith.constant 0 : index
    %c0_1 = arith.constant 0 : index
    %3 = vector.load %arg7[%c0, %c0_1] : memref<256x256xf32, #tpu.memory_space<vmem>>, vector<256x256xf32>
    %c0_2 = arith.constant 0 : index
    %c0_3 = arith.constant 0 : index
    %4 = vector.load %arg3[%c0_2, %c0_3] : memref<256x1024xbf16, #tpu.memory_space<vmem>>, vector<256x1024xbf16>
    %c0_4 = arith.constant 0 : index
    %c0_5 = arith.constant 0 : index
    %5 = vector.load %arg4[%c0_4, %c0_5] : memref<1024x256xbf16, #tpu.memory_space<vmem>>, vector<1024x256xbf16>
    %cst = arith.constant dense<0.000000e+00> : vector<256x256xf32>
    %6 = tpu.matmul %4, %5, %cst {dimension_numbers = #tpu.dot_dimension_numbers<[1], [0], [0], [1], [0, 0, 1, 1], [], []>} : vector<256x1024xbf16>, vector<1024x256xbf16>, vector<256x256xf32> -> vector<256x256xf32>
    %7 = arith.addf %3, %6 : vector<256x256xf32>
    %c0_6 = arith.constant 0 : index
    %c0_7 = arith.constant 0 : index
    %8 = vector.load %arg7[%c0_6, %c0_7] : memref<256x256xf32, #tpu.memory_space<vmem>>, vector<256x256xf32>
    tpu.vector_store %arg7[%c0_6, %c0_7], %7 {strides = array<i32>} : memref<256x256xf32, #tpu.memory_space<vmem>>, vector<256x256xf32>,
    %c0_i32_8 = arith.constant 0 : i32
    %9 = arith.cmpi eq, %arg2, %c0_i32_8 : i32
    %10 = arith.extui %9 : i1 to i32
    %c0_i32_9 = arith.constant 0 : i32
    %11 = arith.cmpi ne, %10, %c0_i32_9 : i32
    scf.if %11 {
      %c0_10 = arith.constant 0 : index
      %c0_11 = arith.constant 0 : index
      %12 = vector.load %arg7[%c0_10, %c0_11] : memref<256x256xf32, #tpu.memory_space<vmem>>, vector<256x256xf32>
      %c0_12 = arith.constant 0 : index
      %c0_13 = arith.constant 0 : index
      %13 = vector.load %arg5[%c0_12, %c0_13] : memref<256x1xf32, #tpu.memory_space<vmem>>, vector<256x1xf32>
      %14 = vector.broadcast %13 : vector<256x1xf32> to vector<256x256xf32>
      %15 = arith.mulf %12, %14 : vector<256x256xf32>
      %c0_14 = arith.constant 0 : index
      %c0_15 = arith.constant 0 : index
      %16 = vector.load %arg6[%c0_14, %c0_15] : memref<1x256xf32, #tpu.memory_space<vmem>>, vector<1x256xf32>
      %17 = vector.broadcast %16 : vector<1x256xf32> to vector<256x256xf32>
      %18 = arith.mulf %15, %17 : vector<256x256xf32>
      %c0_16 = arith.constant 0 : index
      %c0_17 = arith.constant 0 : index
      %19 = vector.load %arg7[%c0_16, %c0_17] : memref<256x256xf32, #tpu.memory_space<vmem>>, vector<256x256xf32>
      tpu.vector_store %arg7[%c0_16, %c0_17], %18 {strides = array<i32>} : memref<256x256xf32, #tpu.memory_space<vmem>>, vector<256x256xf32>,
    } else {
    }
    return
  }
  func.func @transform_0(%arg0: i32, %arg1: i32, %arg2: i32) -> (i32, i32) {
    %c0_i32 = arith.constant 0 : i32
    return %arg0, %arg2 : i32, i32
  }
  func.func @transform_1(%arg0: i32, %arg1: i32, %arg2: i32) -> (i32, i32) {
    %c0_i32 = arith.constant 0 : i32
    return %arg2, %arg1 : i32, i32
  }
  func.func @transform_2(%arg0: i32, %arg1: i32, %arg2: i32) -> (i32, i32) {
    %c0_i32 = arith.constant 0 : i32
    %c0_i32_0 = arith.constant 0 : i32
    return %arg0, %c0_i32 : i32, i32
  }
  func.func @transform_3(%arg0: i32, %arg1: i32, %arg2: i32) -> (i32, i32) {
    %c0_i32 = arith.constant 0 : i32
    %c0_i32_0 = arith.constant 0 : i32
    return %c0_i32, %arg1 : i32, i32
  }
  func.func @transform_4(%arg0: i32, %arg1: i32, %arg2: i32) -> (i32, i32) {
    %c0_i32 = arith.constant 0 : i32
    return %arg0, %arg1 : i32, i32
  }
}

</mosaic_0001>

<llo_original>
// kernel: _normed_linear_pallas.1
$region0: #{_normed_linear_pallas.1}
  #allocation0 [shape = 'u32[]', space=smem, size = 0x4, offset = 0x4, fixed_abs, tag = 'smem constant byte address 0x4 - core index']
  #allocation1 [shape = 'u32[72,128]{1,0:T(1,128)}', space=vmem, size = 0x9000, scoped, tag = 'internal scratch']
  %s0 = inlined_call_operand.vmem [shape: bf16[256,1024], index: 0, kind: input, shape index: {}]
  %s1 = inlined_call_operand.vmem [shape: bf16[1024,512], index: 1, kind: input, shape index: {}]
  %s2 = inlined_call_operand.vmem [shape: f32[256,1], index: 2, kind: input, shape index: {}]
  %s3 = inlined_call_operand.vmem [shape: f32[1,512], index: 3, kind: input, shape index: {}]
  %s4 = inlined_call_operand.vmem [shape: f32[256,512], index: 4, kind: output, shape index: {}]
  %s5 = sld [smem:[#allocation0]]
  $region114: #{_normed_linear_pallas.1} parent=0
    _
  %s7 = ssub.s32 1, %s5
  %s8 = scalar_select 0, %s7, %s5
  $region1: #{_normed_linear_pallas.1} parent=0
    #allocation2 [shape = 'u8[1048576]{0}', space=vmem, size = 0x100000, scoped, tag = 'input window, operand 1']
    #allocation3 [shape = 'u8[524288]{0}', space=vmem, size = 0x80000, scoped, tag = 'output window, operand 0']
    loop: start=0, step=1, limit=4
    $region2: #{_normed_linear_pallas.1} parent=1 // loop_pre_header
      _
    $region3: #{_normed_linear_pallas.1} parent=1 // loop_header
      %s10 = sphi 0, %s14
      %p11 = scmp.ge.s32.totalorder %s10, 4
      %s17 = sphi 0, %s36
      %s18 = sphi 0, %s32
      %s19 = sphi 0, %s28
      %s20 = sphi 0, %s17
      %s21 = sphi 0, %s18
      %s22 = sphi 0, %s19
      %s23 = sphi 0, %s20
      %s24 = sphi 0, %s21
      %s25 = sphi 0, %s22
      %s41 = sphi 0, %s43
      %s44 = sphi 0, %s41
      %s45 = sphi 0, %s44
      %s61 = sphi 0, %s45
      %s69 = sphi 0, %s71
      %s72 = sphi 0, %s69
      %s73 = sphi 0, %s72
      %s89 = sphi 0, %s73
      %s95 = sphi 0, %s97
      %s98 = sphi 0, %s95
      %s99 = sphi 0, %s98
      %s115 = sphi 0, %s99
      %s121 = sphi 0, %s123
      %s124 = sphi 0, %s121
      %s125 = sphi 0, %s124
      %s141 = sphi 0, %s125
      %s149 = sphi 0, %s151
      %s152 = sphi 0, %s149
      %s153 = sphi 0, %s152
      %s169 = sphi 0, %s153
    $region4: #{_normed_linear_pallas.1} parent=1 // loop_header_branch
      %13 = sbr.rel (%p11) target = $region8
    $region5: #{_normed_linear_pallas.1} parent=1 // loop_body
      %s15 = ssub.s32 %s10, 1
      %s16 = ssub.s32 %s10, 2
      %s26 = sadd.s32 1, %s19
      %p27 = scmp.ge.s32.totalorder %s26, 1
      %s28 = scalar_select %p27, 0, %s26
      %s29 = sadd.s32 1, %s18
      %s30 = scalar_select %p27, %s29, %s18
      %p31 = scmp.ge.s32.totalorder %s30, 2
      %s32 = scalar_select %p31, 0, %s30
      %s33 = sadd.s32 1, %s17
      %s34 = scalar_select %p31, %s33, %s17
      %p35 = scmp.ge.s32.totalorder %s34, 1
      %s36 = scalar_select %p35, 0, %s34
      %s37 = ssub.s32 %s17, %s36
      %s38 = ssub.s32 %s19, %s28
      %s39 = sor.u32 %s37, %s38
      %p40 = scmp.eq.s32.totalorder %s39, 0
      %s42 = sadd.s32 %s41, 1
      %s43 = scalar_select %p40, %s41, %s42
      %p46 = pneg %p40
      %p47 = scmp.eq.s32.totalorder %s10, 1
      %p48 = por %p46, %p47
      %p49 = scmp.ne.s32.totalorder %s41, %s44
      %p50 = scmp.eq.s32.totalorder %s10, 0
      %p51 = por %p49, %p50
      %p52 = scmp.ne.s32.totalorder %s41, %s44
      %p53 = scmp.eq.s32.totalorder %s15, 1
      %p54 = por %p52, %p53
      %p55 = scmp.ne.s32.totalorder %s44, %s45
      %p56 = scmp.eq.s32.totalorder %s15, 0
      %p57 = por %p55, %p56
      %p58 = scmp.ne.s32.totalorder %s44, %s45
      %p59 = scmp.eq.s32.totalorder %s16, 1
      %p60 = por %p58, %p59
      %p62 = scmp.ne.s32.totalorder %s45, %s61
      %p63 = scmp.eq.s32.totalorder %s16, 0
      %p64 = por %p62, %p63
      %s65 = ssub.s32 %s19, %s28
      %s66 = ssub.s32 %s18, %s32
      %s67 = sor.u32 %s65, %s66
      %p68 = scmp.eq.s32.totalorder %s67, 0
      %s70 = sadd.s32 %s69, 1
      %s71 = scalar_select %p68, %s69, %s70
      %p74 = pneg %p68
      %p75 = scmp.eq.s32.totalorder %s10, 1
      %p76 = por %p74, %p75
      %p77 = scmp.ne.s32.totalorder %s69, %s72
      %p78 = scmp.eq.s32.totalorder %s10, 0
      %p79 = por %p77, %p78
      %p80 = scmp.ne.s32.totalorder %s69, %s72
      %p81 = scmp.eq.s32.totalorder %s15, 1
      %p82 = por %p80, %p81
      %p83 = scmp.ne.s32.totalorder %s72, %s73
      %p84 = scmp.eq.s32.totalorder %s15, 0
      %p85 = por %p83, %p84
      %p86 = scmp.ne.s32.totalorder %s72, %s73
      %p87 = scmp.eq.s32.totalorder %s16, 1
      %p88 = por %p86, %p87
      %p90 = scmp.ne.s32.totalorder %s73, %s89
      %p91 = scmp.eq.s32.totalorder %s16, 0
      %p92 = por %p90, %p91
      %s93 = ssub.s32 %s17, %s36
      %p94 = scmp.eq.s32.totalorder %s93, 0
      %s96 = sadd.s32 %s95, 1
      %s97 = scalar_select %p94, %s95, %s96
      %p100 = pneg %p94
      %p101 = scmp.eq.s32.totalorder %s10, 1
      %p102 = por %p100, %p101
      %p103 = scmp.ne.s32.totalorder %s95, %s98
      %p104 = scmp.eq.s32.totalorder %s10, 0
      %p105 = por %p103, %p104
      %p106 = scmp.ne.s32.totalorder %s95, %s98
      %p107 = scmp.eq.s32.totalorder %s15, 1
      %p108 = por %p106, %p107
      %p109 = scmp.ne.s32.totalorder %s98, %s99
      %p110 = scmp.eq.s32.totalorder %s15, 0
      %p111 = por %p109, %p110
      %p112 = scmp.ne.s32.totalorder %s98, %s99
      %p113 = scmp.eq.s32.totalorder %s16, 1
      %p114 = por %p112, %p113
      %p116 = scmp.ne.s32.totalorder %s99, %s115
      %p117 = scmp.eq.s32.totalorder %s16, 0
      %p118 = por %p116, %p117
      %s119 = ssub.s32 %s18, %s32
      %p120 = scmp.eq.s32.totalorder %s119, 0
      %s122 = sadd.s32 %s121, 1
      %s123 = scalar_select %p120, %s121, %s122
      %p126 = pneg %p120
      %p127 = scmp.eq.s32.totalorder %s10, 1
      %p128 = por %p126, %p127
      %p129 = scmp.ne.s32.totalorder %s121, %s124
      %p130 = scmp.eq.s32.totalorder %s10, 0
      %p131 = por %p129, %p130
      %p132 = scmp.ne.s32.totalorder %s121, %s124
      %p133 = scmp.eq.s32.totalorder %s15, 1
      %p134 = por %p132, %p133
      %p135 = scmp.ne.s32.totalorder %s124, %s125
      %p136 = scmp.eq.s32.totalorder %s15, 0
      %p137 = por %p135, %p136
      %p138 = scmp.ne.s32.totalorder %s124, %s125
      %p139 = scmp.eq.s32.totalorder %s16, 1
      %p140 = por %p138, %p139
      %p142 = scmp.ne.s32.totalorder %s125, %s141
      %p143 = scmp.eq.s32.totalorder %s16, 0
      %p144 = por %p142, %p143
      %s145 = ssub.s32 %s17, %s36
      %s146 = ssub.s32 %s18, %s32
      %s147 = sor.u32 %s145, %s146
      %p148 = scmp.eq.s32.totalorder %s147, 0
      %s150 = sadd.s32 %s149, 1
      %s151 = scalar_select %p148, %s149, %s150
      %p154 = pneg %p148
      %p155 = scmp.eq.s32.totalorder %s10, 1
      %p156 = por %p154, %p155
      %p157 = scmp.ne.s32.totalorder %s149, %s152
      %p158 = scmp.eq.s32.totalorder %s10, 0
      %p159 = por %p157, %p158
      %p160 = scmp.ne.s32.totalorder %s149, %s152
      %p161 = scmp.eq.s32.totalorder %s15, 1
      %p162 = por %p160, %p161
      %p163 = scmp.ne.s32.totalorder %s152, %s153
      %p164 = scmp.eq.s32.totalorder %s15, 0
      %p165 = por %p163, %p164
      %p166 = scmp.ne.s32.totalorder %s152, %s153
      %p167 = scmp.eq.s32.totalorder %s16, 1
      %p168 = por %p166, %p167
      %p170 = scmp.ne.s32.totalorder %s153, %s169
      %p171 = scmp.eq.s32.totalorder %s16, 0
      %p172 = por %p170, %p171
      %p173 = scmp.le.s32.totalorder 1, %s10
      %p174 = scmp.lt.s32.totalorder %s10, 3
      %p175 = pnand %p173, %p174
      %p176 = pneg %p175
      // Predicated region
      $region9: #{_normed_linear_pallas.1} parent=5 // pred_check
        _
      $region10: #{_normed_linear_pallas.1} parent=5 // pred_check_branch
        %178 = sbr.rel (%p175) target = $region12
      $region11: #{_normed_linear_pallas.1} parent=5 // pred_region
        %s179 = ssub.s32 %s10, 1
        // Predicated region
        $region13: #{_normed_linear_pallas.1} parent=11 // pred_check
          %p180 = pneg %p57
        $region14: #{_normed_linear_pallas.1} parent=11 // pred_check_branch
          %182 = sbr.rel (%p180) target = $region16
        $region15: #{_normed_linear_pallas.1} parent=11 // pred_region
          %s183 = smul.u32 32, %s20
          %s184 = smul.u32 8, %s22
          %p185 = scmp.lt.s32.totalorder %s183, 31
          %s186 = scalar_select %p185, %s183, 31
          %p187 = scmp.lt.s32.totalorder %s184, 7
          %s188 = scalar_select %p187, %s184, 7
          %s189 = smul.addr %s186, 8
          %s190 = sadd.s32 %s188, %s189
          %s191 = smul.addr %s190, 4
          %s192 = scalar_lea.vmem %s0, %s191
          %s193 = smul.u32 32, %s20
          %s194 = smul.u32 8, %s22
        $region16: #{_normed_linear_pallas.1} parent=11 // pred_fallthru
          _
        // Predicated region
        $region17: #{_normed_linear_pallas.1} parent=11 // pred_check
          %p195 = pneg %p111
        $region18: #{_normed_linear_pallas.1} parent=11 // pred_check_branch
          %197 = sbr.rel (%p195) target = $region20
        $region19: #{_normed_linear_pallas.1} parent=11 // pred_region
          %s198 = smul.u32 32, %s20
          %p199 = scmp.lt.s32.totalorder %s198, 31
          %s200 = scalar_select %p199, %s198, 31
          %s201 = smul.addr %s200, 8
          %s202 = scalar_lea.vmem %s2, %s201
          %s203 = smul.u32 32, %s20
        $region20: #{_normed_linear_pallas.1} parent=11 // pred_fallthru
          _
      $region12: #{_normed_linear_pallas.1} parent=5 // pred_fallthru
        _
      %p204 = scmp.lt.s32.totalorder %s10, 2
      // Predicated region
      $region21: #{_normed_linear_pallas.1} parent=5 // pred_check
        %p205 = pneg %p204
      $region22: #{_normed_linear_pallas.1} parent=5 // pred_check_branch
        %207 = sbr.rel (%p205) target = $region24
      $region23: #{_normed_linear_pallas.1} parent=5 // pred_region
        // Predicated region
        $region25: #{_normed_linear_pallas.1} parent=23 // pred_check
          %p208 = pneg %p79
        $region26: #{_normed_linear_pallas.1} parent=23 // pred_check_branch
          %210 = sbr.rel (%p208) target = $region28
        $region27: #{_normed_linear_pallas.1} parent=23 // pred_region
          %s211 = sand.u32 %s69, 1
          %s212 = sand.u32 %s69, 1
          %s213 = smul.addr %s212, 1024
          %s214 = scalar_lea.vmem [#allocation2], %s213
          %s215 = smul.u32 128, %s19
          %s216 = smul.u32 2, %s18
          %s217 = smul.addr %s215, 4
          %s218 = sadd.s32 %s216, %s217
          %s219 = smul.addr %s218, 4
          %s220 = scalar_lea.vmem %s1, %s219
          // Predicated region
          $region29: #{_normed_linear_pallas.1} parent=27 // pred_check
            _
          $region30: #{_normed_linear_pallas.1} parent=27 // pred_check_branch
            %222 = sbr.rel (0) target = $region32
          $region31: #{_normed_linear_pallas.1} parent=27 // pred_region
            // Predicated region
            $region33: #{_normed_linear_pallas.1} parent=31 // pred_check
              _
            $region34: #{_normed_linear_pallas.1} parent=31 // pred_check_branch
              %224 = sbr.rel (0) target = $region36
            $region35: #{_normed_linear_pallas.1} parent=31 // pred_region
              // Predicated region
              $region48: #{_normed_linear_pallas.1} parent=35 // pred_check
                _
              $region49: #{_normed_linear_pallas.1} parent=35 // pred_check_branch
                %494 = sbr.rel (0) target = $region51
              $region50: #{_normed_linear_pallas.1} parent=35 // pred_region
                loop: start=0, step=1, limit=1
                $region52: #{_normed_linear_pallas.1} parent=50 // loop_pre_header
                  _
                $region53: #{_normed_linear_pallas.1} parent=50 // loop_header
                  %s496 = sphi 0, %s500
                  %p497 = scmp.ge.s32.totalorder %s496, 1
                  %s501 = sphi %s220, %s220
                  %s502 = sphi %s214, %s214
                $region54: #{_normed_linear_pallas.1} parent=50 // loop_header_branch
                  %499 = sbr.rel (%p497) target = $region58
                $region55: #{_normed_linear_pallas.1} parent=50 // loop_body
                  %v503 = vld [vmem:[%s501] sm:$0xff]
                  %504 = vst [vmem:[%s502] sm:$0xff] %v503
                  %v505 = vld [vmem:[%s501 + $0x10] sm:$0xff]
                  %506 = vst [vmem:[%s502 + $0x8] sm:$0xff] %v505
                  %v507 = vld [vmem:[%s501 + $0x20] sm:$0xff]
                  %508 = vst [vmem:[%s502 + $0x10] sm:$0xff] %v507
                  %v509 = vld [vmem:[%s501 + $0x30] sm:$0xff]
                  %510 = vst [vmem:[%s502 + $0x18] sm:$0xff] %v509
                  %v511 = vld [vmem:[%s501 + $0x40] sm:$0xff]
                  %512 = vst [vmem:[%s502 + $0x20] sm:$0xff] %v511
                  %v513 = vld [vmem:[%s501 + $0x50] sm:$0xff]
                  %514 = vst [vmem:[%s502 + $0x28] sm:$0xff] %v513
                  %v515 = vld [vmem:[%s501 + $0x60] sm:$0xff]
                  %516 = vst [vmem:[%s502 + $0x30] sm:$0xff] %v515
                  %v517 = vld [vmem:[%s501 + $0x70] sm:$0xff]
                  %518 = vst [vmem:[%s502 + $0x38] sm:$0xff] %v517
                  %v519 = vld [vmem:[%s501 + $0x80] sm:$0xff]
                  %520 = vst [vmem:[%s502 + $0x40] sm:$0xff] %v519
                  %v521 = vld [vmem:[%s501 + $0x90] sm:$0xff]
                  %522 = vst [vmem:[%s502 + $0x48] sm:$0xff] %v521
                  %v523 = vld [vmem:[%s501 + $0xa0] sm:$0xff]
                  %524 = vst [vmem:[%s502 + $0x50] sm:$0xff] %v523
                  %v525 = vld [vmem:[%s501 + $0xb0] sm:$0xff]
                  %526 = vst [vmem:[%s502 + $0x58] sm:$0xff] %v525
                  %v527 = vld [vmem:[%s501 + $0xc0] sm:$0xff]
                  %528 = vst [vmem:[%s502 + $0x60] sm:$0xff] %v527
                  %v529 = vld [vmem:[%s501 + $0xd0] sm:$0xff]
                  %530 = vst [vmem:[%s502 + $0x68] sm:$0xff] %v529
                  %v531 = vld [vmem:[%s501 + $0xe0] sm:$0xff]
                  %532 = vst [vmem:[%s502 + $0x70] sm:$0xff] %v531
                  %v533 = vld [vmem:[%s501 + $0xf0] sm:$0xff]
                  %534 = vst [vmem:[%s502 + $0x78] sm:$0xff] %v533
                  %v535 = vld [vmem:[%s501 + $0x100] sm:$0xff]
                  %536 = vst [vmem:[%s502 + $0x80] sm:$0xff] %v535
                  %v537 = vld [vmem:[%s501 + $0x110] sm:$0xff]
                  %538 = vst [vmem:[%s502 + $0x88] sm:$0xff] %v537
                  %v539 = vld [vmem:[%s501 + $0x120] sm:$0xff]
                  %540 = vst [vmem:[%s502 + $0x90] sm:$0xff] %v539
                  %v541 = vld [vmem:[%s501 + $0x130] sm:$0xff]
                  %542 = vst [vmem:[%s502 + $0x98] sm:$0xff] %v541
                  %v543 = vld [vmem:[%s501 + $0x140] sm:$0xff]
                  %544 = vst [vmem:[%s502 + $0xa0] sm:$0xff] %v543
                  %v545 = vld [vmem:[%s501 + $0x150] sm:$0xff]
                  %546 = vst [vmem:[%s502 + $0xa8] sm:$0xff] %v545
                  %v547 = vld [vmem:[%s501 + $0x160] sm:$0xff]
                  %548 = vst [vmem:[%s502 + $0xb0] sm:$0xff] %v547
                  %v549 = vld [vmem:[%s501 + $0x170] sm:$0xff]
                  %550 = vst [vmem:[%s502 + $0xb8] sm:$0xff] %v549
                  %v551 = vld [vmem:[%s501 + $0x180] sm:$0xff]
                  %552 = vst [vmem:[%s502 + $0xc0] sm:$0xff] %v551
                  %v553 = vld [vmem:[%s501 + $0x190] sm:$0xff]
                  %554 = vst [vmem:[%s502 + $0xc8] sm:$0xff] %v553
                  %v555 = vld [vmem:[%s501 + $0x1a0] sm:$0xff]
                  %556 = vst [vmem:[%s502 + $0xd0] sm:$0xff] %v555
                  %v557 = vld [vmem:[%s501 + $0x1b0] sm:$0xff]
                  %558 = vst [vmem:[%s502 + $0xd8] sm:$0xff] %v557
                  %v559 = vld [vmem:[%s501 + $0x1c0] sm:$0xff]
                  %560 = vst [vmem:[%s502 + $0xe0] sm:$0xff] %v559
                  %v561 = vld [vmem:[%s501 + $0x1d0] sm:$0xff]
                  %562 = vst [vmem:[%s502 + $0xe8] sm:$0xff] %v561
                  %v563 = vld [vmem:[%s501 + $0x1e0] sm:$0xff]
                  %564 = vst [vmem:[%s502 + $0xf0] sm:$0xff] %v563
                  %v565 = vld [vmem:[%s501 + $0x1f0] sm:$0xff]
                  %566 = vst [vmem:[%s502 + $0xf8] sm:$0xff] %v565
                  %v567 = vld [vmem:[%s501 + $0x200] sm:$0xff]
                  %568 = vst [vmem:[%s502 + $0x100] sm:$0xff] %v567
                  %v569 = vld [vmem:[%s501 + $0x210] sm:$0xff]
                  %570 = vst [vmem:[%s502 + $0x108] sm:$0xff] %v569
                  %v571 = vld [vmem:[%s501 + $0x220] sm:$0xff]
                  %572 = vst [vmem:[%s502 + $0x110] sm:$0xff] %v571
                  %v573 = vld [vmem:[%s501 + $0x230] sm:$0xff]
                  %574 = vst [vmem:[%s502 + $0x118] sm:$0xff] %v573
                  %v575 = vld [vmem:[%s501 + $0x240] sm:$0xff]
                  %576 = vst [vmem:[%s502 + $0x120] sm:$0xff] %v575
                  %v577 = vld [vmem:[%s501 + $0x250] sm:$0xff]
                  %578 = vst [vmem:[%s502 + $0x128] sm:$0xff] %v577
                  %v579 = vld [vmem:[%s501 + $0x260] sm:$0xff]
                  %580 = vst [vmem:[%s502 + $0x130] sm:$0xff] %v579
                  %v581 = vld [vmem:[%s501 + $0x270] sm:$0xff]
                  %582 = vst [vmem:[%s502 + $0x138] sm:$0xff] %v581
                  %v583 = vld [vmem:[%s501 + $0x280] sm:$0xff]
                  %584 = vst [vmem:[%s502 + $0x140] sm:$0xff] %v583
                  %v585 = vld [vmem:[%s501 + $0x290] sm:$0xff]
                  %586 = vst [vmem:[%s502 + $0x148] sm:$0xff] %v585
                  %v587 = vld [vmem:[%s501 + $0x2a0] sm:$0xff]
                  %588 = vst [vmem:[%s502 + $0x150] sm:$0xff] %v587
                  %v589 = vld [vmem:[%s501 + $0x2b0] sm:$0xff]
                  %590 = vst [vmem:[%s502 + $0x158] sm:$0xff] %v589
                  %v591 = vld [vmem:[%s501 + $0x2c0] sm:$0xff]
                  %592 = vst [vmem:[%s502 + $0x160] sm:$0xff] %v591
                  %v593 = vld [vmem:[%s501 + $0x2d0] sm:$0xff]
                  %594 = vst [vmem:[%s502 + $0x168] sm:$0xff] %v593
                  %v595 = vld [vmem:[%s501 + $0x2e0] sm:$0xff]
                  %596 = vst [vmem:[%s502 + $0x170] sm:$0xff] %v595
                  %v597 = vld [vmem:[%s501 + $0x2f0] sm:$0xff]
                  %598 = vst [vmem:[%s502 + $0x178] sm:$0xff] %v597
                  %v599 = vld [vmem:[%s501 + $0x300] sm:$0xff]
                  %600 = vst [vmem:[%s502 + $0x180] sm:$0xff] %v599
                  %v601 = vld [vmem:[%s501 + $0x310] sm:$0xff]
                  %602 = vst [vmem:[%s502 + $0x188] sm:$0xff] %v601
                  %v603 = vld [vmem:[%s501 + $0x320] sm:$0xff]
                  %604 = vst [vmem:[%s502 + $0x190] sm:$0xff] %v603
                  %v605 = vld [vmem:[%s501 + $0x330] sm:$0xff]
                  %606 = vst [vmem:[%s502 + $0x198] sm:$0xff] %v605
                  %v607 = vld [vmem:[%s501 + $0x340] sm:$0xff]
                  %608 = vst [vmem:[%s502 + $0x1a0] sm:$0xff] %v607
                  %v609 = vld [vmem:[%s501 + $0x350] sm:$0xff]
                  %610 = vst [vmem:[%s502 + $0x1a8] sm:$0xff] %v609
                  %v611 = vld [vmem:[%s501 + $0x360] sm:$0xff]
                  %612 = vst [vmem:[%s502 + $0x1b0] sm:$0xff] %v611
                  %v613 = vld [vmem:[%s501 + $0x370] sm:$0xff]
                  %614 = vst [vmem:[%s502 + $0x1b8] sm:$0xff] %v613
                  %v615 = vld [vmem:[%s501 + $0x380] sm:$0xff]
                  %616 = vst [vmem:[%s502 + $0x1c0] sm:$0xff] %v615
                  %v617 = vld [vmem:[%s501 + $0x390] sm:$0xff]
                  %618 = vst [vmem:[%s502 + $0x1c8] sm:$0xff] %v617
                  %v619 = vld [vmem:[%s501 + $0x3a0] sm:$0xff]
                  %620 = vst [vmem:[%s502 + $0x1d0] sm:$0xff] %v619
                  %v621 = vld [vmem:[%s501 + $0x3b0] sm:$0xff]
                  %622 = vst [vmem:[%s502 + $0x1d8] sm:$0xff] %v621
                  %v623 = vld [vmem:[%s501 + $0x3c0] sm:$0xff]
                  %624 = vst [vmem:[%s502 + $0x1e0] sm:$0xff] %v623
                  %v625 = vld [vmem:[%s501 + $0x3d0] sm:$0xff]
                  %626 = vst [vmem:[%s502 + $0x1e8] sm:$0xff] %v625
                  %v627 = vld [vmem:[%s501 + $0x3e0] sm:$0xff]
                  %628 = vst [vmem:[%s502 + $0x1f0] sm:$0xff] %v627
                  %v629 = vld [vmem:[%s501 + $0x3f0] sm:$0xff]
                  %630 = vst [vmem:[%s502 + $0x1f8] sm:$0xff] %v629
                  %v631 = vld [vmem:[%s501 + $0x400] sm:$0xff]
                  %632 = vst [vmem:[%s502 + $0x200] sm:$0xff] %v631
                  %v633 = vld [vmem:[%s501 + $0x410] sm:$0xff]
                  %634 = vst [vmem:[%s502 + $0x208] sm:$0xff] %v633
                  %v635 = vld [vmem:[%s501 + $0x420] sm:$0xff]
                  %636 = vst [vmem:[%s502 + $0x210] sm:$0xff] %v635
                  %v637 = vld [vmem:[%s501 + $0x430] sm:$0xff]
                  %638 = vst [vmem:[%s502 + $0x218] sm:$0xff] %v637
                  %v639 = vld [vmem:[%s501 + $0x440] sm:$0xff]
                  %640 = vst [vmem:[%s502 + $0x220] sm:$0xff] %v639
                  %v641 = vld [vmem:[%s501 + $0x450] sm:$0xff]
                  %642 = vst [vmem:[%s502 + $0x228] sm:$0xff] %v641
                  %v643 = vld [vmem:[%s501 + $0x460] sm:$0xff]
                  %644 = vst [vmem:[%s502 + $0x230] sm:$0xff] %v643
                  %v645 = vld [vmem:[%s501 + $0x470] sm:$0xff]
                  %646 = vst [vmem:[%s502 + $0x238] sm:$0xff] %v645
                  %v647 = vld [vmem:[%s501 + $0x480] sm:$0xff]
                  %648 = vst [vmem:[%s502 + $0x240] sm:$0xff] %v647
                  %v649 = vld [vmem:[%s501 + $0x490] sm:$0xff]
                  %650 = vst [vmem:[%s502 + $0x248] sm:$0xff] %v649
                  %v651 = vld [vmem:[%s501 + $0x4a0] sm:$0xff]
                  %652 = vst [vmem:[%s502 + $0x250] sm:$0xff] %v651
                  %v653 = vld [vmem:[%s501 + $0x4b0] sm:$0xff]
                  %654 = vst [vmem:[%s502 + $0x258] sm:$0xff] %v653
                  %v655 = vld [vmem:[%s501 + $0x4c0] sm:$0xff]
                  %656 = vst [vmem:[%s502 + $0x260] sm:$0xff] %v655
                  %v657 = vld [vmem:[%s501 + $0x4d0] sm:$0xff]
                  %658 = vst [vmem:[%s502 + $0x268] sm:$0xff] %v657
                  %v659 = vld [vmem:[%s501 + $0x4e0] sm:$0xff]
                  %660 = vst [vmem:[%s502 + $0x270] sm:$0xff] %v659
                  %v661 = vld [vmem:[%s501 + $0x4f0] sm:$0xff]
                  %662 = vst [vmem:[%s502 + $0x278] sm:$0xff] %v661
                  %v663 = vld [vmem:[%s501 + $0x500] sm:$0xff]
                  %664 = vst [vmem:[%s502 + $0x280] sm:$0xff] %v663
                  %v665 = vld [vmem:[%s501 + $0x510] sm:$0xff]
                  %666 = vst [vmem:[%s502 + $0x288] sm:$0xff] %v665
                  %v667 = vld [vmem:[%s501 + $0x520] sm:$0xff]
                  %668 = vst [vmem:[%s502 + $0x290] sm:$0xff] %v667
                  %v669 = vld [vmem:[%s501 + $0x530] sm:$0xff]
                  %670 = vst [vmem:[%s502 + $0x298] sm:$0xff] %v669
                  %v671 = vld [vmem:[%s501 + $0x540] sm:$0xff]
                  %672 = vst [vmem:[%s502 + $0x2a0] sm:$0xff] %v671
                  %v673 = vld [vmem:[%s501 + $0x550] sm:$0xff]
                  %674 = vst [vmem:[%s502 + $0x2a8] sm:$0xff] %v673
                  %v675 = vld [vmem:[%s501 + $0x560] sm:$0xff]
                  %676 = vst [vmem:[%s502 + $0x2b0] sm:$0xff] %v675
                  %v677 = vld [vmem:[%s501 + $0x570] sm:$0xff]
                  %678 = vst [vmem:[%s502 + $0x2b8] sm:$0xff] %v677
                  %v679 = vld [vmem:[%s501 + $0x580] sm:$0xff]
                  %680 = vst [vmem:[%s502 + $0x2c0] sm:$0xff] %v679
                  %v681 = vld [vmem:[%s501 + $0x590] sm:$0xff]
                  %682 = vst [vmem:[%s502 + $0x2c8] sm:$0xff] %v681
                  %v683 = vld [vmem:[%s501 + $0x5a0] sm:$0xff]
                  %684 = vst [vmem:[%s502 + $0x2d0] sm:$0xff] %v683
                  %v685 = vld [vmem:[%s501 + $0x5b0] sm:$0xff]
                  %686 = vst [vmem:[%s502 + $0x2d8] sm:$0xff] %v685
                  %v687 = vld [vmem:[%s501 + $0x5c0] sm:$0xff]
                  %688 = vst [vmem:[%s502 + $0x2e0] sm:$0xff] %v687
                  %v689 = vld [vmem:[%s501 + $0x5d0] sm:$0xff]
                  %690 = vst [vmem:[%s502 + $0x2e8] sm:$0xff] %v689
                  %v691 = vld [vmem:[%s501 + $0x5e0] sm:$0xff]
                  %692 = vst [vmem:[%s502 + $0x2f0] sm:$0xff] %v691
                  %v693 = vld [vmem:[%s501 + $0x5f0] sm:$0xff]
                  %694 = vst [vmem:[%s502 + $0x2f8] sm:$0xff] %v693
                  %v695 = vld [vmem:[%s501 + $0x600] sm:$0xff]
                  %696 = vst [vmem:[%s502 + $0x300] sm:$0xff] %v695
                  %v697 = vld [vmem:[%s501 + $0x610] sm:$0xff]
                  %698 = vst [vmem:[%s502 + $0x308] sm:$0xff] %v697
                  %v699 = vld [vmem:[%s501 + $0x620] sm:$0xff]
                  %700 = vst [vmem:[%s502 + $0x310] sm:$0xff] %v699
                  %v701 = vld [vmem:[%s501 + $0x630] sm:$0xff]
                  %702 = vst [vmem:[%s502 + $0x318] sm:$0xff] %v701
                  %v703 = vld [vmem:[%s501 + $0x640] sm:$0xff]
                  %704 = vst [vmem:[%s502 + $0x320] sm:$0xff] %v703
                  %v705 = vld [vmem:[%s501 + $0x650] sm:$0xff]
                  %706 = vst [vmem:[%s502 + $0x328] sm:$0xff] %v705
                  %v707 = vld [vmem:[%s501 + $0x660] sm:$0xff]
                  %708 = vst [vmem:[%s502 + $0x330] sm:$0xff] %v707
                  %v709 = vld [vmem:[%s501 + $0x670] sm:$0xff]
                  %710 = vst [vmem:[%s502 + $0x338] sm:$0xff] %v709
                  %v711 = vld [vmem:[%s501 + $0x680] sm:$0xff]
                  %712 = vst [vmem:[%s502 + $0x340] sm:$0xff] %v711
                  %v713 = vld [vmem:[%s501 + $0x690] sm:$0xff]
                  %714 = vst [vmem:[%s502 + $0x348] sm:$0xff] %v713
                  %v715 = vld [vmem:[%s501 + $0x6a0] sm:$0xff]
                  %716 = vst [vmem:[%s502 + $0x350] sm:$0xff] %v715
                  %v717 = vld [vmem:[%s501 + $0x6b0] sm:$0xff]
                  %718 = vst [vmem:[%s502 + $0x358] sm:$0xff] %v717
                  %v719 = vld [vmem:[%s501 + $0x6c0] sm:$0xff]
                  %720 = vst [vmem:[%s502 + $0x360] sm:$0xff] %v719
                  %v721 = vld [vmem:[%s501 + $0x6d0] sm:$0xff]
                  %722 = vst [vmem:[%s502 + $0x368] sm:$0xff] %v721
                  %v723 = vld [vmem:[%s501 + $0x6e0] sm:$0xff]
                  %724 = vst [vmem:[%s502 + $0x370] sm:$0xff] %v723
                  %v725 = vld [vmem:[%s501 + $0x6f0] sm:$0xff]
                  %726 = vst [vmem:[%s502 + $0x378] sm:$0xff] %v725
                  %v727 = vld [vmem:[%s501 + $0x700] sm:$0xff]
                  %728 = vst [vmem:[%s502 + $0x380] sm:$0xff] %v727
                  %v729 = vld [vmem:[%s501 + $0x710] sm:$0xff]
                  %730 = vst [vmem:[%s502 + $0x388] sm:$0xff] %v729
                  %v731 = vld [vmem:[%s501 + $0x720] sm:$0xff]
                  %732 = vst [vmem:[%s502 + $0x390] sm:$0xff] %v731
                  %v733 = vld [vmem:[%s501 + $0x730] sm:$0xff]
                  %734 = vst [vmem:[%s502 + $0x398] sm:$0xff] %v733
                  %v735 = vld [vmem:[%s501 + $0x740] sm:$0xff]
                  %736 = vst [vmem:[%s502 + $0x3a0] sm:$0xff] %v735
                  %v737 = vld [vmem:[%s501 + $0x750] sm:$0xff]
                  %738 = vst [vmem:[%s502 + $0x3a8] sm:$0xff] %v737
                  %v739 = vld [vmem:[%s501 + $0x760] sm:$0xff]
                  %740 = vst [vmem:[%s502 + $0x3b0] sm:$0xff] %v739
                  %v741 = vld [vmem:[%s501 + $0x770] sm:$0xff]
                  %742 = vst [vmem:[%s502 + $0x3b8] sm:$0xff] %v741
                  %v743 = vld [vmem:[%s501 + $0x780] sm:$0xff]
                  %744 = vst [vmem:[%s502 + $0x3c0] sm:$0xff] %v743
                  %v745 = vld [vmem:[%s501 + $0x790] sm:$0xff]
                  %746 = vst [vmem:[%s502 + $0x3c8] sm:$0xff] %v745
                  %v747 = vld [vmem:[%s501 + $0x7a0] sm:$0xff]
                  %748 = vst [vmem:[%s502 + $0x3d0] sm:$0xff] %v747
                  %v749 = vld [vmem:[%s501 + $0x7b0] sm:$0xff]
                  %750 = vst [vmem:[%s502 + $0x3d8] sm:$0xff] %v749
                  %v751 = vld [vmem:[%s501 + $0x7c0] sm:$0xff]
                  %752 = vst [vmem:[%s502 + $0x3e0] sm:$0xff] %v751
                  %v753 = vld [vmem:[%s501 + $0x7d0] sm:$0xff]
                  %754 = vst [vmem:[%s502 + $0x3e8] sm:$0xff] %v753
                  %v755 = vld [vmem:[%s501 + $0x7e0] sm:$0xff]
                  %756 = vst [vmem:[%s502 + $0x3f0] sm:$0xff] %v755
                  %v757 = vld [vmem:[%s501 + $0x7f0] sm:$0xff]
                  %758 = vst [vmem:[%s502 + $0x3f8] sm:$0xff] %v757
                $region56: #{_normed_linear_pallas.1} parent=50 // loop_footer
                  %s500 = sadd.s32 1, %s496
                $region57: #{_normed_linear_pallas.1} parent=50 // loop_footer_branch
                  %495 = sbr.rel target = $region53
                $region58: #{_normed_linear_pallas.1} parent=50 // loop_exit
                  _
              $region51: #{_normed_linear_pallas.1} parent=35 // pred_fallthru
                _
              // Predicated region
              $region59: #{_normed_linear_pallas.1} parent=35 // pred_check
                _
              $region60: #{_normed_linear_pallas.1} parent=35 // pred_check_branch
                %760 = sbr.rel target = $region62
              $region61: #{_normed_linear_pallas.1} parent=35 // pred_region
                _
              $region62: #{_normed_linear_pallas.1} parent=35 // pred_fallthru
                _
            $region36: #{_normed_linear_pallas.1} parent=31 // pred_fallthru
              _
            // Predicated region
            $region37: #{_normed_linear_pallas.1} parent=31 // pred_check
              _
            $region38: #{_normed_linear_pallas.1} parent=31 // pred_check_branch
              %226 = sbr.rel target = $region40
            $region39: #{_normed_linear_pallas.1} parent=31 // pred_region
              %s228 = ssub.s32 256, 1
              loop: start=0, step=1, limit=1
              $region41: #{_normed_linear_pallas.1} parent=39 // loop_pre_header
                _
              $region42: #{_normed_linear_pallas.1} parent=39 // loop_header
                %s230 = sphi 0, %s234
                %p231 = scmp.ge.s32.totalorder %s230, 1
                %s235 = sphi %s220, %s220
                %s236 = sphi %s214, %s214
              $region43: #{_normed_linear_pallas.1} parent=39 // loop_header_branch
                %233 = sbr.rel (%p231) target = $region47
              $region44: #{_normed_linear_pallas.1} parent=39 // loop_body
                %v237 = vld [vmem:[%s235] sm:%s228]
                %238 = vst [vmem:[%s236] sm:%s228] %v237
                %v239 = vld [vmem:[%s235 + $0x10] sm:%s228]
                %240 = vst [vmem:[%s236 + $0x8] sm:%s228] %v239
                %v241 = vld [vmem:[%s235 + $0x20] sm:%s228]
                %242 = vst [vmem:[%s236 + $0x10] sm:%s228] %v241
                %v243 = vld [vmem:[%s235 + $0x30] sm:%s228]
                %244 = vst [vmem:[%s236 + $0x18] sm:%s228] %v243
                %v245 = vld [vmem:[%s235 + $0x40] sm:%s228]
                %246 = vst [vmem:[%s236 + $0x20] sm:%s228] %v245
                %v247 = vld [vmem:[%s235 + $0x50] sm:%s228]
                %248 = vst [vmem:[%s236 + $0x28] sm:%s228] %v247
                %v249 = vld [vmem:[%s235 + $0x60] sm:%s228]
                %250 = vst [vmem:[%s236 + $0x30] sm:%s228] %v249
                %v251 = vld [vmem:[%s235 + $0x70] sm:%s228]
                %252 = vst [vmem:[%s236 + $0x38] sm:%s228] %v251
                %v253 = vld [vmem:[%s235 + $0x80] sm:%s228]
                %254 = vst [vmem:[%s236 + $0x40] sm:%s228] %v253
                %v255 = vld [vmem:[%s235 + $0x90] sm:%s228]
                %256 = vst [vmem:[%s236 + $0x48] sm:%s228] %v255
                %v257 = vld [vmem:[%s235 + $0xa0] sm:%s228]
                %258 = vst [vmem:[%s236 + $0x50] sm:%s228] %v257
                %v259 = vld [vmem:[%s235 + $0xb0] sm:%s228]
                %260 = vst [vmem:[%s236 + $0x58] sm:%s228] %v259
                %v261 = vld [vmem:[%s235 + $0xc0] sm:%s228]
                %262 = vst [vmem:[%s236 + $0x60] sm:%s228] %v261
                %v263 = vld [vmem:[%s235 + $0xd0] sm:%s228]
                %264 = vst [vmem:[%s236 + $0x68] sm:%s228] %v263
                %v265 = vld [vmem:[%s235 + $0xe0] sm:%s228]
                %266 = vst [vmem:[%s236 + $0x70] sm:%s228] %v265
                %v267 = vld [vmem:[%s235 + $0xf0] sm:%s228]
                %268 = vst [vmem:[%s236 + $0x78] sm:%s228] %v267
                %v269 = vld [vmem:[%s235 + $0x100] sm:%s228]
                %270 = vst [vmem:[%s236 + $0x80] sm:%s228] %v269
                %v271 = vld [vmem:[%s235 + $0x110] sm:%s228]
                %272 = vst [vmem:[%s236 + $0x88] sm:%s228] %v271
                %v273 = vld [vmem:[%s235 + $0x120] sm:%s228]
                %274 = vst [vmem:[%s236 + $0x90] sm:%s228] %v273
                %v275 = vld [vmem:[%s235 + $0x130] sm:%s228]
                %276 = vst [vmem:[%s236 + $0x98] sm:%s228] %v275
                %v277 = vld [vmem:[%s235 + $0x140] sm:%s228]
                %278 = vst [vmem:[%s236 + $0xa0] sm:%s228] %v277
                %v279 = vld [vmem:[%s235 + $0x150] sm:%s228]
                %280 = vst [vmem:[%s236 + $0xa8] sm:%s228] %v279
                %v281 = vld [vmem:[%s235 + $0x160] sm:%s228]
                %282 = vst [vmem:[%s236 + $0xb0] sm:%s228] %v281
                %v283 = vld [vmem:[%s235 + $0x170] sm:%s228]
                %284 = vst [vmem:[%s236 + $0xb8] sm:%s228] %v283
                %v285 = vld [vmem:[%s235 + $0x180] sm:%s228]
                %286 = vst [vmem:[%s236 + $0xc0] sm:%s228] %v285
                %v287 = vld [vmem:[%s235 + $0x190] sm:%s228]
                %288 = vst [vmem:[%s236 + $0xc8] sm:%s228] %v287
                %v289 = vld [vmem:[%s235 + $0x1a0] sm:%s228]
                %290 = vst [vmem:[%s236 + $0xd0] sm:%s228] %v289
                %v291 = vld [vmem:[%s235 + $0x1b0] sm:%s228]
                %292 = vst [vmem:[%s236 + $0xd8] sm:%s228] %v291
                %v293 = vld [vmem:[%s235 + $0x1c0] sm:%s228]
                %294 = vst [vmem:[%s236 + $0xe0] sm:%s228] %v293
                %v295 = vld [vmem:[%s235 + $0x1d0] sm:%s228]
                %296 = vst [vmem:[%s236 + $0xe8] sm:%s228] %v295
                %v297 = vld [vmem:[%s235 + $0x1e0] sm:%s228]
                %298 = vst [vmem:[%s236 + $0xf0] sm:%s228] %v297
                %v299 = vld [vmem:[%s235 + $0x1f0] sm:%s228]
                %300 = vst [vmem:[%s236 + $0xf8] sm:%s228] %v299
                %v301 = vld [vmem:[%s235 + $0x200] sm:%s228]
                %302 = vst [vmem:[%s236 + $0x100] sm:%s228] %v301
                %v303 = vld [vmem:[%s235 + $0x210] sm:%s228]
                %304 = vst [vmem:[%s236 + $0x108] sm:%s228] %v303
                %v305 = vld [vmem:[%s235 + $0x220] sm:%s228]
                %306 = vst [vmem:[%s236 + $0x110] sm:%s228] %v305
                %v307 = vld [vmem:[%s235 + $0x230] sm:%s228]
                %308 = vst [vmem:[%s236 + $0x118] sm:%s228] %v307
                %v309 = vld [vmem:[%s235 + $0x240] sm:%s228]
                %310 = vst [vmem:[%s236 + $0x120] sm:%s228] %v309
                %v311 = vld [vmem:[%s235 + $0x250] sm:%s228]
                %312 = vst [vmem:[%s236 + $0x128] sm:%s228] %v311
                %v313 = vld [vmem:[%s235 + $0x260] sm:%s228]
                %314 = vst [vmem:[%s236 + $0x130] sm:%s228] %v313
                %v315 = vld [vmem:[%s235 + $0x270] sm:%s228]
                %316 = vst [vmem:[%s236 + $0x138] sm:%s228] %v315
                %v317 = vld [vmem:[%s235 + $0x280] sm:%s228]
                %318 = vst [vmem:[%s236 + $0x140] sm:%s228] %v317
                %v319 = vld [vmem:[%s235 + $0x290] sm:%s228]
                %320 = vst [vmem:[%s236 + $0x148] sm:%s228] %v319
                %v321 = vld [vmem:[%s235 + $0x2a0] sm:%s228]
                %322 = vst [vmem:[%s236 + $0x150] sm:%s228] %v321
                %v323 = vld [vmem:[%s235 + $0x2b0] sm:%s228]
                %324 = vst [vmem:[%s236 + $0x158] sm:%s228] %v323
                %v325 = vld [vmem:[%s235 + $0x2c0] sm:%s228]
                %326 = vst [vmem:[%s236 + $0x160] sm:%s228] %v325
                %v327 = vld [vmem:[%s235 + $0x2d0] sm:%s228]
                %328 = vst [vmem:[%s236 + $0x168] sm:%s228] %v327
                %v329 = vld [vmem:[%s235 + $0x2e0] sm:%s228]
                %330 = vst [vmem:[%s236 + $0x170] sm:%s228] %v329
                %v331 = vld [vmem:[%s235 + $0x2f0] sm:%s228]
                %332 = vst [vmem:[%s236 + $0x178] sm:%s228] %v331
                %v333 = vld [vmem:[%s235 + $0x300] sm:%s228]
                %334 = vst [vmem:[%s236 + $0x180] sm:%s228] %v333
                %v335 = vld [vmem:[%s235 + $0x310] sm:%s228]
                %336 = vst [vmem:[%s236 + $0x188] sm:%s228] %v335
                %v337 = vld [vmem:[%s235 + $0x320] sm:%s228]
                %338 = vst [vmem:[%s236 + $0x190] sm:%s228] %v337
                %v339 = vld [vmem:[%s235 + $0x330] sm:%s228]
                %340 = vst [vmem:[%s236 + $0x198] sm:%s228] %v339
                %v341 = vld [vmem:[%s235 + $0x340] sm:%s228]
                %342 = vst [vmem:[%s236 + $0x1a0] sm:%s228] %v341
                %v343 = vld [vmem:[%s235 + $0x350] sm:%s228]
                %344 = vst [vmem:[%s236 + $0x1a8] sm:%s228] %v343
                %v345 = vld [vmem:[%s235 + $0x360] sm:%s228]
                %346 = vst [vmem:[%s236 + $0x1b0] sm:%s228] %v345
                %v347 = vld [vmem:[%s235 + $0x370] sm:%s228]
                %348 = vst [vmem:[%s236 + $0x1b8] sm:%s228] %v347
                %v349 = vld [vmem:[%s235 + $0x380] sm:%s228]
                %350 = vst [vmem:[%s236 + $0x1c0] sm:%s228] %v349
                %v351 = vld [vmem:[%s235 + $0x390] sm:%s228]
                %352 = vst [vmem:[%s236 + $0x1c8] sm:%s228] %v351
                %v353 = vld [vmem:[%s235 + $0x3a0] sm:%s228]
                %354 = vst [vmem:[%s236 + $0x1d0] sm:%s228] %v353
                %v355 = vld [vmem:[%s235 + $0x3b0] sm:%s228]
                %356 = vst [vmem:[%s236 + $0x1d8] sm:%s228] %v355
                %v357 = vld [vmem:[%s235 + $0x3c0] sm:%s228]
                %358 = vst [vmem:[%s236 + $0x1e0] sm:%s228] %v357
                %v359 = vld [vmem:[%s235 + $0x3d0] sm:%s228]
                %360 = vst [vmem:[%s236 + $0x1e8] sm:%s228] %v359
                %v361 = vld [vmem:[%s235 + $0x3e0] sm:%s228]
                %362 = vst [vmem:[%s236 + $0x1f0] sm:%s228] %v361
                %v363 = vld [vmem:[%s235 + $0x3f0] sm:%s228]
                %364 = vst [vmem:[%s236 + $0x1f8] sm:%s228] %v363
                %v365 = vld [vmem:[%s235 + $0x400] sm:%s228]
                %366 = vst [vmem:[%s236 + $0x200] sm:%s228] %v365
                %v367 = vld [vmem:[%s235 + $0x410] sm:%s228]
                %368 = vst [vmem:[%s236 + $0x208] sm:%s228] %v367
                %v369 = vld [vmem:[%s235 + $0x420] sm:%s228]
                %370 = vst [vmem:[%s236 + $0x210] sm:%s228] %v369
                %v371 = vld [vmem:[%s235 + $0x430] sm:%s228]
                %372 = vst [vmem:[%s236 + $0x218] sm:%s228] %v371
                %v373 = vld [vmem:[%s235 + $0x440] sm:%s228]
                %374 = vst [vmem:[%s236 + $0x220] sm:%s228] %v373
                %v375 = vld [vmem:[%s235 + $0x450] sm:%s228]
                %376 = vst [vmem:[%s236 + $0x228] sm:%s228] %v375
                %v377 = vld [vmem:[%s235 + $0x460] sm:%s228]
                %378 = vst [vmem:[%s236 + $0x230] sm:%s228] %v377
                %v379 = vld [vmem:[%s235 + $0x470] sm:%s228]
                %380 = vst [vmem:[%s236 + $0x238] sm:%s228] %v379
                %v381 = vld [vmem:[%s235 + $0x480] sm:%s228]
                %382 = vst [vmem:[%s236 + $0x240] sm:%s228] %v381
                %v383 = vld [vmem:[%s235 + $0x490] sm:%s228]
                %384 = vst [vmem:[%s236 + $0x248] sm:%s228] %v383
                %v385 = vld [vmem:[%s235 + $0x4a0] sm:%s228]
                %386 = vst [vmem:[%s236 + $0x250] sm:%s228] %v385
                %v387 = vld [vmem:[%s235 + $0x4b0] sm:%s228]
                %388 = vst [vmem:[%s236 + $0x258] sm:%s228] %v387
                %v389 = vld [vmem:[%s235 + $0x4c0] sm:%s228]
                %390 = vst [vmem:[%s236 + $0x260] sm:%s228] %v389
                %v391 = vld [vmem:[%s235 + $0x4d0] sm:%s228]
                %392 = vst [vmem:[%s236 + $0x268] sm:%s228] %v391
                %v393 = vld [vmem:[%s235 + $0x4e0] sm:%s228]
                %394 = vst [vmem:[%s236 + $0x270] sm:%s228] %v393
                %v395 = vld [vmem:[%s235 + $0x4f0] sm:%s228]
                %396 = vst [vmem:[%s236 + $0x278] sm:%s228] %v395
                %v397 = vld [vmem:[%s235 + $0x500] sm:%s228]
                %398 = vst [vmem:[%s236 + $0x280] sm:%s228] %v397
                %v399 = vld [vmem:[%s235 + $0x510] sm:%s228]
                %400 = vst [vmem:[%s236 + $0x288] sm:%s228] %v399
                %v401 = vld [vmem:[%s235 + $0x520] sm:%s228]
                %402 = vst [vmem:[%s236 + $0x290] sm:%s228] %v401
                %v403 = vld [vmem:[%s235 + $0x530] sm:%s228]
                %404 = vst [vmem:[%s236 + $0x298] sm:%s228] %v403
                %v405 = vld [vmem:[%s235 + $0x540] sm:%s228]
                %406 = vst [vmem:[%s236 + $0x2a0] sm:%s228] %v405
                %v407 = vld [vmem:[%s235 + $0x550] sm:%s228]
                %408 = vst [vmem:[%s236 + $0x2a8] sm:%s228] %v407
                %v409 = vld [vmem:[%s235 + $0x560] sm:%s228]
                %410 = vst [vmem:[%s236 + $0x2b0] sm:%s228] %v409
                %v411 = vld [vmem:[%s235 + $0x570] sm:%s228]
                %412 = vst [vmem:[%s236 + $0x2b8] sm:%s228] %v411
                %v413 = vld [vmem:[%s235 + $0x580] sm:%s228]
                %414 = vst [vmem:[%s236 + $0x2c0] sm:%s228] %v413
                %v415 = vld [vmem:[%s235 + $0x590] sm:%s228]
                %416 = vst [vmem:[%s236 + $0x2c8] sm:%s228] %v415
                %v417 = vld [vmem:[%s235 + $0x5a0] sm:%s228]
                %418 = vst [vmem:[%s236 + $0x2d0] sm:%s228] %v417
                %v419 = vld [vmem:[%s235 + $0x5b0] sm:%s228]
                %420 = vst [vmem:[%s236 + $0x2d8] sm:%s228] %v419
                %v421 = vld [vmem:[%s235 + $0x5c0] sm:%s228]
                %422 = vst [vmem:[%s236 + $0x2e0] sm:%s228] %v421
                %v423 = vld [vmem:[%s235 + $0x5d0] sm:%s228]
                %424 = vst [vmem:[%s236 + $0x2e8] sm:%s228] %v423
                %v425 = vld [vmem:[%s235 + $0x5e0] sm:%s228]
                %426 = vst [vmem:[%s236 + $0x2f0] sm:%s228] %v425
                %v427 = vld [vmem:[%s235 + $0x5f0] sm:%s228]
                %428 = vst [vmem:[%s236 + $0x2f8] sm:%s228] %v427
                %v429 = vld [vmem:[%s235 + $0x600] sm:%s228]
                %430 = vst [vmem:[%s236 + $0x300] sm:%s228] %v429
                %v431 = vld [vmem:[%s235 + $0x610] sm:%s228]
                %432 = vst [vmem:[%s236 + $0x308] sm:%s228] %v431
                %v433 = vld [vmem:[%s235 + $0x620] sm:%s228]
                %434 = vst [vmem:[%s236 + $0x310] sm:%s228] %v433
                %v435 = vld [vmem:[%s235 + $0x630] sm:%s228]
                %436 = vst [vmem:[%s236 + $0x318] sm:%s228] %v435
                %v437 = vld [vmem:[%s235 + $0x640] sm:%s228]
                %438 = vst [vmem:[%s236 + $0x320] sm:%s228] %v437
                %v439 = vld [vmem:[%s235 + $0x650] sm:%s228]
                %440 = vst [vmem:[%s236 + $0x328] sm:%s228] %v439
                %v441 = vld [vmem:[%s235 + $0x660] sm:%s228]
                %442 = vst [vmem:[%s236 + $0x330] sm:%s228] %v441
                %v443 = vld [vmem:[%s235 + $0x670] sm:%s228]
                %444 = vst [vmem:[%s236 + $0x338] sm:%s228] %v443
                %v445 = vld [vmem:[%s235 + $0x680] sm:%s228]
                %446 = vst [vmem:[%s236 + $0x340] sm:%s228] %v445
                %v447 = vld [vmem:[%s235 + $0x690] sm:%s228]
                %448 = vst [vmem:[%s236 + $0x348] sm:%s228] %v447
                %v449 = vld [vmem:[%s235 + $0x6a0] sm:%s228]
                %450 = vst [vmem:[%s236 + $0x350] sm:%s228] %v449
                %v451 = vld [vmem:[%s235 + $0x6b0] sm:%s228]
                %452 = vst [vmem:[%s236 + $0x358] sm:%s228] %v451
                %v453 = vld [vmem:[%s235 + $0x6c0] sm:%s228]
                %454 = vst [vmem:[%s236 + $0x360] sm:%s228] %v453
                %v455 = vld [vmem:[%s235 + $0x6d0] sm:%s228]
                %456 = vst [vmem:[%s236 + $0x368] sm:%s228] %v455
                %v457 = vld [vmem:[%s235 + $0x6e0] sm:%s228]
                %458 = vst [vmem:[%s236 + $0x370] sm:%s228] %v457
                %v459 = vld [vmem:[%s235 + $0x6f0] sm:%s228]
                %460 = vst [vmem:[%s236 + $0x378] sm:%s228] %v459
                %v461 = vld [vmem:[%s235 + $0x700] sm:%s228]
                %462 = vst [vmem:[%s236 + $0x380] sm:%s228] %v461
                %v463 = vld [vmem:[%s235 + $0x710] sm:%s228]
                %464 = vst [vmem:[%s236 + $0x388] sm:%s228] %v463
                %v465 = vld [vmem:[%s235 + $0x720] sm:%s228]
                %466 = vst [vmem:[%s236 + $0x390] sm:%s228] %v465
                %v467 = vld [vmem:[%s235 + $0x730] sm:%s228]
                %468 = vst [vmem:[%s236 + $0x398] sm:%s228] %v467
                %v469 = vld [vmem:[%s235 + $0x740] sm:%s228]
                %470 = vst [vmem:[%s236 + $0x3a0] sm:%s228] %v469
                %v471 = vld [vmem:[%s235 + $0x750] sm:%s228]
                %472 = vst [vmem:[%s236 + $0x3a8] sm:%s228] %v471
                %v473 = vld [vmem:[%s235 + $0x760] sm:%s228]
                %474 = vst [vmem:[%s236 + $0x3b0] sm:%s228] %v473
                %v475 = vld [vmem:[%s235 + $0x770] sm:%s228]
                %476 = vst [vmem:[%s236 + $0x3b8] sm:%s228] %v475
                %v477 = vld [vmem:[%s235 + $0x780] sm:%s228]
                %478 = vst [vmem:[%s236 + $0x3c0] sm:%s228] %v477
                %v479 = vld [vmem:[%s235 + $0x790] sm:%s228]
                %480 = vst [vmem:[%s236 + $0x3c8] sm:%s228] %v479
                %v481 = vld [vmem:[%s235 + $0x7a0] sm:%s228]
                %482 = vst [vmem:[%s236 + $0x3d0] sm:%s228] %v481
                %v483 = vld [vmem:[%s235 + $0x7b0] sm:%s228]
                %484 = vst [vmem:[%s236 + $0x3d8] sm:%s228] %v483
                %v485 = vld [vmem:[%s235 + $0x7c0] sm:%s228]
                %486 = vst [vmem:[%s236 + $0x3e0] sm:%s228] %v485
                %v487 = vld [vmem:[%s235 + $0x7d0] sm:%s228]
                %488 = vst [vmem:[%s236 + $0x3e8] sm:%s228] %v487
                %v489 = vld [vmem:[%s235 + $0x7e0] sm:%s228]
                %490 = vst [vmem:[%s236 + $0x3f0] sm:%s228] %v489
                %v491 = vld [vmem:[%s235 + $0x7f0] sm:%s228]
                %492 = vst [vmem:[%s236 + $0x3f8] sm:%s228] %v491
              $region45: #{_normed_linear_pallas.1} parent=39 // loop_footer
                %s234 = sadd.s32 1, %s230
              $region46: #{_normed_linear_pallas.1} parent=39 // loop_footer_branch
                %229 = sbr.rel target = $region42
              $region47: #{_normed_linear_pallas.1} parent=39 // loop_exit
                _
            $region40: #{_normed_linear_pallas.1} parent=31 // pred_fallthru
              _
          $region32: #{_normed_linear_pallas.1} parent=27 // pred_fallthru
            _
          %761 = vnop
        $region28: #{_normed_linear_pallas.1} parent=23 // pred_fallthru
          _
        // Predicated region
        $region63: #{_normed_linear_pallas.1} parent=23 // pred_check
          %p762 = pneg %p131
        $region64: #{_normed_linear_pallas.1} parent=23 // pred_check_branch
          %764 = sbr.rel (%p762) target = $region66
        $region65: #{_normed_linear_pallas.1} parent=23 // pred_region
          %s765 = smul.u32 2, %s18
          %p766 = scmp.lt.s32.totalorder %s765, 3
          %s767 = scalar_select %p766, %s765, 3
          %s768 = scalar_lea.vmem %s3, %s767
          %s769 = smul.u32 2, %s18
        $region66: #{_normed_linear_pallas.1} parent=23 // pred_fallthru
          _
      $region24: #{_normed_linear_pallas.1} parent=5 // pred_fallthru
        _
      %p770 = scmp.le.s32.totalorder 1, %s10
      %p771 = scmp.lt.s32.totalorder %s10, 3
      %p772 = pnand %p770, %p771
      %p773 = pneg %p772
      // Predicated region
      $region67: #{_normed_linear_pallas.1} parent=5 // pred_check
        _
      $region68: #{_normed_linear_pallas.1} parent=5 // pred_check_branch
        %775 = sbr.rel (%p772) target = $region70
      $region69: #{_normed_linear_pallas.1} parent=5 // pred_region
        %s776 = ssub.s32 %s10, 1
        %s777 = sand.u32 %s72, 1
        %s778 = sand.u32 %s72, 1
        %s779 = smul.addr %s778, 1024
        %s780 = scalar_lea.vmem [#allocation2], %s779
        // Predicated region
        $region71: #{_normed_linear_pallas.1} parent=69 // pred_check
          %p781 = pneg %p85
        $region72: #{_normed_linear_pallas.1} parent=69 // pred_check_branch
          %783 = sbr.rel (%p781) target = $region74
        $region73: #{_normed_linear_pallas.1} parent=69 // pred_region
          _
        $region74: #{_normed_linear_pallas.1} parent=69 // pred_fallthru
          _
        %s784 = smul.u32 32, %s20
        %s785 = smul.u32 8, %s22
        %p786 = scmp.lt.s32.totalorder %s784, 31
        %s787 = scalar_select %p786, %s784, 31
        %p788 = scmp.lt.s32.totalorder %s785, 7
        %s789 = scalar_select %p788, %s785, 7
        %s790 = smul.addr %s787, 8
        %s791 = sadd.s32 %s789, %s790
        %s792 = smul.addr %s791, 4
        %s793 = scalar_lea.vmem %s0, %s792
        %p794 = pneg %p57
        %p795 = pneg %p54
        %s796 = sand.u32 %s72, 1
        %s797 = sand.u32 %s72, 1
        %s798 = smul.addr %s797, 1024
        %s799 = scalar_lea.vmem [#allocation2], %s798
        %p800 = pneg %p85
        %p801 = pneg %p82
        %s802 = smul.u32 32, %s20
        %p803 = scmp.lt.s32.totalorder %s802, 31
        %s804 = scalar_select %p803, %s802, 31
        %s805 = smul.addr %s804, 8
        %s806 = scalar_lea.vmem %s2, %s805
        %p807 = pneg %p111
        %p808 = pneg %p108
        %s809 = smul.u32 2, %s21
        %p810 = scmp.lt.s32.totalorder %s809, 3
        %s811 = scalar_select %p810, %s809, 3
        %s812 = scalar_lea.vmem %s3, %s811
        %p813 = pneg %p137
        %p814 = pneg %p134
        %p815 = pneg %p165
        %p816 = pneg %p162
        %s817 = sand.u32 %s152, 1
        %s818 = sand.u32 %s152, 1
        %s819 = smul.addr %s818, 512
        %s820 = scalar_lea.vmem [#allocation3], %s819
        %s821 = smul.u32 32, %s20
        %s822 = smul.u32 8, %s22
        %p823 = scmp.lt.s32.totalorder %s821, 31
        %s824 = scalar_select %p823, %s821, 31
        %p825 = scmp.lt.s32.totalorder %s822, 7
        %s826 = scalar_select %p825, %s822, 7
        %s827 = smul.addr %s824, 8
        %s828 = sadd.s32 %s826, %s827
        %s829 = smul.addr %s828, 4
        %s830 = scalar_lea.vmem %s0, %s829
        %s831 = smul.u32 32, %s20
        %s832 = smul.u32 8, %s22
        %s833 = smul.u32 128, %s22
        %s834 = smul.u32 2, %s21
        %s835 = smul.u32 32, %s20
        %p836 = scmp.lt.s32.totalorder %s835, 31
        %s837 = scalar_select %p836, %s835, 31
        %s838 = smul.addr %s837, 8
        %s839 = scalar_lea.vmem %s2, %s838
        %s840 = smul.u32 32, %s20
        %s841 = smul.u32 2, %s21
        %p842 = scmp.lt.s32.totalorder %s841, 3
        %s843 = scalar_select %p842, %s841, 3
        %s844 = scalar_lea.vmem %s3, %s843
        %s845 = smul.u32 2, %s21
        %s846 = smul.u32 32, %s20
        %s847 = smul.u32 2, %s21
        %p848 = scmp.eq.s32.totalorder %s22, 0
        // Predicated region
        $region75: #{_normed_linear_pallas.1} parent=69 // pred_check
          %p849 = pneg %p848
        $region76: #{_normed_linear_pallas.1} parent=69 // pred_check_branch
          %851 = sbr.rel (%p849) target = $region78
        $region77: #{_normed_linear_pallas.1} parent=69 // pred_region
          %852 = vst [vmem:[%s820] sm:$0xff] 0.0
          %853 = vst [vmem:[%s820 + $0x8] sm:$0xff] 0.0
          %854 = vst [vmem:[%s820 + $0x10] sm:$0xff] 0.0
          %855 = vst [vmem:[%s820 + $0x18] sm:$0xff] 0.0
          %856 = vst [vmem:[%s820 + $0x20] sm:$0xff] 0.0
          %857 = vst [vmem:[%s820 + $0x28] sm:$0xff] 0.0
          %858 = vst [vmem:[%s820 + $0x30] sm:$0xff] 0.0
          %859 = vst [vmem:[%s820 + $0x38] sm:$0xff] 0.0
          %860 = vst [vmem:[%s820 + $0x40] sm:$0xff] 0.0
          %861 = vst [vmem:[%s820 + $0x48] sm:$0xff] 0.0
          %862 = vst [vmem:[%s820 + $0x50] sm:$0xff] 0.0
          %863 = vst [vmem:[%s820 + $0x58] sm:$0xff] 0.0
          %864 = vst [vmem:[%s820 + $0x60] sm:$0xff] 0.0
          %865 = vst [vmem:[%s820 + $0x68] sm:$0xff] 0.0
          %866 = vst [vmem:[%s820 + $0x70] sm:$0xff] 0.0
          %867 = vst [vmem:[%s820 + $0x78] sm:$0xff] 0.0
          %868 = vst [vmem:[%s820 + $0x80] sm:$0xff] 0.0
          %869 = vst [vmem:[%s820 + $0x88] sm:$0xff] 0.0
          %870 = vst [vmem:[%s820 + $0x90] sm:$0xff] 0.0
          %871 = vst [vmem:[%s820 + $0x98] sm:$0xff] 0.0
          %872 = vst [vmem:[%s820 + $0xa0] sm:$0xff] 0.0
          %873 = vst [vmem:[%s820 + $0xa8] sm:$0xff] 0.0
          %874 = vst [vmem:[%s820 + $0xb0] sm:$0xff] 0.0
          %875 = vst [vmem:[%s820 + $0xb8] sm:$0xff] 0.0
          %876 = vst [vmem:[%s820 + $0xc0] sm:$0xff] 0.0
          %877 = vst [vmem:[%s820 + $0xc8] sm:$0xff] 0.0
          %878 = vst [vmem:[%s820 + $0xd0] sm:$0xff] 0.0
          %879 = vst [vmem:[%s820 + $0xd8] sm:$0xff] 0.0
          %880 = vst [vmem:[%s820 + $0xe0] sm:$0xff] 0.0
          %881 = vst [vmem:[%s820 + $0xe8] sm:$0xff] 0.0
          %882 = vst [vmem:[%s820 + $0xf0] sm:$0xff] 0.0
          %883 = vst [vmem:[%s820 + $0xf8] sm:$0xff] 0.0
          %884 = vst [vmem:[%s820 + $0x100] sm:$0xff] 0.0
          %885 = vst [vmem:[%s820 + $0x108] sm:$0xff] 0.0
          %886 = vst [vmem:[%s820 + $0x110] sm:$0xff] 0.0
          %887 = vst [vmem:[%s820 + $0x118] sm:$0xff] 0.0
          %888 = vst [vmem:[%s820 + $0x120] sm:$0xff] 0.0
          %889 = vst [vmem:[%s820 + $0x128] sm:$0xff] 0.0
          %890 = vst [vmem:[%s820 + $0x130] sm:$0xff] 0.0
          %891 = vst [vmem:[%s820 + $0x138] sm:$0xff] 0.0
          %892 = vst [vmem:[%s820 + $0x140] sm:$0xff] 0.0
          %893 = vst [vmem:[%s820 + $0x148] sm:$0xff] 0.0
          %894 = vst [vmem:[%s820 + $0x150] sm:$0xff] 0.0
          %895 = vst [vmem:[%s820 + $0x158] sm:$0xff] 0.0
          %896 = vst [vmem:[%s820 + $0x160] sm:$0xff] 0.0
          %897 = vst [vmem:[%s820 + $0x168] sm:$0xff] 0.0
          %898 = vst [vmem:[%s820 + $0x170] sm:$0xff] 0.0
          %899 = vst [vmem:[%s820 + $0x178] sm:$0xff] 0.0
          %900 = vst [vmem:[%s820 + $0x180] sm:$0xff] 0.0
          %901 = vst [vmem:[%s820 + $0x188] sm:$0xff] 0.0
          %902 = vst [vmem:[%s820 + $0x190] sm:$0xff] 0.0
          %903 = vst [vmem:[%s820 + $0x198] sm:$0xff] 0.0
          %904 = vst [vmem:[%s820 + $0x1a0] sm:$0xff] 0.0
          %905 = vst [vmem:[%s820 + $0x1a8] sm:$0xff] 0.0
          %906 = vst [vmem:[%s820 + $0x1b0] sm:$0xff] 0.0
          %907 = vst [vmem:[%s820 + $0x1b8] sm:$0xff] 0.0
          %908 = vst [vmem:[%s820 + $0x1c0] sm:$0xff] 0.0
          %909 = vst [vmem:[%s820 + $0x1c8] sm:$0xff] 0.0
          %910 = vst [vmem:[%s820 + $0x1d0] sm:$0xff] 0.0
          %911 = vst [vmem:[%s820 + $0x1d8] sm:$0xff] 0.0
          %912 = vst [vmem:[%s820 + $0x1e0] sm:$0xff] 0.0
          %913 = vst [vmem:[%s820 + $0x1e8] sm:$0xff] 0.0
          %914 = vst [vmem:[%s820 + $0x1f0] sm:$0xff] 0.0
          %915 = vst [vmem:[%s820 + $0x1f8] sm:$0xff] 0.0
        $region78: #{_normed_linear_pallas.1} parent=69 // pred_fallthru
          _
        %v916 = vld [vmem:[%s820] sm:$0xff]
        %v917 = vld [vmem:[%s820 + $0x8] sm:$0xff]
        %v918 = vld [vmem:[%s820 + $0x10] sm:$0xff]
        %v919 = vld [vmem:[%s820 + $0x18] sm:$0xff]
        %v920 = vld [vmem:[%s820 + $0x20] sm:$0xff]
        %v921 = vld [vmem:[%s820 + $0x28] sm:$0xff]
        %v922 = vld [vmem:[%s820 + $0x30] sm:$0xff]
        %v923 = vld [vmem:[%s820 + $0x38] sm:$0xff]
        %v924 = vld [vmem:[%s820 + $0x40] sm:$0xff]
        %v925 = vld [vmem:[%s820 + $0x48] sm:$0xff]
        %v926 = vld [vmem:[%s820 + $0x50] sm:$0xff]
        %v927 = vld [vmem:[%s820 + $0x58] sm:$0xff]
        %v928 = vld [vmem:[%s820 + $0x60] sm:$0xff]
        %v929 = vld [vmem:[%s820 + $0x68] sm:$0xff]
        %v930 = vld [vmem:[%s820 + $0x70] sm:$0xff]
        %v931 = vld [vmem:[%s820 + $0x78] sm:$0xff]
        %v932 = vld [vmem:[%s820 + $0x80] sm:$0xff]
        %v933 = vld [vmem:[%s820 + $0x88] sm:$0xff]
        %v934 = vld [vmem:[%s820 + $0x90] sm:$0xff]
        %v935 = vld [vmem:[%s820 + $0x98] sm:$0xff]
        %v936 = vld [vmem:[%s820 + $0xa0] sm:$0xff]
        %v937 = vld [vmem:[%s820 + $0xa8] sm:$0xff]
        %v938 = vld [vmem:[%s820 + $0xb0] sm:$0xff]
        %v939 = vld [vmem:[%s820 + $0xb8] sm:$0xff]
        %v940 = vld [vmem:[%s820 + $0xc0] sm:$0xff]
        %v941 = vld [vmem:[%s820 + $0xc8] sm:$0xff]
        %v942 = vld [vmem:[%s820 + $0xd0] sm:$0xff]
        %v943 = vld [vmem:[%s820 + $0xd8] sm:$0xff]
        %v944 = vld [vmem:[%s820 + $0xe0] sm:$0xff]
        %v945 = vld [vmem:[%s820 + $0xe8] sm:$0xff]
        %v946 = vld [vmem:[%s820 + $0xf0] sm:$0xff]
        %v947 = vld [vmem:[%s820 + $0xf8] sm:$0xff]
        %v948 = vld [vmem:[%s820 + $0x100] sm:$0xff]
        %v949 = vld [vmem:[%s820 + $0x108] sm:$0xff]
        %v950 = vld [vmem:[%s820 + $0x110] sm:$0xff]
        %v951 = vld [vmem:[%s820 + $0x118] sm:$0xff]
        %v952 = vld [vmem:[%s820 + $0x120] sm:$0xff]
        %v953 = vld [vmem:[%s820 + $0x128] sm:$0xff]
        %v954 = vld [vmem:[%s820 + $0x130] sm:$0xff]
        %v955 = vld [vmem:[%s820 + $0x138] sm:$0xff]
        %v956 = vld [vmem:[%s820 + $0x140] sm:$0xff]
        %v957 = vld [vmem:[%s820 + $0x148] sm:$0xff]
        %v958 = vld [vmem:[%s820 + $0x150] sm:$0xff]
        %v959 = vld [vmem:[%s820 + $0x158] sm:$0xff]
        %v960 = vld [vmem:[%s820 + $0x160] sm:$0xff]
        %v961 = vld [vmem:[%s820 + $0x168] sm:$0xff]
        %v962 = vld [vmem:[%s820 + $0x170] sm:$0xff]
        %v963 = vld [vmem:[%s820 + $0x178] sm:$0xff]
        %v964 = vld [vmem:[%s820 + $0x180] sm:$0xff]
        %v965 = vld [vmem:[%s820 + $0x188] sm:$0xff]
        %v966 = vld [vmem:[%s820 + $0x190] sm:$0xff]
        %v967 = vld [vmem:[%s820 + $0x198] sm:$0xff]
        %v968 = vld [vmem:[%s820 + $0x1a0] sm:$0xff]
        %v969 = vld [vmem:[%s820 + $0x1a8] sm:$0xff]
        %v970 = vld [vmem:[%s820 + $0x1b0] sm:$0xff]
        %v971 = vld [vmem:[%s820 + $0x1b8] sm:$0xff]
        %v972 = vld [vmem:[%s820 + $0x1c0] sm:$0xff]
        %v973 = vld [vmem:[%s820 + $0x1c8] sm:$0xff]
        %v974 = vld [vmem:[%s820 + $0x1d0] sm:$0xff]
        %v975 = vld [vmem:[%s820 + $0x1d8] sm:$0xff]
        %v976 = vld [vmem:[%s820 + $0x1e0] sm:$0xff]
        %v977 = vld [vmem:[%s820 + $0x1e8] sm:$0xff]
        %v978 = vld [vmem:[%s820 + $0x1f0] sm:$0xff]
        %v979 = vld [vmem:[%s820 + $0x1f8] sm:$0xff]
        %v980 = vld [vmem:[%s830] sm:$0xff]
        %v981 = vld [vmem:[%s830 + $0x8] sm:$0xff]
        %v982 = vld [vmem:[%s830 + $0x10] sm:$0xff]
        %v983 = vld [vmem:[%s830 + $0x18] sm:$0xff]
        %v984 = vld [vmem:[%s830 + $0x20] sm:$0xff]
        %v985 = vld [vmem:[%s830 + $0x28] sm:$0xff]
        %v986 = vld [vmem:[%s830 + $0x30] sm:$0xff]
        %v987 = vld [vmem:[%s830 + $0x38] sm:$0xff]
        %v988 = vld [vmem:[%s830 + $0x40] sm:$0xff]
        %v989 = vld [vmem:[%s830 + $0x48] sm:$0xff]
        %v990 = vld [vmem:[%s830 + $0x50] sm:$0xff]
        %v991 = vld [vmem:[%s830 + $0x58] sm:$0xff]
        %v992 = vld [vmem:[%s830 + $0x60] sm:$0xff]
        %v993 = vld [vmem:[%s830 + $0x68] sm:$0xff]
        %v994 = vld [vmem:[%s830 + $0x70] sm:$0xff]
        %v995 = vld [vmem:[%s830 + $0x78] sm:$0xff]
        %v996 = vld [vmem:[%s830 + $0x80] sm:$0xff]
        %v997 = vld [vmem:[%s830 + $0x88] sm:$0xff]
        %v998 = vld [vmem:[%s830 + $0x90] sm:$0xff]
        %v999 = vld [vmem:[%s830 + $0x98] sm:$0xff]
        %v1000 = vld [vmem:[%s830 + $0xa0] sm:$0xff]
        %v1001 = vld [vmem:[%s830 + $0xa8] sm:$0xff]
        %v1002 = vld [vmem:[%s830 + $0xb0] sm:$0xff]
        %v1003 = vld [vmem:[%s830 + $0xb8] sm:$0xff]
        %v1004 = vld [vmem:[%s830 + $0xc0] sm:$0xff]
        %v1005 = vld [vmem:[%s830 + $0xc8] sm:$0xff]
        %v1006 = vld [vmem:[%s830 + $0xd0] sm:$0xff]
        %v1007 = vld [vmem:[%s830 + $0xd8] sm:$0xff]
        %v1008 = vld [vmem:[%s830 + $0xe0] sm:$0xff]
        %v1009 = vld [vmem:[%s830 + $0xe8] sm:$0xff]
        %v1010 = vld [vmem:[%s830 + $0xf0] sm:$0xff]
        %v1011 = vld [vmem:[%s830 + $0xf8] sm:$0xff]
        %v1012 = vld [vmem:[%s830 + $0x100] sm:$0xff]
        %v1013 = vld [vmem:[%s830 + $0x108] sm:$0xff]
        %v1014 = vld [vmem:[%s830 + $0x110] sm:$0xff]
        %v1015 = vld [vmem:[%s830 + $0x118] sm:$0xff]
        %v1016 = vld [vmem:[%s830 + $0x120] sm:$0xff]
        %v1017 = vld [vmem:[%s830 + $0x128] sm:$0xff]
        %v1018 = vld [vmem:[%s830 + $0x130] sm:$0xff]
        %v1019 = vld [vmem:[%s830 + $0x138] sm:$0xff]
        %v1020 = vld [vmem:[%s830 + $0x140] sm:$0xff]
        %v1021 = vld [vmem:[%s830 + $0x148] sm:$0xff]
        %v1022 = vld [vmem:[%s830 + $0x150] sm:$0xff]
        %v1023 = vld [vmem:[%s830 + $0x158] sm:$0xff]
        %v1024 = vld [vmem:[%s830 + $0x160] sm:$0xff]
        %v1025 = vld [vmem:[%s830 + $0x168] sm:$0xff]
        %v1026 = vld [vmem:[%s830 + $0x170] sm:$0xff]
        %v1027 = vld [vmem:[%s830 + $0x178] sm:$0xff]
        %v1028 = vld [vmem:[%s830 + $0x180] sm:$0xff]
        %v1029 = vld [vmem:[%s830 + $0x188] sm:$0xff]
        %v1030 = vld [vmem:[%s830 + $0x190] sm:$0xff]
        %v1031 = vld [vmem:[%s830 + $0x198] sm:$0xff]
        %v1032 = vld [vmem:[%s830 + $0x1a0] sm:$0xff]
        %v1033 = vld [vmem:[%s830 + $0x1a8] sm:$0xff]
        %v1034 = vld [vmem:[%s830 + $0x1b0] sm:$0xff]
        %v1035 = vld [vmem:[%s830 + $0x1b8] sm:$0xff]
        %v1036 = vld [vmem:[%s830 + $0x1c0] sm:$0xff]
        %v1037 = vld [vmem:[%s830 + $0x1c8] sm:$0xff]
        %v1038 = vld [vmem:[%s830 + $0x1d0] sm:$0xff]
        %v1039 = vld [vmem:[%s830 + $0x1d8] sm:$0xff]
        %v1040 = vld [vmem:[%s830 + $0x1e0] sm:$0xff]
        %v1041 = vld [vmem:[%s830 + $0x1e8] sm:$0xff]
        %v1042 = vld [vmem:[%s830 + $0x1f0] sm:$0xff]
        %v1043 = vld [vmem:[%s830 + $0x1f8] sm:$0xff]
        %v1044 = vld [vmem:[%s830 + $0x200] sm:$0xff]
        %v1045 = vld [vmem:[%s830 + $0x208] sm:$0xff]
        %v1046 = vld [vmem:[%s830 + $0x210] sm:$0xff]
        %v1047 = vld [vmem:[%s830 + $0x218] sm:$0xff]
        %v1048 = vld [vmem:[%s830 + $0x220] sm:$0xff]
        %v1049 = vld [vmem:[%s830 + $0x228] sm:$0xff]
        %v1050 = vld [vmem:[%s830 + $0x230] sm:$0xff]
        %v1051 = vld [vmem:[%s830 + $0x238] sm:$0xff]
        %v1052 = vld [vmem:[%s830 + $0x240] sm:$0xff]
        %v1053 = vld [vmem:[%s830 + $0x248] sm:$0xff]
        %v1054 = vld [vmem:[%s830 + $0x250] sm:$0xff]
        %v1055 = vld [vmem:[%s830 + $0x258] sm:$0xff]
        %v1056 = vld [vmem:[%s830 + $0x260] sm:$0xff]
        %v1057 = vld [vmem:[%s830 + $0x268] sm:$0xff]
        %v1058 = vld [vmem:[%s830 + $0x270] sm:$0xff]
        %v1059 = vld [vmem:[%s830 + $0x278] sm:$0xff]
        %v1060 = vld [vmem:[%s830 + $0x280] sm:$0xff]
        %v1061 = vld [vmem:[%s830 + $0x288] sm:$0xff]
        %v1062 = vld [vmem:[%s830 + $0x290] sm:$0xff]
        %v1063 = vld [vmem:[%s830 + $0x298] sm:$0xff]
        %v1064 = vld [vmem:[%s830 + $0x2a0] sm:$0xff]
        %v1065 = vld [vmem:[%s830 + $0x2a8] sm:$0xff]
        %v1066 = vld [vmem:[%s830 + $0x2b0] sm:$0xff]
        %v1067 = vld [vmem:[%s830 + $0x2b8] sm:$0xff]
        %v1068 = vld [vmem:[%s830 + $0x2c0] sm:$0xff]
        %v1069 = vld [vmem:[%s830 + $0x2c8] sm:$0xff]
        %v1070 = vld [vmem:[%s830 + $0x2d0] sm:$0xff]
        %v1071 = vld [vmem:[%s830 + $0x2d8] sm:$0xff]
        %v1072 = vld [vmem:[%s830 + $0x2e0] sm:$0xff]
        %v1073 = vld [vmem:[%s830 + $0x2e8] sm:$0xff]
        %v1074 = vld [vmem:[%s830 + $0x2f0] sm:$0xff]
        %v1075 = vld [vmem:[%s830 + $0x2f8] sm:$0xff]
        %v1076 = vld [vmem:[%s830 + $0x300] sm:$0xff]
        %v1077 = vld [vmem:[%s830 + $0x308] sm:$0xff]
        %v1078 = vld [vmem:[%s830 + $0x310] sm:$0xff]
        %v1079 = vld [vmem:[%s830 + $0x318] sm:$0xff]
        %v1080 = vld [vmem:[%s830 + $0x320] sm:$0xff]
        %v1081 = vld [vmem:[%s830 + $0x328] sm:$0xff]
        %v1082 = vld [vmem:[%s830 + $0x330] sm:$0xff]
        %v1083 = vld [vmem:[%s830 + $0x338] sm:$0xff]
        %v1084 = vld [vmem:[%s830 + $0x340] sm:$0xff]
        %v1085 = vld [vmem:[%s830 + $0x348] sm:$0xff]
        %v1086 = vld [vmem:[%s830 + $0x350] sm:$0xff]
        %v1087 = vld [vmem:[%s830 + $0x358] sm:$0xff]
        %v1088 = vld [vmem:[%s830 + $0x360] sm:$0xff]
        %v1089 = vld [vmem:[%s830 + $0x368] sm:$0xff]
        %v1090 = vld [vmem:[%s830 + $0x370] sm:$0xff]
        %v1091 = vld [vmem:[%s830 + $0x378] sm:$0xff]
        %v1092 = vld [vmem:[%s830 + $0x380] sm:$0xff]
        %v1093 = vld [vmem:[%s830 + $0x388] sm:$0xff]
        %v1094 = vld [vmem:[%s830 + $0x390] sm:$0xff]
        %v1095 = vld [vmem:[%s830 + $0x398] sm:$0xff]
        %v1096 = vld [vmem:[%s830 + $0x3a0] sm:$0xff]
        %v1097 = vld [vmem:[%s830 + $0x3a8] sm:$0xff]
        %v1098 = vld [vmem:[%s830 + $0x3b0] sm:$0xff]
        %v1099 = vld [vmem:[%s830 + $0x3b8] sm:$0xff]
        %v1100 = vld [vmem:[%s830 + $0x3c0] sm:$0xff]
        %v1101 = vld [vmem:[%s830 + $0x3c8] sm:$0xff]
        %v1102 = vld [vmem:[%s830 + $0x3d0] sm:$0xff]
        %v1103 = vld [vmem:[%s830 + $0x3d8] sm:$0xff]
        %v1104 = vld [vmem:[%s830 + $0x3e0] sm:$0xff]
        %v1105 = vld [vmem:[%s830 + $0x3e8] sm:$0xff]
        %v1106 = vld [vmem:[%s830 + $0x3f0] sm:$0xff]
        %v1107 = vld [vmem:[%s830 + $0x3f8] sm:$0xff]
        %v1108 = vld [vmem:[%s780] sm:$0xff]
        %v1109 = vld [vmem:[%s780 + $0x8] sm:$0xff]
        %v1110 = vld [vmem:[%s780 + $0x10] sm:$0xff]
        %v1111 = vld [vmem:[%s780 + $0x18] sm:$0xff]
        %v1112 = vld [vmem:[%s780 + $0x20] sm:$0xff]
        %v1113 = vld [vmem:[%s780 + $0x28] sm:$0xff]
        %v1114 = vld [vmem:[%s780 + $0x30] sm:$0xff]
        %v1115 = vld [vmem:[%s780 + $0x38] sm:$0xff]
        %v1116 = vld [vmem:[%s780 + $0x40] sm:$0xff]
        %v1117 = vld [vmem:[%s780 + $0x48] sm:$0xff]
        %v1118 = vld [vmem:[%s780 + $0x50] sm:$0xff]
        %v1119 = vld [vmem:[%s780 + $0x58] sm:$0xff]
        %v1120 = vld [vmem:[%s780 + $0x60] sm:$0xff]
        %v1121 = vld [vmem:[%s780 + $0x68] sm:$0xff]
        %v1122 = vld [vmem:[%s780 + $0x70] sm:$0xff]
        %v1123 = vld [vmem:[%s780 + $0x78] sm:$0xff]
        %v1124 = vld [vmem:[%s780 + $0x80] sm:$0xff]
        %v1125 = vld [vmem:[%s780 + $0x88] sm:$0xff]
        %v1126 = vld [vmem:[%s780 + $0x90] sm:$0xff]
        %v1127 = vld [vmem:[%s780 + $0x98] sm:$0xff]
        %v1128 = vld [vmem:[%s780 + $0xa0] sm:$0xff]
        %v1129 = vld [vmem:[%s780 + $0xa8] sm:$0xff]
        %v1130 = vld [vmem:[%s780 + $0xb0] sm:$0xff]
        %v1131 = vld [vmem:[%s780 + $0xb8] sm:$0xff]
        %v1132 = vld [vmem:[%s780 + $0xc0] sm:$0xff]
        %v1133 = vld [vmem:[%s780 + $0xc8] sm:$0xff]
        %v1134 = vld [vmem:[%s780 + $0xd0] sm:$0xff]
        %v1135 = vld [vmem:[%s780 + $0xd8] sm:$0xff]
        %v1136 = vld [vmem:[%s780 + $0xe0] sm:$0xff]
        %v1137 = vld [vmem:[%s780 + $0xe8] sm:$0xff]
        %v1138 = vld [vmem:[%s780 + $0xf0] sm:$0xff]
        %v1139 = vld [vmem:[%s780 + $0xf8] sm:$0xff]
        %v1140 = vld [vmem:[%s780 + $0x100] sm:$0xff]
        %v1141 = vld [vmem:[%s780 + $0x108] sm:$0xff]
        %v1142 = vld [vmem:[%s780 + $0x110] sm:$0xff]
        %v1143 = vld [vmem:[%s780 + $0x118] sm:$0xff]
        %v1144 = vld [vmem:[%s780 + $0x120] sm:$0xff]
        %v1145 = vld [vmem:[%s780 + $0x128] sm:$0xff]
        %v1146 = vld [vmem:[%s780 + $0x130] sm:$0xff]
        %v1147 = vld [vmem:[%s780 + $0x138] sm:$0xff]
        %v1148 = vld [vmem:[%s780 + $0x140] sm:$0xff]
        %v1149 = vld [vmem:[%s780 + $0x148] sm:$0xff]
        %v1150 = vld [vmem:[%s780 + $0x150] sm:$0xff]
        %v1151 = vld [vmem:[%s780 + $0x158] sm:$0xff]
        %v1152 = vld [vmem:[%s780 + $0x160] sm:$0xff]
        %v1153 = vld [vmem:[%s780 + $0x168] sm:$0xff]
        %v1154 = vld [vmem:[%s780 + $0x170] sm:$0xff]
        %v1155 = vld [vmem:[%s780 + $0x178] sm:$0xff]
        %v1156 = vld [vmem:[%s780 + $0x180] sm:$0xff]
        %v1157 = vld [vmem:[%s780 + $0x188] sm:$0xff]
        %v1158 = vld [vmem:[%s780 + $0x190] sm:$0xff]
        %v1159 = vld [vmem:[%s780 + $0x198] sm:$0xff]
        %v1160 = vld [vmem:[%s780 + $0x1a0] sm:$0xff]
        %v1161 = vld [vmem:[%s780 + $0x1a8] sm:$0xff]
        %v1162 = vld [vmem:[%s780 + $0x1b0] sm:$0xff]
        %v1163 = vld [vmem:[%s780 + $0x1b8] sm:$0xff]
        %v1164 = vld [vmem:[%s780 + $0x1c0] sm:$0xff]
        %v1165 = vld [vmem:[%s780 + $0x1c8] sm:$0xff]
        %v1166 = vld [vmem:[%s780 + $0x1d0] sm:$0xff]
        %v1167 = vld [vmem:[%s780 + $0x1d8] sm:$0xff]
        %v1168 = vld [vmem:[%s780 + $0x1e0] sm:$0xff]
        %v1169 = vld [vmem:[%s780 + $0x1e8] sm:$0xff]
        %v1170 = vld [vmem:[%s780 + $0x1f0] sm:$0xff]
        %v1171 = vld [vmem:[%s780 + $0x1f8] sm:$0xff]
        %v1172 = vld [vmem:[%s780 + $0x200] sm:$0xff]
        %v1173 = vld [vmem:[%s780 + $0x208] sm:$0xff]
        %v1174 = vld [vmem:[%s780 + $0x210] sm:$0xff]
        %v1175 = vld [vmem:[%s780 + $0x218] sm:$0xff]
        %v1176 = vld [vmem:[%s780 + $0x220] sm:$0xff]
        %v1177 = vld [vmem:[%s780 + $0x228] sm:$0xff]
        %v1178 = vld [vmem:[%s780 + $0x230] sm:$0xff]
        %v1179 = vld [vmem:[%s780 + $0x238] sm:$0xff]
        %v1180 = vld [vmem:[%s780 + $0x240] sm:$0xff]
        %v1181 = vld [vmem:[%s780 + $0x248] sm:$0xff]
        %v1182 = vld [vmem:[%s780 + $0x250] sm:$0xff]
        %v1183 = vld [vmem:[%s780 + $0x258] sm:$0xff]
        %v1184 = vld [vmem:[%s780 + $0x260] sm:$0xff]
        %v1185 = vld [vmem:[%s780 + $0x268] sm:$0xff]
        %v1186 = vld [vmem:[%s780 + $0x270] sm:$0xff]
        %v1187 = vld [vmem:[%s780 + $0x278] sm:$0xff]
        %v1188 = vld [vmem:[%s780 + $0x280] sm:$0xff]
        %v1189 = vld [vmem:[%s780 + $0x288] sm:$0xff]
        %v1190 = vld [vmem:[%s780 + $0x290] sm:$0xff]
        %v1191 = vld [vmem:[%s780 + $0x298] sm:$0xff]
        %v1192 = vld [vmem:[%s780 + $0x2a0] sm:$0xff]
        %v1193 = vld [vmem:[%s780 + $0x2a8] sm:$0xff]
        %v1194 = vld [vmem:[%s780 + $0x2b0] sm:$0xff]
        %v1195 = vld [vmem:[%s780 + $0x2b8] sm:$0xff]
        %v1196 = vld [vmem:[%s780 + $0x2c0] sm:$0xff]
        %v1197 = vld [vmem:[%s780 + $0x2c8] sm:$0xff]
        %v1198 = vld [vmem:[%s780 + $0x2d0] sm:$0xff]
        %v1199 = vld [vmem:[%s780 + $0x2d8] sm:$0xff]
        %v1200 = vld [vmem:[%s780 + $0x2e0] sm:$0xff]
        %v1201 = vld [vmem:[%s780 + $0x2e8] sm:$0xff]
        %v1202 = vld [vmem:[%s780 + $0x2f0] sm:$0xff]
        %v1203 = vld [vmem:[%s780 + $0x2f8] sm:$0xff]
        %v1204 = vld [vmem:[%s780 + $0x300] sm:$0xff]
        %v1205 = vld [vmem:[%s780 + $0x308] sm:$0xff]
        %v1206 = vld [vmem:[%s780 + $0x310] sm:$0xff]
        %v1207 = vld [vmem:[%s780 + $0x318] sm:$0xff]
        %v1208 = vld [vmem:[%s780 + $0x320] sm:$0xff]
        %v1209 = vld [vmem:[%s780 + $0x328] sm:$0xff]
        %v1210 = vld [vmem:[%s780 + $0x330] sm:$0xff]
        %v1211 = vld [vmem:[%s780 + $0x338] sm:$0xff]
        %v1212 = vld [vmem:[%s780 + $0x340] sm:$0xff]
        %v1213 = vld [vmem:[%s780 + $0x348] sm:$0xff]
        %v1214 = vld [vmem:[%s780 + $0x350] sm:$0xff]
        %v1215 = vld [vmem:[%s780 + $0x358] sm:$0xff]
        %v1216 = vld [vmem:[%s780 + $0x360] sm:$0xff]
        %v1217 = vld [vmem:[%s780 + $0x368] sm:$0xff]
        %v1218 = vld [vmem:[%s780 + $0x370] sm:$0xff]
        %v1219 = vld [vmem:[%s780 + $0x378] sm:$0xff]
        %v1220 = vld [vmem:[%s780 + $0x380] sm:$0xff]
        %v1221 = vld [vmem:[%s780 + $0x388] sm:$0xff]
        %v1222 = vld [vmem:[%s780 + $0x390] sm:$0xff]
        %v1223 = vld [vmem:[%s780 + $0x398] sm:$0xff]
        %v1224 = vld [vmem:[%s780 + $0x3a0] sm:$0xff]
        %v1225 = vld [vmem:[%s780 + $0x3a8] sm:$0xff]
        %v1226 = vld [vmem:[%s780 + $0x3b0] sm:$0xff]
        %v1227 = vld [vmem:[%s780 + $0x3b8] sm:$0xff]
        %v1228 = vld [vmem:[%s780 + $0x3c0] sm:$0xff]
        %v1229 = vld [vmem:[%s780 + $0x3c8] sm:$0xff]
        %v1230 = vld [vmem:[%s780 + $0x3d0] sm:$0xff]
        %v1231 = vld [vmem:[%s780 + $0x3d8] sm:$0xff]
        %v1232 = vld [vmem:[%s780 + $0x3e0] sm:$0xff]
        %v1233 = vld [vmem:[%s780 + $0x3e8] sm:$0xff]
        %v1234 = vld [vmem:[%s780 + $0x3f0] sm:$0xff]
        %v1235 = vld [vmem:[%s780 + $0x3f8] sm:$0xff]
        %v1364 = vunpack.c.l.b16 %v980
        %v1365 = vunpack.c.h.b16 %v980
        %v1366 = vunpack.c.l.b16 %v981
        %v1367 = vunpack.c.h.b16 %v981
        %v1368 = vunpack.c.l.b16 %v982
        %v1369 = vunpack.c.h.b16 %v982
        %v1370 = vunpack.c.l.b16 %v983
        %v1371 = vunpack.c.h.b16 %v983
        %v1372 = vunpack.c.l.b16 %v984
        %v1373 = vunpack.c.h.b16 %v984
        %v1374 = vunpack.c.l.b16 %v985
        %v1375 = vunpack.c.h.b16 %v985
        %v1376 = vunpack.c.l.b16 %v986
        %v1377 = vunpack.c.h.b16 %v986
        %v1378 = vunpack.c.l.b16 %v987
        %v1379 = vunpack.c.h.b16 %v987
        %v1380 = vunpack.c.l.b16 %v988
        %v1381 = vunpack.c.h.b16 %v988
        %v1382 = vunpack.c.l.b16 %v989
        %v1383 = vunpack.c.h.b16 %v989
        %v1384 = vunpack.c.l.b16 %v990
        %v1385 = vunpack.c.h.b16 %v990
        %v1386 = vunpack.c.l.b16 %v991
        %v1387 = vunpack.c.h.b16 %v991
        %v1388 = vunpack.c.l.b16 %v992
        %v1389 = vunpack.c.h.b16 %v992
        %v1390 = vunpack.c.l.b16 %v993
        %v1391 = vunpack.c.h.b16 %v993
        %v1392 = vunpack.c.l.b16 %v994
        %v1393 = vunpack.c.h.b16 %v994
        %v1394 = vunpack.c.l.b16 %v995
        %v1395 = vunpack.c.h.b16 %v995
        %v1396 = vunpack.c.l.b16 %v996
        %v1397 = vunpack.c.h.b16 %v996
        %v1398 = vunpack.c.l.b16 %v997
        %v1399 = vunpack.c.h.b16 %v997
        %v1400 = vunpack.c.l.b16 %v998
        %v1401 = vunpack.c.h.b16 %v998
        %v1402 = vunpack.c.l.b16 %v999
        %v1403 = vunpack.c.h.b16 %v999
        %v1404 = vunpack.c.l.b16 %v1000
        %v1405 = vunpack.c.h.b16 %v1000
        %v1406 = vunpack.c.l.b16 %v1001
        %v1407 = vunpack.c.h.b16 %v1001
        %v1408 = vunpack.c.l.b16 %v1002
        %v1409 = vunpack.c.h.b16 %v1002
        %v1410 = vunpack.c.l.b16 %v1003
        %v1411 = vunpack.c.h.b16 %v1003
        %v1412 = vunpack.c.l.b16 %v1004
        %v1413 = vunpack.c.h.b16 %v1004
        %v1414 = vunpack.c.l.b16 %v1005
        %v1415 = vunpack.c.h.b16 %v1005
        %v1416 = vunpack.c.l.b16 %v1006
        %v1417 = vunpack.c.h.b16 %v1006
        %v1418 = vunpack.c.l.b16 %v1007
        %v1419 = vunpack.c.h.b16 %v1007
        %v1420 = vunpack.c.l.b16 %v1008
        %v1421 = vunpack.c.h.b16 %v1008
        %v1422 = vunpack.c.l.b16 %v1009
        %v1423 = vunpack.c.h.b16 %v1009
        %v1424 = vunpack.c.l.b16 %v1010
        %v1425 = vunpack.c.h.b16 %v1010
        %v1426 = vunpack.c.l.b16 %v1011
        %v1427 = vunpack.c.h.b16 %v1011
        %v1428 = vunpack.c.l.b16 %v1012
        %v1429 = vunpack.c.h.b16 %v1012
        %v1430 = vunpack.c.l.b16 %v1013
        %v1431 = vunpack.c.h.b16 %v1013
        %v1432 = vunpack.c.l.b16 %v1014
        %v1433 = vunpack.c.h.b16 %v1014
        %v1434 = vunpack.c.l.b16 %v1015
        %v1435 = vunpack.c.h.b16 %v1015
        %v1436 = vunpack.c.l.b16 %v1016
        %v1437 = vunpack.c.h.b16 %v1016
        %v1438 = vunpack.c.l.b16 %v1017
        %v1439 = vunpack.c.h.b16 %v1017
        %v1440 = vunpack.c.l.b16 %v1018
        %v1441 = vunpack.c.h.b16 %v1018
        %v1442 = vunpack.c.l.b16 %v1019
        %v1443 = vunpack.c.h.b16 %v1019
        %v1444 = vunpack.c.l.b16 %v1020
        %v1445 = vunpack.c.h.b16 %v1020
        %v1446 = vunpack.c.l.b16 %v1021
        %v1447 = vunpack.c.h.b16 %v1021
        %v1448 = vunpack.c.l.b16 %v1022
        %v1449 = vunpack.c.h.b16 %v1022
        %v1450 = vunpack.c.l.b16 %v1023
        %v1451 = vunpack.c.h.b16 %v1023
        %v1452 = vunpack.c.l.b16 %v1024
        %v1453 = vunpack.c.h.b16 %v1024
        %v1454 = vunpack.c.l.b16 %v1025
        %v1455 = vunpack.c.h.b16 %v1025
        %v1456 = vunpack.c.l.b16 %v1026
        %v1457 = vunpack.c.h.b16 %v1026
        %v1458 = vunpack.c.l.b16 %v1027
        %v1459 = vunpack.c.h.b16 %v1027
        %v1460 = vunpack.c.l.b16 %v1028
        %v1461 = vunpack.c.h.b16 %v1028
        %v1462 = vunpack.c.l.b16 %v1029
        %v1463 = vunpack.c.h.b16 %v1029
        %v1464 = vunpack.c.l.b16 %v1030
        %v1465 = vunpack.c.h.b16 %v1030
        %v1466 = vunpack.c.l.b16 %v1031
        %v1467 = vunpack.c.h.b16 %v1031
        %v1468 = vunpack.c.l.b16 %v1032
        %v1469 = vunpack.c.h.b16 %v1032
        %v1470 = vunpack.c.l.b16 %v1033
        %v1471 = vunpack.c.h.b16 %v1033
        %v1472 = vunpack.c.l.b16 %v1034
        %v1473 = vunpack.c.h.b16 %v1034
        %v1474 = vunpack.c.l.b16 %v1035
        %v1475 = vunpack.c.h.b16 %v1035
        %v1476 = vunpack.c.l.b16 %v1036
        %v1477 = vunpack.c.h.b16 %v1036
        %v1478 = vunpack.c.l.b16 %v1037
        %v1479 = vunpack.c.h.b16 %v1037
        %v1480 = vunpack.c.l.b16 %v1038
        %v1481 = vunpack.c.h.b16 %v1038
        %v1482 = vunpack.c.l.b16 %v1039
        %v1483 = vunpack.c.h.b16 %v1039
        %v1484 = vunpack.c.l.b16 %v1040
        %v1485 = vunpack.c.h.b16 %v1040
        %v1486 = vunpack.c.l.b16 %v1041
        %v1487 = vunpack.c.h.b16 %v1041
        %v1488 = vunpack.c.l.b16 %v1042
        %v1489 = vunpack.c.h.b16 %v1042
        %v1490 = vunpack.c.l.b16 %v1043
        %v1491 = vunpack.c.h.b16 %v1043
        %v1492 = vunpack.c.l.b16 %v1044
        %v1493 = vunpack.c.h.b16 %v1044
        %v1494 = vunpack.c.l.b16 %v1045
        %v1495 = vunpack.c.h.b16 %v1045
        %v1496 = vunpack.c.l.b16 %v1046
        %v1497 = vunpack.c.h.b16 %v1046
        %v1498 = vunpack.c.l.b16 %v1047
        %v1499 = vunpack.c.h.b16 %v1047
        %v1500 = vunpack.c.l.b16 %v1048
        %v1501 = vunpack.c.h.b16 %v1048
        %v1502 = vunpack.c.l.b16 %v1049
        %v1503 = vunpack.c.h.b16 %v1049
        %v1504 = vunpack.c.l.b16 %v1050
        %v1505 = vunpack.c.h.b16 %v1050
        %v1506 = vunpack.c.l.b16 %v1051
        %v1507 = vunpack.c.h.b16 %v1051
        %v1508 = vunpack.c.l.b16 %v1052
        %v1509 = vunpack.c.h.b16 %v1052
        %v1510 = vunpack.c.l.b16 %v1053
        %v1511 = vunpack.c.h.b16 %v1053
        %v1512 = vunpack.c.l.b16 %v1054
        %v1513 = vunpack.c.h.b16 %v1054
        %v1514 = vunpack.c.l.b16 %v1055
        %v1515 = vunpack.c.h.b16 %v1055
        %v1516 = vunpack.c.l.b16 %v1056
        %v1517 = vunpack.c.h.b16 %v1056
        %v1518 = vunpack.c.l.b16 %v1057
        %v1519 = vunpack.c.h.b16 %v1057
        %v1520 = vunpack.c.l.b16 %v1058
        %v1521 = vunpack.c.h.b16 %v1058
        %v1522 = vunpack.c.l.b16 %v1059
        %v1523 = vunpack.c.h.b16 %v1059
        %v1524 = vunpack.c.l.b16 %v1060
        %v1525 = vunpack.c.h.b16 %v1060
        %v1526 = vunpack.c.l.b16 %v1061
        %v1527 = vunpack.c.h.b16 %v1061
        %v1528 = vunpack.c.l.b16 %v1062
        %v1529 = vunpack.c.h.b16 %v1062
        %v1530 = vunpack.c.l.b16 %v1063
        %v1531 = vunpack.c.h.b16 %v1063
        %v1532 = vunpack.c.l.b16 %v1064
        %v1533 = vunpack.c.h.b16 %v1064
        %v1534 = vunpack.c.l.b16 %v1065
        %v1535 = vunpack.c.h.b16 %v1065
        %v1536 = vunpack.c.l.b16 %v1066
        %v1537 = vunpack.c.h.b16 %v1066
        %v1538 = vunpack.c.l.b16 %v1067
        %v1539 = vunpack.c.h.b16 %v1067
        %v1540 = vunpack.c.l.b16 %v1068
        %v1541 = vunpack.c.h.b16 %v1068
        %v1542 = vunpack.c.l.b16 %v1069
        %v1543 = vunpack.c.h.b16 %v1069
        %v1544 = vunpack.c.l.b16 %v1070
        %v1545 = vunpack.c.h.b16 %v1070
        %v1546 = vunpack.c.l.b16 %v1071
        %v1547 = vunpack.c.h.b16 %v1071
        %v1548 = vunpack.c.l.b16 %v1072
        %v1549 = vunpack.c.h.b16 %v1072
        %v1550 = vunpack.c.l.b16 %v1073
        %v1551 = vunpack.c.h.b16 %v1073
        %v1552 = vunpack.c.l.b16 %v1074
        %v1553 = vunpack.c.h.b16 %v1074
        %v1554 = vunpack.c.l.b16 %v1075
        %v1555 = vunpack.c.h.b16 %v1075
        %v1556 = vunpack.c.l.b16 %v1076
        %v1557 = vunpack.c.h.b16 %v1076
        %v1558 = vunpack.c.l.b16 %v1077
        %v1559 = vunpack.c.h.b16 %v1077
        %v1560 = vunpack.c.l.b16 %v1078
        %v1561 = vunpack.c.h.b16 %v1078
        %v1562 = vunpack.c.l.b16 %v1079
        %v1563 = vunpack.c.h.b16 %v1079
        %v1564 = vunpack.c.l.b16 %v1080
        %v1565 = vunpack.c.h.b16 %v1080
        %v1566 = vunpack.c.l.b16 %v1081
        %v1567 = vunpack.c.h.b16 %v1081
        %v1568 = vunpack.c.l.b16 %v1082
        %v1569 = vunpack.c.h.b16 %v1082
        %v1570 = vunpack.c.l.b16 %v1083
        %v1571 = vunpack.c.h.b16 %v1083
        %v1572 = vunpack.c.l.b16 %v1084
        %v1573 = vunpack.c.h.b16 %v1084
        %v1574 = vunpack.c.l.b16 %v1085
        %v1575 = vunpack.c.h.b16 %v1085
        %v1576 = vunpack.c.l.b16 %v1086
        %v1577 = vunpack.c.h.b16 %v1086
        %v1578 = vunpack.c.l.b16 %v1087
        %v1579 = vunpack.c.h.b16 %v1087
        %v1580 = vunpack.c.l.b16 %v1088
        %v1581 = vunpack.c.h.b16 %v1088
        %v1582 = vunpack.c.l.b16 %v1089
        %v1583 = vunpack.c.h.b16 %v1089
        %v1584 = vunpack.c.l.b16 %v1090
        %v1585 = vunpack.c.h.b16 %v1090
        %v1586 = vunpack.c.l.b16 %v1091
        %v1587 = vunpack.c.h.b16 %v1091
        %v1588 = vunpack.c.l.b16 %v1092
        %v1589 = vunpack.c.h.b16 %v1092
        %v1590 = vunpack.c.l.b16 %v1093
        %v1591 = vunpack.c.h.b16 %v1093
        %v1592 = vunpack.c.l.b16 %v1094
        %v1593 = vunpack.c.h.b16 %v1094
        %v1594 = vunpack.c.l.b16 %v1095
        %v1595 = vunpack.c.h.b16 %v1095
        %v1596 = vunpack.c.l.b16 %v1096
        %v1597 = vunpack.c.h.b16 %v1096
        %v1598 = vunpack.c.l.b16 %v1097
        %v1599 = vunpack.c.h.b16 %v1097
        %v1600 = vunpack.c.l.b16 %v1098
        %v1601 = vunpack.c.h.b16 %v1098
        %v1602 = vunpack.c.l.b16 %v1099
        %v1603 = vunpack.c.h.b16 %v1099
        %v1604 = vunpack.c.l.b16 %v1100
        %v1605 = vunpack.c.h.b16 %v1100
        %v1606 = vunpack.c.l.b16 %v1101
        %v1607 = vunpack.c.h.b16 %v1101
        %v1608 = vunpack.c.l.b16 %v1102
        %v1609 = vunpack.c.h.b16 %v1102
        %v1610 = vunpack.c.l.b16 %v1103
        %v1611 = vunpack.c.h.b16 %v1103
        %v1612 = vunpack.c.l.b16 %v1104
        %v1613 = vunpack.c.h.b16 %v1104
        %v1614 = vunpack.c.l.b16 %v1105
        %v1615 = vunpack.c.h.b16 %v1105
        %v1616 = vunpack.c.l.b16 %v1106
        %v1617 = vunpack.c.h.b16 %v1106
        %v1618 = vunpack.c.l.b16 %v1107
        %v1619 = vunpack.c.h.b16 %v1107
        %v1620 = vpack.c.b16 %v1372, %v1364
        %v1621 = vpack.c.b16 %v1373, %v1365
        %v1622 = vpack.c.b16 %v1374, %v1366
        %v1623 = vpack.c.b16 %v1375, %v1367
        %v1624 = vpack.c.b16 %v1376, %v1368
        %v1625 = vpack.c.b16 %v1377, %v1369
        %v1626 = vpack.c.b16 %v1378, %v1370
        %v1627 = vpack.c.b16 %v1379, %v1371
        %v1628 = vpack.c.b16 %v1388, %v1380
        %v1629 = vpack.c.b16 %v1389, %v1381
        %v1630 = vpack.c.b16 %v1390, %v1382
        %v1631 = vpack.c.b16 %v1391, %v1383
        %v1632 = vpack.c.b16 %v1392, %v1384
        %v1633 = vpack.c.b16 %v1393, %v1385
        %v1634 = vpack.c.b16 %v1394, %v1386
        %v1635 = vpack.c.b16 %v1395, %v1387
        %v1636 = vpack.c.b16 %v1404, %v1396
        %v1637 = vpack.c.b16 %v1405, %v1397
        %v1638 = vpack.c.b16 %v1406, %v1398
        %v1639 = vpack.c.b16 %v1407, %v1399
        %v1640 = vpack.c.b16 %v1408, %v1400
        %v1641 = vpack.c.b16 %v1409, %v1401
        %v1642 = vpack.c.b16 %v1410, %v1402
        %v1643 = vpack.c.b16 %v1411, %v1403
        %v1644 = vpack.c.b16 %v1420, %v1412
        %v1645 = vpack.c.b16 %v1421, %v1413
        %v1646 = vpack.c.b16 %v1422, %v1414
        %v1647 = vpack.c.b16 %v1423, %v1415
        %v1648 = vpack.c.b16 %v1424, %v1416
        %v1649 = vpack.c.b16 %v1425, %v1417
        %v1650 = vpack.c.b16 %v1426, %v1418
        %v1651 = vpack.c.b16 %v1427, %v1419
        %v1652 = vpack.c.b16 %v1436, %v1428
        %v1653 = vpack.c.b16 %v1437, %v1429
        %v1654 = vpack.c.b16 %v1438, %v1430
        %v1655 = vpack.c.b16 %v1439, %v1431
        %v1656 = vpack.c.b16 %v1440, %v1432
        %v1657 = vpack.c.b16 %v1441, %v1433
        %v1658 = vpack.c.b16 %v1442, %v1434
        %v1659 = vpack.c.b16 %v1443, %v1435
        %v1660 = vpack.c.b16 %v1452, %v1444
        %v1661 = vpack.c.b16 %v1453, %v1445
        %v1662 = vpack.c.b16 %v1454, %v1446
        %v1663 = vpack.c.b16 %v1455, %v1447
        %v1664 = vpack.c.b16 %v1456, %v1448
        %v1665 = vpack.c.b16 %v1457, %v1449
        %v1666 = vpack.c.b16 %v1458, %v1450
        %v1667 = vpack.c.b16 %v1459, %v1451
        %v1668 = vpack.c.b16 %v1468, %v1460
        %v1669 = vpack.c.b16 %v1469, %v1461
        %v1670 = vpack.c.b16 %v1470, %v1462
        %v1671 = vpack.c.b16 %v1471, %v1463
        %v1672 = vpack.c.b16 %v1472, %v1464
        %v1673 = vpack.c.b16 %v1473, %v1465
        %v1674 = vpack.c.b16 %v1474, %v1466
        %v1675 = vpack.c.b16 %v1475, %v1467
        %v1676 = vpack.c.b16 %v1484, %v1476
        %v1677 = vpack.c.b16 %v1485, %v1477
        %v1678 = vpack.c.b16 %v1486, %v1478
        %v1679 = vpack.c.b16 %v1487, %v1479
        %v1680 = vpack.c.b16 %v1488, %v1480
        %v1681 = vpack.c.b16 %v1489, %v1481
        %v1682 = vpack.c.b16 %v1490, %v1482
        %v1683 = vpack.c.b16 %v1491, %v1483
        %v1684 = vpack.c.b16 %v1500, %v1492
        %v1685 = vpack.c.b16 %v1501, %v1493
        %v1686 = vpack.c.b16 %v1502, %v1494
        %v1687 = vpack.c.b16 %v1503, %v1495
        %v1688 = vpack.c.b16 %v1504, %v1496
        %v1689 = vpack.c.b16 %v1505, %v1497
        %v1690 = vpack.c.b16 %v1506, %v1498
        %v1691 = vpack.c.b16 %v1507, %v1499
        %v1692 = vpack.c.b16 %v1516, %v1508
        %v1693 = vpack.c.b16 %v1517, %v1509
        %v1694 = vpack.c.b16 %v1518, %v1510
        %v1695 = vpack.c.b16 %v1519, %v1511
        %v1696 = vpack.c.b16 %v1520, %v1512
        %v1697 = vpack.c.b16 %v1521, %v1513
        %v1698 = vpack.c.b16 %v1522, %v1514
        %v1699 = vpack.c.b16 %v1523, %v1515
        %v1700 = vpack.c.b16 %v1532, %v1524
        %v1701 = vpack.c.b16 %v1533, %v1525
        %v1702 = vpack.c.b16 %v1534, %v1526
        %v1703 = vpack.c.b16 %v1535, %v1527
        %v1704 = vpack.c.b16 %v1536, %v1528
        %v1705 = vpack.c.b16 %v1537, %v1529
        %v1706 = vpack.c.b16 %v1538, %v1530
        %v1707 = vpack.c.b16 %v1539, %v1531
        %v1708 = vpack.c.b16 %v1548, %v1540
        %v1709 = vpack.c.b16 %v1549, %v1541
        %v1710 = vpack.c.b16 %v1550, %v1542
        %v1711 = vpack.c.b16 %v1551, %v1543
        %v1712 = vpack.c.b16 %v1552, %v1544
        %v1713 = vpack.c.b16 %v1553, %v1545
        %v1714 = vpack.c.b16 %v1554, %v1546
        %v1715 = vpack.c.b16 %v1555, %v1547
        %v1716 = vpack.c.b16 %v1564, %v1556
        %v1717 = vpack.c.b16 %v1565, %v1557
        %v1718 = vpack.c.b16 %v1566, %v1558
        %v1719 = vpack.c.b16 %v1567, %v1559
        %v1720 = vpack.c.b16 %v1568, %v1560
        %v1721 = vpack.c.b16 %v1569, %v1561
        %v1722 = vpack.c.b16 %v1570, %v1562
        %v1723 = vpack.c.b16 %v1571, %v1563
        %v1724 = vpack.c.b16 %v1580, %v1572
        %v1725 = vpack.c.b16 %v1581, %v1573
        %v1726 = vpack.c.b16 %v1582, %v1574
        %v1727 = vpack.c.b16 %v1583, %v1575
        %v1728 = vpack.c.b16 %v1584, %v1576
        %v1729 = vpack.c.b16 %v1585, %v1577
        %v1730 = vpack.c.b16 %v1586, %v1578
        %v1731 = vpack.c.b16 %v1587, %v1579
        %v1732 = vpack.c.b16 %v1596, %v1588
        %v1733 = vpack.c.b16 %v1597, %v1589
        %v1734 = vpack.c.b16 %v1598, %v1590
        %v1735 = vpack.c.b16 %v1599, %v1591
        %v1736 = vpack.c.b16 %v1600, %v1592
        %v1737 = vpack.c.b16 %v1601, %v1593
        %v1738 = vpack.c.b16 %v1602, %v1594
        %v1739 = vpack.c.b16 %v1603, %v1595
        %v1740 = vpack.c.b16 %v1612, %v1604
        %v1741 = vpack.c.b16 %v1613, %v1605
        %v1742 = vpack.c.b16 %v1614, %v1606
        %v1743 = vpack.c.b16 %v1615, %v1607
        %v1744 = vpack.c.b16 %v1616, %v1608
        %v1745 = vpack.c.b16 %v1617, %v1609
        %v1746 = vpack.c.b16 %v1618, %v1610
        %v1747 = vpack.c.b16 %v1619, %v1611
        %v2004 = vunpack.c.l.b16 %v1108
        %v2005 = vunpack.c.h.b16 %v1108
        %v2006 = vunpack.c.l.b16 %v1109
        %v2007 = vunpack.c.h.b16 %v1109
        %v2008 = vunpack.c.l.b16 %v1110
        %v2009 = vunpack.c.h.b16 %v1110
        %v2010 = vunpack.c.l.b16 %v1111
        %v2011 = vunpack.c.h.b16 %v1111
        %v2012 = vunpack.c.l.b16 %v1112
        %v2013 = vunpack.c.h.b16 %v1112
        %v2014 = vunpack.c.l.b16 %v1113
        %v2015 = vunpack.c.h.b16 %v1113
        %v2016 = vunpack.c.l.b16 %v1114
        %v2017 = vunpack.c.h.b16 %v1114
        %v2018 = vunpack.c.l.b16 %v1115
        %v2019 = vunpack.c.h.b16 %v1115
        %v2020 = vunpack.c.l.b16 %v1116
        %v2021 = vunpack.c.h.b16 %v1116
        %v2022 = vunpack.c.l.b16 %v1117
        %v2023 = vunpack.c.h.b16 %v1117
        %v2024 = vunpack.c.l.b16 %v1118
        %v2025 = vunpack.c.h.b16 %v1118
        %v2026 = vunpack.c.l.b16 %v1119
        %v2027 = vunpack.c.h.b16 %v1119
        %v2028 = vunpack.c.l.b16 %v1120
        %v2029 = vunpack.c.h.b16 %v1120
        %v2030 = vunpack.c.l.b16 %v1121
        %v2031 = vunpack.c.h.b16 %v1121
        %v2032 = vunpack.c.l.b16 %v1122
        %v2033 = vunpack.c.h.b16 %v1122
        %v2034 = vunpack.c.l.b16 %v1123
        %v2035 = vunpack.c.h.b16 %v1123
        %v2036 = vunpack.c.l.b16 %v1124
        %v2037 = vunpack.c.h.b16 %v1124
        %v2038 = vunpack.c.l.b16 %v1125
        %v2039 = vunpack.c.h.b16 %v1125
        %v2040 = vunpack.c.l.b16 %v1126
        %v2041 = vunpack.c.h.b16 %v1126
        %v2042 = vunpack.c.l.b16 %v1127
        %v2043 = vunpack.c.h.b16 %v1127
        %v2044 = vunpack.c.l.b16 %v1128
        %v2045 = vunpack.c.h.b16 %v1128
        %v2046 = vunpack.c.l.b16 %v1129
        %v2047 = vunpack.c.h.b16 %v1129
        %v2048 = vunpack.c.l.b16 %v1130
        %v2049 = vunpack.c.h.b16 %v1130
        %v2050 = vunpack.c.l.b16 %v1131
        %v2051 = vunpack.c.h.b16 %v1131
        %v2052 = vunpack.c.l.b16 %v1132
        %v2053 = vunpack.c.h.b16 %v1132
        %v2054 = vunpack.c.l.b16 %v1133
        %v2055 = vunpack.c.h.b16 %v1133
        %v2056 = vunpack.c.l.b16 %v1134
        %v2057 = vunpack.c.h.b16 %v1134
        %v2058 = vunpack.c.l.b16 %v1135
        %v2059 = vunpack.c.h.b16 %v1135
        %v2060 = vunpack.c.l.b16 %v1136
        %v2061 = vunpack.c.h.b16 %v1136
        %v2062 = vunpack.c.l.b16 %v1137
        %v2063 = vunpack.c.h.b16 %v1137
        %v2064 = vunpack.c.l.b16 %v1138
        %v2065 = vunpack.c.h.b16 %v1138
        %v2066 = vunpack.c.l.b16 %v1139
        %v2067 = vunpack.c.h.b16 %v1139
        %v2068 = vunpack.c.l.b16 %v1140
        %v2069 = vunpack.c.h.b16 %v1140
        %v2070 = vunpack.c.l.b16 %v1141
        %v2071 = vunpack.c.h.b16 %v1141
        %v2072 = vunpack.c.l.b16 %v1142
        %v2073 = vunpack.c.h.b16 %v1142
        %v2074 = vunpack.c.l.b16 %v1143
        %v2075 = vunpack.c.h.b16 %v1143
        %v2076 = vunpack.c.l.b16 %v1144
        %v2077 = vunpack.c.h.b16 %v1144
        %v2078 = vunpack.c.l.b16 %v1145
        %v2079 = vunpack.c.h.b16 %v1145
        %v2080 = vunpack.c.l.b16 %v1146
        %v2081 = vunpack.c.h.b16 %v1146
        %v2082 = vunpack.c.l.b16 %v1147
        %v2083 = vunpack.c.h.b16 %v1147
        %v2084 = vunpack.c.l.b16 %v1148
        %v2085 = vunpack.c.h.b16 %v1148
        %v2086 = vunpack.c.l.b16 %v1149
        %v2087 = vunpack.c.h.b16 %v1149
        %v2088 = vunpack.c.l.b16 %v1150
        %v2089 = vunpack.c.h.b16 %v1150
        %v2090 = vunpack.c.l.b16 %v1151
        %v2091 = vunpack.c.h.b16 %v1151
        %v2092 = vunpack.c.l.b16 %v1152
        %v2093 = vunpack.c.h.b16 %v1152
        %v2094 = vunpack.c.l.b16 %v1153
        %v2095 = vunpack.c.h.b16 %v1153
        %v2096 = vunpack.c.l.b16 %v1154
        %v2097 = vunpack.c.h.b16 %v1154
        %v2098 = vunpack.c.l.b16 %v1155
        %v2099 = vunpack.c.h.b16 %v1155
        %v2100 = vunpack.c.l.b16 %v1156
        %v2101 = vunpack.c.h.b16 %v1156
        %v2102 = vunpack.c.l.b16 %v1157
        %v2103 = vunpack.c.h.b16 %v1157
        %v2104 = vunpack.c.l.b16 %v1158
        %v2105 = vunpack.c.h.b16 %v1158
        %v2106 = vunpack.c.l.b16 %v1159
        %v2107 = vunpack.c.h.b16 %v1159
        %v2108 = vunpack.c.l.b16 %v1160
        %v2109 = vunpack.c.h.b16 %v1160
        %v2110 = vunpack.c.l.b16 %v1161
        %v2111 = vunpack.c.h.b16 %v1161
        %v2112 = vunpack.c.l.b16 %v1162
        %v2113 = vunpack.c.h.b16 %v1162
        %v2114 = vunpack.c.l.b16 %v1163
        %v2115 = vunpack.c.h.b16 %v1163
        %v2116 = vunpack.c.l.b16 %v1164
        %v2117 = vunpack.c.h.b16 %v1164
        %v2118 = vunpack.c.l.b16 %v1165
        %v2119 = vunpack.c.h.b16 %v1165
        %v2120 = vunpack.c.l.b16 %v1166
        %v2121 = vunpack.c.h.b16 %v1166
        %v2122 = vunpack.c.l.b16 %v1167
        %v2123 = vunpack.c.h.b16 %v1167
        %v2124 = vunpack.c.l.b16 %v1168
        %v2125 = vunpack.c.h.b16 %v1168
        %v2126 = vunpack.c.l.b16 %v1169
        %v2127 = vunpack.c.h.b16 %v1169
        %v2128 = vunpack.c.l.b16 %v1170
        %v2129 = vunpack.c.h.b16 %v1170
        %v2130 = vunpack.c.l.b16 %v1171
        %v2131 = vunpack.c.h.b16 %v1171
        %v2132 = vunpack.c.l.b16 %v1172
        %v2133 = vunpack.c.h.b16 %v1172
        %v2134 = vunpack.c.l.b16 %v1173
        %v2135 = vunpack.c.h.b16 %v1173
        %v2136 = vunpack.c.l.b16 %v1174
        %v2137 = vunpack.c.h.b16 %v1174
        %v2138 = vunpack.c.l.b16 %v1175
        %v2139 = vunpack.c.h.b16 %v1175
        %v2140 = vunpack.c.l.b16 %v1176
        %v2141 = vunpack.c.h.b16 %v1176
        %v2142 = vunpack.c.l.b16 %v1177
        %v2143 = vunpack.c.h.b16 %v1177
        %v2144 = vunpack.c.l.b16 %v1178
        %v2145 = vunpack.c.h.b16 %v1178
        %v2146 = vunpack.c.l.b16 %v1179
        %v2147 = vunpack.c.h.b16 %v1179
        %v2148 = vunpack.c.l.b16 %v1180
        %v2149 = vunpack.c.h.b16 %v1180
        %v2150 = vunpack.c.l.b16 %v1181
        %v2151 = vunpack.c.h.b16 %v1181
        %v2152 = vunpack.c.l.b16 %v1182
        %v2153 = vunpack.c.h.b16 %v1182
        %v2154 = vunpack.c.l.b16 %v1183
        %v2155 = vunpack.c.h.b16 %v1183
        %v2156 = vunpack.c.l.b16 %v1184
        %v2157 = vunpack.c.h.b16 %v1184
        %v2158 = vunpack.c.l.b16 %v1185
        %v2159 = vunpack.c.h.b16 %v1185
        %v2160 = vunpack.c.l.b16 %v1186
        %v2161 = vunpack.c.h.b16 %v1186
        %v2162 = vunpack.c.l.b16 %v1187
        %v2163 = vunpack.c.h.b16 %v1187
        %v2164 = vunpack.c.l.b16 %v1188
        %v2165 = vunpack.c.h.b16 %v1188
        %v2166 = vunpack.c.l.b16 %v1189
        %v2167 = vunpack.c.h.b16 %v1189
        %v2168 = vunpack.c.l.b16 %v1190
        %v2169 = vunpack.c.h.b16 %v1190
        %v2170 = vunpack.c.l.b16 %v1191
        %v2171 = vunpack.c.h.b16 %v1191
        %v2172 = vunpack.c.l.b16 %v1192
        %v2173 = vunpack.c.h.b16 %v1192
        %v2174 = vunpack.c.l.b16 %v1193
        %v2175 = vunpack.c.h.b16 %v1193
        %v2176 = vunpack.c.l.b16 %v1194
        %v2177 = vunpack.c.h.b16 %v1194
        %v2178 = vunpack.c.l.b16 %v1195
        %v2179 = vunpack.c.h.b16 %v1195
        %v2180 = vunpack.c.l.b16 %v1196
        %v2181 = vunpack.c.h.b16 %v1196
        %v2182 = vunpack.c.l.b16 %v1197
        %v2183 = vunpack.c.h.b16 %v1197
        %v2184 = vunpack.c.l.b16 %v1198
        %v2185 = vunpack.c.h.b16 %v1198
        %v2186 = vunpack.c.l.b16 %v1199
        %v2187 = vunpack.c.h.b16 %v1199
        %v2188 = vunpack.c.l.b16 %v1200
        %v2189 = vunpack.c.h.b16 %v1200
        %v2190 = vunpack.c.l.b16 %v1201
        %v2191 = vunpack.c.h.b16 %v1201
        %v2192 = vunpack.c.l.b16 %v1202
        %v2193 = vunpack.c.h.b16 %v1202
        %v2194 = vunpack.c.l.b16 %v1203
        %v2195 = vunpack.c.h.b16 %v1203
        %v2196 = vunpack.c.l.b16 %v1204
        %v2197 = vunpack.c.h.b16 %v1204
        %v2198 = vunpack.c.l.b16 %v1205
        %v2199 = vunpack.c.h.b16 %v1205
        %v2200 = vunpack.c.l.b16 %v1206
        %v2201 = vunpack.c.h.b16 %v1206
        %v2202 = vunpack.c.l.b16 %v1207
        %v2203 = vunpack.c.h.b16 %v1207
        %v2204 = vunpack.c.l.b16 %v1208
        %v2205 = vunpack.c.h.b16 %v1208
        %v2206 = vunpack.c.l.b16 %v1209
        %v2207 = vunpack.c.h.b16 %v1209
        %v2208 = vunpack.c.l.b16 %v1210
        %v2209 = vunpack.c.h.b16 %v1210
        %v2210 = vunpack.c.l.b16 %v1211
        %v2211 = vunpack.c.h.b16 %v1211
        %v2212 = vunpack.c.l.b16 %v1212
        %v2213 = vunpack.c.h.b16 %v1212
        %v2214 = vunpack.c.l.b16 %v1213
        %v2215 = vunpack.c.h.b16 %v1213
        %v2216 = vunpack.c.l.b16 %v1214
        %v2217 = vunpack.c.h.b16 %v1214
        %v2218 = vunpack.c.l.b16 %v1215
        %v2219 = vunpack.c.h.b16 %v1215
        %v2220 = vunpack.c.l.b16 %v1216
        %v2221 = vunpack.c.h.b16 %v1216
        %v2222 = vunpack.c.l.b16 %v1217
        %v2223 = vunpack.c.h.b16 %v1217
        %v2224 = vunpack.c.l.b16 %v1218
        %v2225 = vunpack.c.h.b16 %v1218
        %v2226 = vunpack.c.l.b16 %v1219
        %v2227 = vunpack.c.h.b16 %v1219
        %v2228 = vunpack.c.l.b16 %v1220
        %v2229 = vunpack.c.h.b16 %v1220
        %v2230 = vunpack.c.l.b16 %v1221
        %v2231 = vunpack.c.h.b16 %v1221
        %v2232 = vunpack.c.l.b16 %v1222
        %v2233 = vunpack.c.h.b16 %v1222
        %v2234 = vunpack.c.l.b16 %v1223
        %v2235 = vunpack.c.h.b16 %v1223
        %v2236 = vunpack.c.l.b16 %v1224
        %v2237 = vunpack.c.h.b16 %v1224
        %v2238 = vunpack.c.l.b16 %v1225
        %v2239 = vunpack.c.h.b16 %v1225
        %v2240 = vunpack.c.l.b16 %v1226
        %v2241 = vunpack.c.h.b16 %v1226
        %v2242 = vunpack.c.l.b16 %v1227
        %v2243 = vunpack.c.h.b16 %v1227
        %v2244 = vunpack.c.l.b16 %v1228
        %v2245 = vunpack.c.h.b16 %v1228
        %v2246 = vunpack.c.l.b16 %v1229
        %v2247 = vunpack.c.h.b16 %v1229
        %v2248 = vunpack.c.l.b16 %v1230
        %v2249 = vunpack.c.h.b16 %v1230
        %v2250 = vunpack.c.l.b16 %v1231
        %v2251 = vunpack.c.h.b16 %v1231
        %v2252 = vunpack.c.l.b16 %v1232
        %v2253 = vunpack.c.h.b16 %v1232
        %v2254 = vunpack.c.l.b16 %v1233
        %v2255 = vunpack.c.h.b16 %v1233
        %v2256 = vunpack.c.l.b16 %v1234
        %v2257 = vunpack.c.h.b16 %v1234
        %v2258 = vunpack.c.l.b16 %v1235
        %v2259 = vunpack.c.h.b16 %v1235
        %v2260 = vpack.c.b16 %v2006, %v2004
        %v2261 = vpack.c.b16 %v2007, %v2005
        %v2262 = vpack.c.b16 %v2010, %v2008
        %v2263 = vpack.c.b16 %v2011, %v2009
        %v2264 = vpack.c.b16 %v2014, %v2012
        %v2265 = vpack.c.b16 %v2015, %v2013
        %v2266 = vpack.c.b16 %v2018, %v2016
        %v2267 = vpack.c.b16 %v2019, %v2017
        %v2268 = vpack.c.b16 %v2022, %v2020
        %v2269 = vpack.c.b16 %v2023, %v2021
        %v2270 = vpack.c.b16 %v2026, %v2024
        %v2271 = vpack.c.b16 %v2027, %v2025
        %v2272 = vpack.c.b16 %v2030, %v2028
        %v2273 = vpack.c.b16 %v2031, %v2029
        %v2274 = vpack.c.b16 %v2034, %v2032
        %v2275 = vpack.c.b16 %v2035, %v2033
        %v2276 = vpack.c.b16 %v2038, %v2036
        %v2277 = vpack.c.b16 %v2039, %v2037
        %v2278 = vpack.c.b16 %v2042, %v2040
        %v2279 = vpack.c.b16 %v2043, %v2041
        %v2280 = vpack.c.b16 %v2046, %v2044
        %v2281 = vpack.c.b16 %v2047, %v2045
        %v2282 = vpack.c.b16 %v2050, %v2048
        %v2283 = vpack.c.b16 %v2051, %v2049
        %v2284 = vpack.c.b16 %v2054, %v2052
        %v2285 = vpack.c.b16 %v2055, %v2053
        %v2286 = vpack.c.b16 %v2058, %v2056
        %v2287 = vpack.c.b16 %v2059, %v2057
        %v2288 = vpack.c.b16 %v2062, %v2060
        %v2289 = vpack.c.b16 %v2063, %v2061
        %v2290 = vpack.c.b16 %v2066, %v2064
        %v2291 = vpack.c.b16 %v2067, %v2065
        %v2292 = vpack.c.b16 %v2070, %v2068
        %v2293 = vpack.c.b16 %v2071, %v2069
        %v2294 = vpack.c.b16 %v2074, %v2072
        %v2295 = vpack.c.b16 %v2075, %v2073
        %v2296 = vpack.c.b16 %v2078, %v2076
        %v2297 = vpack.c.b16 %v2079, %v2077
        %v2298 = vpack.c.b16 %v2082, %v2080
        %v2299 = vpack.c.b16 %v2083, %v2081
        %v2300 = vpack.c.b16 %v2086, %v2084
        %v2301 = vpack.c.b16 %v2087, %v2085
        %v2302 = vpack.c.b16 %v2090, %v2088
        %v2303 = vpack.c.b16 %v2091, %v2089
        %v2304 = vpack.c.b16 %v2094, %v2092
        %v2305 = vpack.c.b16 %v2095, %v2093
        %v2306 = vpack.c.b16 %v2098, %v2096
        %v2307 = vpack.c.b16 %v2099, %v2097
        %v2308 = vpack.c.b16 %v2102, %v2100
        %v2309 = vpack.c.b16 %v2103, %v2101
        %v2310 = vpack.c.b16 %v2106, %v2104
        %v2311 = vpack.c.b16 %v2107, %v2105
        %v2312 = vpack.c.b16 %v2110, %v2108
        %v2313 = vpack.c.b16 %v2111, %v2109
        %v2314 = vpack.c.b16 %v2114, %v2112
        %v2315 = vpack.c.b16 %v2115, %v2113
        %v2316 = vpack.c.b16 %v2118, %v2116
        %v2317 = vpack.c.b16 %v2119, %v2117
        %v2318 = vpack.c.b16 %v2122, %v2120
        %v2319 = vpack.c.b16 %v2123, %v2121
        %v2320 = vpack.c.b16 %v2126, %v2124
        %v2321 = vpack.c.b16 %v2127, %v2125
        %v2322 = vpack.c.b16 %v2130, %v2128
        %v2323 = vpack.c.b16 %v2131, %v2129
        %v2324 = vpack.c.b16 %v2134, %v2132
        %v2325 = vpack.c.b16 %v2135, %v2133
        %v2326 = vpack.c.b16 %v2138, %v2136
        %v2327 = vpack.c.b16 %v2139, %v2137
        %v2328 = vpack.c.b16 %v2142, %v2140
        %v2329 = vpack.c.b16 %v2143, %v2141
        %v2330 = vpack.c.b16 %v2146, %v2144
        %v2331 = vpack.c.b16 %v2147, %v2145
        %v2332 = vpack.c.b16 %v2150, %v2148
        %v2333 = vpack.c.b16 %v2151, %v2149
        %v2334 = vpack.c.b16 %v2154, %v2152
        %v2335 = vpack.c.b16 %v2155, %v2153
        %v2336 = vpack.c.b16 %v2158, %v2156
        %v2337 = vpack.c.b16 %v2159, %v2157
        %v2338 = vpack.c.b16 %v2162, %v2160
        %v2339 = vpack.c.b16 %v2163, %v2161
        %v2340 = vpack.c.b16 %v2166, %v2164
        %v2341 = vpack.c.b16 %v2167, %v2165
        %v2342 = vpack.c.b16 %v2170, %v2168
        %v2343 = vpack.c.b16 %v2171, %v2169
        %v2344 = vpack.c.b16 %v2174, %v2172
        %v2345 = vpack.c.b16 %v2175, %v2173
        %v2346 = vpack.c.b16 %v2178, %v2176
        %v2347 = vpack.c.b16 %v2179, %v2177
        %v2348 = vpack.c.b16 %v2182, %v2180
        %v2349 = vpack.c.b16 %v2183, %v2181
        %v2350 = vpack.c.b16 %v2186, %v2184
        %v2351 = vpack.c.b16 %v2187, %v2185
        %v2352 = vpack.c.b16 %v2190, %v2188
        %v2353 = vpack.c.b16 %v2191, %v2189
        %v2354 = vpack.c.b16 %v2194, %v2192
        %v2355 = vpack.c.b16 %v2195, %v2193
        %v2356 = vpack.c.b16 %v2198, %v2196
        %v2357 = vpack.c.b16 %v2199, %v2197
        %v2358 = vpack.c.b16 %v2202, %v2200
        %v2359 = vpack.c.b16 %v2203, %v2201
        %v2360 = vpack.c.b16 %v2206, %v2204
        %v2361 = vpack.c.b16 %v2207, %v2205
        %v2362 = vpack.c.b16 %v2210, %v2208
        %v2363 = vpack.c.b16 %v2211, %v2209
        %v2364 = vpack.c.b16 %v2214, %v2212
        %v2365 = vpack.c.b16 %v2215, %v2213
        %v2366 = vpack.c.b16 %v2218, %v2216
        %v2367 = vpack.c.b16 %v2219, %v2217
        %v2368 = vpack.c.b16 %v2222, %v2220
        %v2369 = vpack.c.b16 %v2223, %v2221
        %v2370 = vpack.c.b16 %v2226, %v2224
        %v2371 = vpack.c.b16 %v2227, %v2225
        %v2372 = vpack.c.b16 %v2230, %v2228
        %v2373 = vpack.c.b16 %v2231, %v2229
        %v2374 = vpack.c.b16 %v2234, %v2232
        %v2375 = vpack.c.b16 %v2235, %v2233
        %v2376 = vpack.c.b16 %v2238, %v2236
        %v2377 = vpack.c.b16 %v2239, %v2237
        %v2378 = vpack.c.b16 %v2242, %v2240
        %v2379 = vpack.c.b16 %v2243, %v2241
        %v2380 = vpack.c.b16 %v2246, %v2244
        %v2381 = vpack.c.b16 %v2247, %v2245
        %v2382 = vpack.c.b16 %v2250, %v2248
        %v2383 = vpack.c.b16 %v2251, %v2249
        %v2384 = vpack.c.b16 %v2254, %v2252
        %v2385 = vpack.c.b16 %v2255, %v2253
        %v2386 = vpack.c.b16 %v2258, %v2256
        %v2387 = vpack.c.b16 %v2259, %v2257
        %2516 = vmatpush.bf16.msra.mxu0 %v2274
        %2517 = vmatpush.bf16.msra.mxu0 %v2272
        %2518 = vmatpush.bf16.msra.mxu0 %v2270
        %2519 = vmatpush.bf16.msra.mxu0 %v2268
        %2520 = vmatpush.bf16.msra.mxu0 %v2266
        %2521 = vmatpush.bf16.msra.mxu0 %v2264
        %2522 = vmatpush.bf16.msra.mxu0 %v2262
        %2523 = vmatpush.bf16.msra.mxu0 %v2260
        %2524 = vmatmul.bf16.gmra.mxu0 %v1620
        %v2525 = vpop.f32.mrf.mxu0
        %v2526 = vadd.f32 0.0, %v2525
        %v2527 = vpop.f32.mrf.mxu0
        %v2528 = vadd.f32 0.0, %v2527
        %2529 = vmatmul.bf16.gmra.mxu0 %v1628
        %v2530 = vpop.f32.mrf.mxu0
        %v2531 = vadd.f32 0.0, %v2530
        %v2532 = vpop.f32.mrf.mxu0
        %v2533 = vadd.f32 0.0, %v2532
        %2534 = vmatmul.bf16.gmra.mxu0 %v1636
        %v2535 = vpop.f32.mrf.mxu0
        %v2536 = vadd.f32 0.0, %v2535
        %v2537 = vpop.f32.mrf.mxu0
        %v2538 = vadd.f32 0.0, %v2537
        %2539 = vmatmul.bf16.gmra.mxu0 %v1644
        %v2540 = vpop.f32.mrf.mxu0
        %v2541 = vadd.f32 0.0, %v2540
        %v2542 = vpop.f32.mrf.mxu0
        %v2543 = vadd.f32 0.0, %v2542
        %2544 = vmatmul.bf16.gmra.mxu0 %v1652
        %v2545 = vpop.f32.mrf.mxu0
        %v2546 = vadd.f32 0.0, %v2545
        %v2547 = vpop.f32.mrf.mxu0
        %v2548 = vadd.f32 0.0, %v2547
        %2549 = vmatmul.bf16.gmra.mxu0 %v1660
        %v2550 = vpop.f32.mrf.mxu0
        %v2551 = vadd.f32 0.0, %v2550
        %v2552 = vpop.f32.mrf.mxu0
        %v2553 = vadd.f32 0.0, %v2552
        %2554 = vmatmul.bf16.gmra.mxu0 %v1668
        %v2555 = vpop.f32.mrf.mxu0
        %v2556 = vadd.f32 0.0, %v2555
        %v2557 = vpop.f32.mrf.mxu0
        %v2558 = vadd.f32 0.0, %v2557
        %2559 = vmatmul.bf16.gmra.mxu0 %v1676
        %v2560 = vpop.f32.mrf.mxu0
        %v2561 = vadd.f32 0.0, %v2560
        %v2562 = vpop.f32.mrf.mxu0
        %v2563 = vadd.f32 0.0, %v2562
        %2564 = vmatmul.bf16.gmra.mxu0 %v1684
        %v2565 = vpop.f32.mrf.mxu0
        %v2566 = vadd.f32 0.0, %v2565
        %v2567 = vpop.f32.mrf.mxu0
        %v2568 = vadd.f32 0.0, %v2567
        %2569 = vmatmul.bf16.gmra.mxu0 %v1692
        %v2570 = vpop.f32.mrf.mxu0
        %v2571 = vadd.f32 0.0, %v2570
        %v2572 = vpop.f32.mrf.mxu0
        %v2573 = vadd.f32 0.0, %v2572
        %2574 = vmatmul.bf16.gmra.mxu0 %v1700
        %v2575 = vpop.f32.mrf.mxu0
        %v2576 = vadd.f32 0.0, %v2575
        %v2577 = vpop.f32.mrf.mxu0
        %v2578 = vadd.f32 0.0, %v2577
        %2579 = vmatmul.bf16.gmra.mxu0 %v1708
        %v2580 = vpop.f32.mrf.mxu0
        %v2581 = vadd.f32 0.0, %v2580
        %v2582 = vpop.f32.mrf.mxu0
        %v2583 = vadd.f32 0.0, %v2582
        %2584 = vmatmul.bf16.gmra.mxu0 %v1716
        %v2585 = vpop.f32.mrf.mxu0
        %v2586 = vadd.f32 0.0, %v2585
        %v2587 = vpop.f32.mrf.mxu0
        %v2588 = vadd.f32 0.0, %v2587
        %2589 = vmatmul.bf16.gmra.mxu0 %v1724
        %v2590 = vpop.f32.mrf.mxu0
        %v2591 = vadd.f32 0.0, %v2590
        %v2592 = vpop.f32.mrf.mxu0
        %v2593 = vadd.f32 0.0, %v2592
        %2594 = vmatmul.bf16.gmra.mxu0 %v1732
        %v2595 = vpop.f32.mrf.mxu0
        %v2596 = vadd.f32 0.0, %v2595
        %v2597 = vpop.f32.mrf.mxu0
        %v2598 = vadd.f32 0.0, %v2597
        %2599 = vmatmul.bf16.gmra.mxu0 %v1740
        %v2600 = vpop.f32.mrf.mxu0
        %v2601 = vadd.f32 0.0, %v2600
        %v2602 = vpop.f32.mrf.mxu0
        %v2603 = vadd.f32 0.0, %v2602
        %2604 = vdwg.mxu0
        %2605 = vmatpush.bf16.msra.mxu0 %v2290
        %2606 = vmatpush.bf16.msra.mxu0 %v2288
        %2607 = vmatpush.bf16.msra.mxu0 %v2286
        %2608 = vmatpush.bf16.msra.mxu0 %v2284
        %2609 = vmatpush.bf16.msra.mxu0 %v2282
        %2610 = vmatpush.bf16.msra.mxu0 %v2280
        %2611 = vmatpush.bf16.msra.mxu0 %v2278
        %2612 = vmatpush.bf16.msra.mxu0 %v2276
        %2613 = vmatmul.bf16.gmra.mxu0 %v1621
        %v2614 = vpop.f32.mrf.mxu0
        %v2615 = vadd.f32 %v2526, %v2614
        %v2616 = vpop.f32.mrf.mxu0
        %v2617 = vadd.f32 %v2528, %v2616
        %2618 = vmatmul.bf16.gmra.mxu0 %v1629
        %v2619 = vpop.f32.mrf.mxu0
        %v2620 = vadd.f32 %v2531, %v2619
        %v2621 = vpop.f32.mrf.mxu0
        %v2622 = vadd.f32 %v2533, %v2621
        %2623 = vmatmul.bf16.gmra.mxu0 %v1637
        %v2624 = vpop.f32.mrf.mxu0
        %v2625 = vadd.f32 %v2536, %v2624
        %v2626 = vpop.f32.mrf.mxu0
        %v2627 = vadd.f32 %v2538, %v2626
        %2628 = vmatmul.bf16.gmra.mxu0 %v1645
        %v2629 = vpop.f32.mrf.mxu0
        %v2630 = vadd.f32 %v2541, %v2629
        %v2631 = vpop.f32.mrf.mxu0
        %v2632 = vadd.f32 %v2543, %v2631
        %2633 = vmatmul.bf16.gmra.mxu0 %v1653
        %v2634 = vpop.f32.mrf.mxu0
        %v2635 = vadd.f32 %v2546, %v2634
        %v2636 = vpop.f32.mrf.mxu0
        %v2637 = vadd.f32 %v2548, %v2636
        %2638 = vmatmul.bf16.gmra.mxu0 %v1661
        %v2639 = vpop.f32.mrf.mxu0
        %v2640 = vadd.f32 %v2551, %v2639
        %v2641 = vpop.f32.mrf.mxu0
        %v2642 = vadd.f32 %v2553, %v2641
        %2643 = vmatmul.bf16.gmra.mxu0 %v1669
        %v2644 = vpop.f32.mrf.mxu0
        %v2645 = vadd.f32 %v2556, %v2644
        %v2646 = vpop.f32.mrf.mxu0
        %v2647 = vadd.f32 %v2558, %v2646
        %2648 = vmatmul.bf16.gmra.mxu0 %v1677
        %v2649 = vpop.f32.mrf.mxu0
        %v2650 = vadd.f32 %v2561, %v2649
        %v2651 = vpop.f32.mrf.mxu0
        %v2652 = vadd.f32 %v2563, %v2651
        %2653 = vmatmul.bf16.gmra.mxu0 %v1685
        %v2654 = vpop.f32.mrf.mxu0
        %v2655 = vadd.f32 %v2566, %v2654
        %v2656 = vpop.f32.mrf.mxu0
        %v2657 = vadd.f32 %v2568, %v2656
        %2658 = vmatmul.bf16.gmra.mxu0 %v1693
        %v2659 = vpop.f32.mrf.mxu0
        %v2660 = vadd.f32 %v2571, %v2659
        %v2661 = vpop.f32.mrf.mxu0
        %v2662 = vadd.f32 %v2573, %v2661
        %2663 = vmatmul.bf16.gmra.mxu0 %v1701
        %v2664 = vpop.f32.mrf.mxu0
        %v2665 = vadd.f32 %v2576, %v2664
        %v2666 = vpop.f32.mrf.mxu0
        %v2667 = vadd.f32 %v2578, %v2666
        %2668 = vmatmul.bf16.gmra.mxu0 %v1709
        %v2669 = vpop.f32.mrf.mxu0
        %v2670 = vadd.f32 %v2581, %v2669
        %v2671 = vpop.f32.mrf.mxu0
        %v2672 = vadd.f32 %v2583, %v2671
        %2673 = vmatmul.bf16.gmra.mxu0 %v1717
        %v2674 = vpop.f32.mrf.mxu0
        %v2675 = vadd.f32 %v2586, %v2674
        %v2676 = vpop.f32.mrf.mxu0
        %v2677 = vadd.f32 %v2588, %v2676
        %2678 = vmatmul.bf16.gmra.mxu0 %v1725
        %v2679 = vpop.f32.mrf.mxu0
        %v2680 = vadd.f32 %v2591, %v2679
        %v2681 = vpop.f32.mrf.mxu0
        %v2682 = vadd.f32 %v2593, %v2681
        %2683 = vmatmul.bf16.gmra.mxu0 %v1733
        %v2684 = vpop.f32.mrf.mxu0
        %v2685 = vadd.f32 %v2596, %v2684
        %v2686 = vpop.f32.mrf.mxu0
        %v2687 = vadd.f32 %v2598, %v2686
        %2688 = vmatmul.bf16.gmra.mxu0 %v1741
        %v2689 = vpop.f32.mrf.mxu0
        %v2690 = vadd.f32 %v2601, %v2689
        %v2691 = vpop.f32.mrf.mxu0
        %v2692 = vadd.f32 %v2603, %v2691
        %2693 = vdwg.mxu0
        %2694 = vmatpush.bf16.msra.mxu0 %v2306
        %2695 = vmatpush.bf16.msra.mxu0 %v2304
        %2696 = vmatpush.bf16.msra.mxu0 %v2302
        %2697 = vmatpush.bf16.msra.mxu0 %v2300
        %2698 = vmatpush.bf16.msra.mxu0 %v2298
        %2699 = vmatpush.bf16.msra.mxu0 %v2296
        %2700 = vmatpush.bf16.msra.mxu0 %v2294
        %2701 = vmatpush.bf16.msra.mxu0 %v2292
        %2702 = vmatmul.bf16.gmra.mxu0 %v1622
        %v2703 = vpop.f32.mrf.mxu0
        %v2704 = vadd.f32 %v2615, %v2703
        %v2705 = vpop.f32.mrf.mxu0
        %v2706 = vadd.f32 %v2617, %v2705
        %2707 = vmatmul.bf16.gmra.mxu0 %v1630
        %v2708 = vpop.f32.mrf.mxu0
        %v2709 = vadd.f32 %v2620, %v2708
        %v2710 = vpop.f32.mrf.mxu0
        %v2711 = vadd.f32 %v2622, %v2710
        %2712 = vmatmul.bf16.gmra.mxu0 %v1638
        %v2713 = vpop.f32.mrf.mxu0
        %v2714 = vadd.f32 %v2625, %v2713
        %v2715 = vpop.f32.mrf.mxu0
        %v2716 = vadd.f32 %v2627, %v2715
        %2717 = vmatmul.bf16.gmra.mxu0 %v1646
        %v2718 = vpop.f32.mrf.mxu0
        %v2719 = vadd.f32 %v2630, %v2718
        %v2720 = vpop.f32.mrf.mxu0
        %v2721 = vadd.f32 %v2632, %v2720
        %2722 = vmatmul.bf16.gmra.mxu0 %v1654
        %v2723 = vpop.f32.mrf.mxu0
        %v2724 = vadd.f32 %v2635, %v2723
        %v2725 = vpop.f32.mrf.mxu0
        %v2726 = vadd.f32 %v2637, %v2725
        %2727 = vmatmul.bf16.gmra.mxu0 %v1662
        %v2728 = vpop.f32.mrf.mxu0
        %v2729 = vadd.f32 %v2640, %v2728
        %v2730 = vpop.f32.mrf.mxu0
        %v2731 = vadd.f32 %v2642, %v2730
        %2732 = vmatmul.bf16.gmra.mxu0 %v1670
        %v2733 = vpop.f32.mrf.mxu0
        %v2734 = vadd.f32 %v2645, %v2733
        %v2735 = vpop.f32.mrf.mxu0
        %v2736 = vadd.f32 %v2647, %v2735
        %2737 = vmatmul.bf16.gmra.mxu0 %v1678
        %v2738 = vpop.f32.mrf.mxu0
        %v2739 = vadd.f32 %v2650, %v2738
        %v2740 = vpop.f32.mrf.mxu0
        %v2741 = vadd.f32 %v2652, %v2740
        %2742 = vmatmul.bf16.gmra.mxu0 %v1686
        %v2743 = vpop.f32.mrf.mxu0
        %v2744 = vadd.f32 %v2655, %v2743
        %v2745 = vpop.f32.mrf.mxu0
        %v2746 = vadd.f32 %v2657, %v2745
        %2747 = vmatmul.bf16.gmra.mxu0 %v1694
        %v2748 = vpop.f32.mrf.mxu0
        %v2749 = vadd.f32 %v2660, %v2748
        %v2750 = vpop.f32.mrf.mxu0
        %v2751 = vadd.f32 %v2662, %v2750
        %2752 = vmatmul.bf16.gmra.mxu0 %v1702
        %v2753 = vpop.f32.mrf.mxu0
        %v2754 = vadd.f32 %v2665, %v2753
        %v2755 = vpop.f32.mrf.mxu0
        %v2756 = vadd.f32 %v2667, %v2755
        %2757 = vmatmul.bf16.gmra.mxu0 %v1710
        %v2758 = vpop.f32.mrf.mxu0
        %v2759 = vadd.f32 %v2670, %v2758
        %v2760 = vpop.f32.mrf.mxu0
        %v2761 = vadd.f32 %v2672, %v2760
        %2762 = vmatmul.bf16.gmra.mxu0 %v1718
        %v2763 = vpop.f32.mrf.mxu0
        %v2764 = vadd.f32 %v2675, %v2763
        %v2765 = vpop.f32.mrf.mxu0
        %v2766 = vadd.f32 %v2677, %v2765
        %2767 = vmatmul.bf16.gmra.mxu0 %v1726
        %v2768 = vpop.f32.mrf.mxu0
        %v2769 = vadd.f32 %v2680, %v2768
        %v2770 = vpop.f32.mrf.mxu0
        %v2771 = vadd.f32 %v2682, %v2770
        %2772 = vmatmul.bf16.gmra.mxu0 %v1734
        %v2773 = vpop.f32.mrf.mxu0
        %v2774 = vadd.f32 %v2685, %v2773
        %v2775 = vpop.f32.mrf.mxu0
        %v2776 = vadd.f32 %v2687, %v2775
        %2777 = vmatmul.bf16.gmra.mxu0 %v1742
        %v2778 = vpop.f32.mrf.mxu0
        %v2779 = vadd.f32 %v2690, %v2778
        %v2780 = vpop.f32.mrf.mxu0
        %v2781 = vadd.f32 %v2692, %v2780
        %2782 = vdwg.mxu0
        %2783 = vmatpush.bf16.msra.mxu0 %v2322
        %2784 = vmatpush.bf16.msra.mxu0 %v2320
        %2785 = vmatpush.bf16.msra.mxu0 %v2318
        %2786 = vmatpush.bf16.msra.mxu0 %v2316
        %2787 = vmatpush.bf16.msra.mxu0 %v2314
        %2788 = vmatpush.bf16.msra.mxu0 %v2312
        %2789 = vmatpush.bf16.msra.mxu0 %v2310
        %2790 = vmatpush.bf16.msra.mxu0 %v2308
        %2791 = vmatmul.bf16.gmra.mxu0 %v1623
        %v2792 = vpop.f32.mrf.mxu0
        %v2793 = vadd.f32 %v2704, %v2792
        %v2794 = vpop.f32.mrf.mxu0
        %v2795 = vadd.f32 %v2706, %v2794
        %2796 = vmatmul.bf16.gmra.mxu0 %v1631
        %v2797 = vpop.f32.mrf.mxu0
        %v2798 = vadd.f32 %v2709, %v2797
        %v2799 = vpop.f32.mrf.mxu0
        %v2800 = vadd.f32 %v2711, %v2799
        %2801 = vmatmul.bf16.gmra.mxu0 %v1639
        %v2802 = vpop.f32.mrf.mxu0
        %v2803 = vadd.f32 %v2714, %v2802
        %v2804 = vpop.f32.mrf.mxu0
        %v2805 = vadd.f32 %v2716, %v2804
        %2806 = vmatmul.bf16.gmra.mxu0 %v1647
        %v2807 = vpop.f32.mrf.mxu0
        %v2808 = vadd.f32 %v2719, %v2807
        %v2809 = vpop.f32.mrf.mxu0
        %v2810 = vadd.f32 %v2721, %v2809
        %2811 = vmatmul.bf16.gmra.mxu0 %v1655
        %v2812 = vpop.f32.mrf.mxu0
        %v2813 = vadd.f32 %v2724, %v2812
        %v2814 = vpop.f32.mrf.mxu0
        %v2815 = vadd.f32 %v2726, %v2814
        %2816 = vmatmul.bf16.gmra.mxu0 %v1663
        %v2817 = vpop.f32.mrf.mxu0
        %v2818 = vadd.f32 %v2729, %v2817
        %v2819 = vpop.f32.mrf.mxu0
        %v2820 = vadd.f32 %v2731, %v2819
        %2821 = vmatmul.bf16.gmra.mxu0 %v1671
        %v2822 = vpop.f32.mrf.mxu0
        %v2823 = vadd.f32 %v2734, %v2822
        %v2824 = vpop.f32.mrf.mxu0
        %v2825 = vadd.f32 %v2736, %v2824
        %2826 = vmatmul.bf16.gmra.mxu0 %v1679
        %v2827 = vpop.f32.mrf.mxu0
        %v2828 = vadd.f32 %v2739, %v2827
        %v2829 = vpop.f32.mrf.mxu0
        %v2830 = vadd.f32 %v2741, %v2829
        %2831 = vmatmul.bf16.gmra.mxu0 %v1687
        %v2832 = vpop.f32.mrf.mxu0
        %v2833 = vadd.f32 %v2744, %v2832
        %v2834 = vpop.f32.mrf.mxu0
        %v2835 = vadd.f32 %v2746, %v2834
        %2836 = vmatmul.bf16.gmra.mxu0 %v1695
        %v2837 = vpop.f32.mrf.mxu0
        %v2838 = vadd.f32 %v2749, %v2837
        %v2839 = vpop.f32.mrf.mxu0
        %v2840 = vadd.f32 %v2751, %v2839
        %2841 = vmatmul.bf16.gmra.mxu0 %v1703
        %v2842 = vpop.f32.mrf.mxu0
        %v2843 = vadd.f32 %v2754, %v2842
        %v2844 = vpop.f32.mrf.mxu0
        %v2845 = vadd.f32 %v2756, %v2844
        %2846 = vmatmul.bf16.gmra.mxu0 %v1711
        %v2847 = vpop.f32.mrf.mxu0
        %v2848 = vadd.f32 %v2759, %v2847
        %v2849 = vpop.f32.mrf.mxu0
        %v2850 = vadd.f32 %v2761, %v2849
        %2851 = vmatmul.bf16.gmra.mxu0 %v1719
        %v2852 = vpop.f32.mrf.mxu0
        %v2853 = vadd.f32 %v2764, %v2852
        %v2854 = vpop.f32.mrf.mxu0
        %v2855 = vadd.f32 %v2766, %v2854
        %2856 = vmatmul.bf16.gmra.mxu0 %v1727
        %v2857 = vpop.f32.mrf.mxu0
        %v2858 = vadd.f32 %v2769, %v2857
        %v2859 = vpop.f32.mrf.mxu0
        %v2860 = vadd.f32 %v2771, %v2859
        %2861 = vmatmul.bf16.gmra.mxu0 %v1735
        %v2862 = vpop.f32.mrf.mxu0
        %v2863 = vadd.f32 %v2774, %v2862
        %v2864 = vpop.f32.mrf.mxu0
        %v2865 = vadd.f32 %v2776, %v2864
        %2866 = vmatmul.bf16.gmra.mxu0 %v1743
        %v2867 = vpop.f32.mrf.mxu0
        %v2868 = vadd.f32 %v2779, %v2867
        %v2869 = vpop.f32.mrf.mxu0
        %v2870 = vadd.f32 %v2781, %v2869
        %2871 = vdwg.mxu0
        %2872 = vmatpush.bf16.msra.mxu0 %v2338
        %2873 = vmatpush.bf16.msra.mxu0 %v2336
        %2874 = vmatpush.bf16.msra.mxu0 %v2334
        %2875 = vmatpush.bf16.msra.mxu0 %v2332
        %2876 = vmatpush.bf16.msra.mxu0 %v2330
        %2877 = vmatpush.bf16.msra.mxu0 %v2328
        %2878 = vmatpush.bf16.msra.mxu0 %v2326
        %2879 = vmatpush.bf16.msra.mxu0 %v2324
        %2880 = vmatmul.bf16.gmra.mxu0 %v1624
        %v2881 = vpop.f32.mrf.mxu0
        %v2882 = vadd.f32 %v2793, %v2881
        %v2883 = vpop.f32.mrf.mxu0
        %v2884 = vadd.f32 %v2795, %v2883
        %2885 = vmatmul.bf16.gmra.mxu0 %v1632
        %v2886 = vpop.f32.mrf.mxu0
        %v2887 = vadd.f32 %v2798, %v2886
        %v2888 = vpop.f32.mrf.mxu0
        %v2889 = vadd.f32 %v2800, %v2888
        %2890 = vmatmul.bf16.gmra.mxu0 %v1640
        %v2891 = vpop.f32.mrf.mxu0
        %v2892 = vadd.f32 %v2803, %v2891
        %v2893 = vpop.f32.mrf.mxu0
        %v2894 = vadd.f32 %v2805, %v2893
        %2895 = vmatmul.bf16.gmra.mxu0 %v1648
        %v2896 = vpop.f32.mrf.mxu0
        %v2897 = vadd.f32 %v2808, %v2896
        %v2898 = vpop.f32.mrf.mxu0
        %v2899 = vadd.f32 %v2810, %v2898
        %2900 = vmatmul.bf16.gmra.mxu0 %v1656
        %v2901 = vpop.f32.mrf.mxu0
        %v2902 = vadd.f32 %v2813, %v2901
        %v2903 = vpop.f32.mrf.mxu0
        %v2904 = vadd.f32 %v2815, %v2903
        %2905 = vmatmul.bf16.gmra.mxu0 %v1664
        %v2906 = vpop.f32.mrf.mxu0
        %v2907 = vadd.f32 %v2818, %v2906
        %v2908 = vpop.f32.mrf.mxu0
        %v2909 = vadd.f32 %v2820, %v2908
        %2910 = vmatmul.bf16.gmra.mxu0 %v1672
        %v2911 = vpop.f32.mrf.mxu0
        %v2912 = vadd.f32 %v2823, %v2911
        %v2913 = vpop.f32.mrf.mxu0
        %v2914 = vadd.f32 %v2825, %v2913
        %2915 = vmatmul.bf16.gmra.mxu0 %v1680
        %v2916 = vpop.f32.mrf.mxu0
        %v2917 = vadd.f32 %v2828, %v2916
        %v2918 = vpop.f32.mrf.mxu0
        %v2919 = vadd.f32 %v2830, %v2918
        %2920 = vmatmul.bf16.gmra.mxu0 %v1688
        %v2921 = vpop.f32.mrf.mxu0
        %v2922 = vadd.f32 %v2833, %v2921
        %v2923 = vpop.f32.mrf.mxu0
        %v2924 = vadd.f32 %v2835, %v2923
        %2925 = vmatmul.bf16.gmra.mxu0 %v1696
        %v2926 = vpop.f32.mrf.mxu0
        %v2927 = vadd.f32 %v2838, %v2926
        %v2928 = vpop.f32.mrf.mxu0
        %v2929 = vadd.f32 %v2840, %v2928
        %2930 = vmatmul.bf16.gmra.mxu0 %v1704
        %v2931 = vpop.f32.mrf.mxu0
        %v2932 = vadd.f32 %v2843, %v2931
        %v2933 = vpop.f32.mrf.mxu0
        %v2934 = vadd.f32 %v2845, %v2933
        %2935 = vmatmul.bf16.gmra.mxu0 %v1712
        %v2936 = vpop.f32.mrf.mxu0
        %v2937 = vadd.f32 %v2848, %v2936
        %v2938 = vpop.f32.mrf.mxu0
        %v2939 = vadd.f32 %v2850, %v2938
        %2940 = vmatmul.bf16.gmra.mxu0 %v1720
        %v2941 = vpop.f32.mrf.mxu0
        %v2942 = vadd.f32 %v2853, %v2941
        %v2943 = vpop.f32.mrf.mxu0
        %v2944 = vadd.f32 %v2855, %v2943
        %2945 = vmatmul.bf16.gmra.mxu0 %v1728
        %v2946 = vpop.f32.mrf.mxu0
        %v2947 = vadd.f32 %v2858, %v2946
        %v2948 = vpop.f32.mrf.mxu0
        %v2949 = vadd.f32 %v2860, %v2948
        %2950 = vmatmul.bf16.gmra.mxu0 %v1736
        %v2951 = vpop.f32.mrf.mxu0
        %v2952 = vadd.f32 %v2863, %v2951
        %v2953 = vpop.f32.mrf.mxu0
        %v2954 = vadd.f32 %v2865, %v2953
        %2955 = vmatmul.bf16.gmra.mxu0 %v1744
        %v2956 = vpop.f32.mrf.mxu0
        %v2957 = vadd.f32 %v2868, %v2956
        %v2958 = vpop.f32.mrf.mxu0
        %v2959 = vadd.f32 %v2870, %v2958
        %2960 = vdwg.mxu0
        %2961 = vmatpush.bf16.msra.mxu0 %v2354
        %2962 = vmatpush.bf16.msra.mxu0 %v2352
        %2963 = vmatpush.bf16.msra.mxu0 %v2350
        %2964 = vmatpush.bf16.msra.mxu0 %v2348
        %2965 = vmatpush.bf16.msra.mxu0 %v2346
        %2966 = vmatpush.bf16.msra.mxu0 %v2344
        %2967 = vmatpush.bf16.msra.mxu0 %v2342
        %2968 = vmatpush.bf16.msra.mxu0 %v2340
        %2969 = vmatmul.bf16.gmra.mxu0 %v1625
        %v2970 = vpop.f32.mrf.mxu0
        %v2971 = vadd.f32 %v2882, %v2970
        %v2972 = vpop.f32.mrf.mxu0
        %v2973 = vadd.f32 %v2884, %v2972
        %2974 = vmatmul.bf16.gmra.mxu0 %v1633
        %v2975 = vpop.f32.mrf.mxu0
        %v2976 = vadd.f32 %v2887, %v2975
        %v2977 = vpop.f32.mrf.mxu0
        %v2978 = vadd.f32 %v2889, %v2977
        %2979 = vmatmul.bf16.gmra.mxu0 %v1641
        %v2980 = vpop.f32.mrf.mxu0
        %v2981 = vadd.f32 %v2892, %v2980
        %v2982 = vpop.f32.mrf.mxu0
        %v2983 = vadd.f32 %v2894, %v2982
        %2984 = vmatmul.bf16.gmra.mxu0 %v1649
        %v2985 = vpop.f32.mrf.mxu0
        %v2986 = vadd.f32 %v2897, %v2985
        %v2987 = vpop.f32.mrf.mxu0
        %v2988 = vadd.f32 %v2899, %v2987
        %2989 = vmatmul.bf16.gmra.mxu0 %v1657
        %v2990 = vpop.f32.mrf.mxu0
        %v2991 = vadd.f32 %v2902, %v2990
        %v2992 = vpop.f32.mrf.mxu0
        %v2993 = vadd.f32 %v2904, %v2992
        %2994 = vmatmul.bf16.gmra.mxu0 %v1665
        %v2995 = vpop.f32.mrf.mxu0
        %v2996 = vadd.f32 %v2907, %v2995
        %v2997 = vpop.f32.mrf.mxu0
        %v2998 = vadd.f32 %v2909, %v2997
        %2999 = vmatmul.bf16.gmra.mxu0 %v1673
        %v3000 = vpop.f32.mrf.mxu0
        %v3001 = vadd.f32 %v2912, %v3000
        %v3002 = vpop.f32.mrf.mxu0
        %v3003 = vadd.f32 %v2914, %v3002
        %3004 = vmatmul.bf16.gmra.mxu0 %v1681
        %v3005 = vpop.f32.mrf.mxu0
        %v3006 = vadd.f32 %v2917, %v3005
        %v3007 = vpop.f32.mrf.mxu0
        %v3008 = vadd.f32 %v2919, %v3007
        %3009 = vmatmul.bf16.gmra.mxu0 %v1689
        %v3010 = vpop.f32.mrf.mxu0
        %v3011 = vadd.f32 %v2922, %v3010
        %v3012 = vpop.f32.mrf.mxu0
        %v3013 = vadd.f32 %v2924, %v3012
        %3014 = vmatmul.bf16.gmra.mxu0 %v1697
        %v3015 = vpop.f32.mrf.mxu0
        %v3016 = vadd.f32 %v2927, %v3015
        %v3017 = vpop.f32.mrf.mxu0
        %v3018 = vadd.f32 %v2929, %v3017
        %3019 = vmatmul.bf16.gmra.mxu0 %v1705
        %v3020 = vpop.f32.mrf.mxu0
        %v3021 = vadd.f32 %v2932, %v3020
        %v3022 = vpop.f32.mrf.mxu0
        %v3023 = vadd.f32 %v2934, %v3022
        %3024 = vmatmul.bf16.gmra.mxu0 %v1713
        %v3025 = vpop.f32.mrf.mxu0
        %v3026 = vadd.f32 %v2937, %v3025
        %v3027 = vpop.f32.mrf.mxu0
        %v3028 = vadd.f32 %v2939, %v3027
        %3029 = vmatmul.bf16.gmra.mxu0 %v1721
        %v3030 = vpop.f32.mrf.mxu0
        %v3031 = vadd.f32 %v2942, %v3030
        %v3032 = vpop.f32.mrf.mxu0
        %v3033 = vadd.f32 %v2944, %v3032
        %3034 = vmatmul.bf16.gmra.mxu0 %v1729
        %v3035 = vpop.f32.mrf.mxu0
        %v3036 = vadd.f32 %v2947, %v3035
        %v3037 = vpop.f32.mrf.mxu0
        %v3038 = vadd.f32 %v2949, %v3037
        %3039 = vmatmul.bf16.gmra.mxu0 %v1737
        %v3040 = vpop.f32.mrf.mxu0
        %v3041 = vadd.f32 %v2952, %v3040
        %v3042 = vpop.f32.mrf.mxu0
        %v3043 = vadd.f32 %v2954, %v3042
        %3044 = vmatmul.bf16.gmra.mxu0 %v1745
        %v3045 = vpop.f32.mrf.mxu0
        %v3046 = vadd.f32 %v2957, %v3045
        %v3047 = vpop.f32.mrf.mxu0
        %v3048 = vadd.f32 %v2959, %v3047
        %3049 = vdwg.mxu0
        %3050 = vmatpush.bf16.msra.mxu0 %v2370
        %3051 = vmatpush.bf16.msra.mxu0 %v2368
        %3052 = vmatpush.bf16.msra.mxu0 %v2366
        %3053 = vmatpush.bf16.msra.mxu0 %v2364
        %3054 = vmatpush.bf16.msra.mxu0 %v2362
        %3055 = vmatpush.bf16.msra.mxu0 %v2360
        %3056 = vmatpush.bf16.msra.mxu0 %v2358
        %3057 = vmatpush.bf16.msra.mxu0 %v2356
        %3058 = vmatmul.bf16.gmra.mxu0 %v1626
        %v3059 = vpop.f32.mrf.mxu0
        %v3060 = vadd.f32 %v2971, %v3059
        %v3061 = vpop.f32.mrf.mxu0
        %v3062 = vadd.f32 %v2973, %v3061
        %3063 = vmatmul.bf16.gmra.mxu0 %v1634
        %v3064 = vpop.f32.mrf.mxu0
        %v3065 = vadd.f32 %v2976, %v3064
        %v3066 = vpop.f32.mrf.mxu0
        %v3067 = vadd.f32 %v2978, %v3066
        %3068 = vmatmul.bf16.gmra.mxu0 %v1642
        %v3069 = vpop.f32.mrf.mxu0
        %v3070 = vadd.f32 %v2981, %v3069
        %v3071 = vpop.f32.mrf.mxu0
        %v3072 = vadd.f32 %v2983, %v3071
        %3073 = vmatmul.bf16.gmra.mxu0 %v1650
        %v3074 = vpop.f32.mrf.mxu0
        %v3075 = vadd.f32 %v2986, %v3074
        %v3076 = vpop.f32.mrf.mxu0
        %v3077 = vadd.f32 %v2988, %v3076
        %3078 = vmatmul.bf16.gmra.mxu0 %v1658
        %v3079 = vpop.f32.mrf.mxu0
        %v3080 = vadd.f32 %v2991, %v3079
        %v3081 = vpop.f32.mrf.mxu0
        %v3082 = vadd.f32 %v2993, %v3081
        %3083 = vmatmul.bf16.gmra.mxu0 %v1666
        %v3084 = vpop.f32.mrf.mxu0
        %v3085 = vadd.f32 %v2996, %v3084
        %v3086 = vpop.f32.mrf.mxu0
        %v3087 = vadd.f32 %v2998, %v3086
        %3088 = vmatmul.bf16.gmra.mxu0 %v1674
        %v3089 = vpop.f32.mrf.mxu0
        %v3090 = vadd.f32 %v3001, %v3089
        %v3091 = vpop.f32.mrf.mxu0
        %v3092 = vadd.f32 %v3003, %v3091
        %3093 = vmatmul.bf16.gmra.mxu0 %v1682
        %v3094 = vpop.f32.mrf.mxu0
        %v3095 = vadd.f32 %v3006, %v3094
        %v3096 = vpop.f32.mrf.mxu0
        %v3097 = vadd.f32 %v3008, %v3096
        %3098 = vmatmul.bf16.gmra.mxu0 %v1690
        %v3099 = vpop.f32.mrf.mxu0
        %v3100 = vadd.f32 %v3011, %v3099
        %v3101 = vpop.f32.mrf.mxu0
        %v3102 = vadd.f32 %v3013, %v3101
        %3103 = vmatmul.bf16.gmra.mxu0 %v1698
        %v3104 = vpop.f32.mrf.mxu0
        %v3105 = vadd.f32 %v3016, %v3104
        %v3106 = vpop.f32.mrf.mxu0
        %v3107 = vadd.f32 %v3018, %v3106
        %3108 = vmatmul.bf16.gmra.mxu0 %v1706
        %v3109 = vpop.f32.mrf.mxu0
        %v3110 = vadd.f32 %v3021, %v3109
        %v3111 = vpop.f32.mrf.mxu0
        %v3112 = vadd.f32 %v3023, %v3111
        %3113 = vmatmul.bf16.gmra.mxu0 %v1714
        %v3114 = vpop.f32.mrf.mxu0
        %v3115 = vadd.f32 %v3026, %v3114
        %v3116 = vpop.f32.mrf.mxu0
        %v3117 = vadd.f32 %v3028, %v3116
        %3118 = vmatmul.bf16.gmra.mxu0 %v1722
        %v3119 = vpop.f32.mrf.mxu0
        %v3120 = vadd.f32 %v3031, %v3119
        %v3121 = vpop.f32.mrf.mxu0
        %v3122 = vadd.f32 %v3033, %v3121
        %3123 = vmatmul.bf16.gmra.mxu0 %v1730
        %v3124 = vpop.f32.mrf.mxu0
        %v3125 = vadd.f32 %v3036, %v3124
        %v3126 = vpop.f32.mrf.mxu0
        %v3127 = vadd.f32 %v3038, %v3126
        %3128 = vmatmul.bf16.gmra.mxu0 %v1738
        %v3129 = vpop.f32.mrf.mxu0
        %v3130 = vadd.f32 %v3041, %v3129
        %v3131 = vpop.f32.mrf.mxu0
        %v3132 = vadd.f32 %v3043, %v3131
        %3133 = vmatmul.bf16.gmra.mxu0 %v1746
        %v3134 = vpop.f32.mrf.mxu0
        %v3135 = vadd.f32 %v3046, %v3134
        %v3136 = vpop.f32.mrf.mxu0
        %v3137 = vadd.f32 %v3048, %v3136
        %3138 = vdwg.mxu0
        %3139 = vmatpush.bf16.msra.mxu0 %v2386
        %3140 = vmatpush.bf16.msra.mxu0 %v2384
        %3141 = vmatpush.bf16.msra.mxu0 %v2382
        %3142 = vmatpush.bf16.msra.mxu0 %v2380
        %3143 = vmatpush.bf16.msra.mxu0 %v2378
        %3144 = vmatpush.bf16.msra.mxu0 %v2376
        %3145 = vmatpush.bf16.msra.mxu0 %v2374
        %3146 = vmatpush.bf16.msra.mxu0 %v2372
        %3147 = vmatmul.bf16.gmra.mxu0 %v1627
        %v3148 = vpop.f32.mrf.mxu0
        %v3149 = vadd.f32 %v3060, %v3148
        %v3150 = vpop.f32.mrf.mxu0
        %v3151 = vadd.f32 %v3062, %v3150
        %3152 = vmatmul.bf16.gmra.mxu0 %v1635
        %v3153 = vpop.f32.mrf.mxu0
        %v3154 = vadd.f32 %v3065, %v3153
        %v3155 = vpop.f32.mrf.mxu0
        %v3156 = vadd.f32 %v3067, %v3155
        %3157 = vmatmul.bf16.gmra.mxu0 %v1643
        %v3158 = vpop.f32.mrf.mxu0
        %v3159 = vadd.f32 %v3070, %v3158
        %v3160 = vpop.f32.mrf.mxu0
        %v3161 = vadd.f32 %v3072, %v3160
        %3162 = vmatmul.bf16.gmra.mxu0 %v1651
        %v3163 = vpop.f32.mrf.mxu0
        %v3164 = vadd.f32 %v3075, %v3163
        %v3165 = vpop.f32.mrf.mxu0
        %v3166 = vadd.f32 %v3077, %v3165
        %3167 = vmatmul.bf16.gmra.mxu0 %v1659
        %v3168 = vpop.f32.mrf.mxu0
        %v3169 = vadd.f32 %v3080, %v3168
        %v3170 = vpop.f32.mrf.mxu0
        %v3171 = vadd.f32 %v3082, %v3170
        %3172 = vmatmul.bf16.gmra.mxu0 %v1667
        %v3173 = vpop.f32.mrf.mxu0
        %v3174 = vadd.f32 %v3085, %v3173
        %v3175 = vpop.f32.mrf.mxu0
        %v3176 = vadd.f32 %v3087, %v3175
        %3177 = vmatmul.bf16.gmra.mxu0 %v1675
        %v3178 = vpop.f32.mrf.mxu0
        %v3179 = vadd.f32 %v3090, %v3178
        %v3180 = vpop.f32.mrf.mxu0
        %v3181 = vadd.f32 %v3092, %v3180
        %3182 = vmatmul.bf16.gmra.mxu0 %v1683
        %v3183 = vpop.f32.mrf.mxu0
        %v3184 = vadd.f32 %v3095, %v3183
        %v3185 = vpop.f32.mrf.mxu0
        %v3186 = vadd.f32 %v3097, %v3185
        %3187 = vmatmul.bf16.gmra.mxu0 %v1691
        %v3188 = vpop.f32.mrf.mxu0
        %v3189 = vadd.f32 %v3100, %v3188
        %v3190 = vpop.f32.mrf.mxu0
        %v3191 = vadd.f32 %v3102, %v3190
        %3192 = vmatmul.bf16.gmra.mxu0 %v1699
        %v3193 = vpop.f32.mrf.mxu0
        %v3194 = vadd.f32 %v3105, %v3193
        %v3195 = vpop.f32.mrf.mxu0
        %v3196 = vadd.f32 %v3107, %v3195
        %3197 = vmatmul.bf16.gmra.mxu0 %v1707
        %v3198 = vpop.f32.mrf.mxu0
        %v3199 = vadd.f32 %v3110, %v3198
        %v3200 = vpop.f32.mrf.mxu0
        %v3201 = vadd.f32 %v3112, %v3200
        %3202 = vmatmul.bf16.gmra.mxu0 %v1715
        %v3203 = vpop.f32.mrf.mxu0
        %v3204 = vadd.f32 %v3115, %v3203
        %v3205 = vpop.f32.mrf.mxu0
        %v3206 = vadd.f32 %v3117, %v3205
        %3207 = vmatmul.bf16.gmra.mxu0 %v1723
        %v3208 = vpop.f32.mrf.mxu0
        %v3209 = vadd.f32 %v3120, %v3208
        %v3210 = vpop.f32.mrf.mxu0
        %v3211 = vadd.f32 %v3122, %v3210
        %3212 = vmatmul.bf16.gmra.mxu0 %v1731
        %v3213 = vpop.f32.mrf.mxu0
        %v3214 = vadd.f32 %v3125, %v3213
        %v3215 = vpop.f32.mrf.mxu0
        %v3216 = vadd.f32 %v3127, %v3215
        %3217 = vmatmul.bf16.gmra.mxu0 %v1739
        %v3218 = vpop.f32.mrf.mxu0
        %v3219 = vadd.f32 %v3130, %v3218
        %v3220 = vpop.f32.mrf.mxu0
        %v3221 = vadd.f32 %v3132, %v3220
        %3222 = vmatmul.bf16.gmra.mxu0 %v1747
        %v3223 = vpop.f32.mrf.mxu0
        %v3224 = vadd.f32 %v3135, %v3223
        %v3225 = vpop.f32.mrf.mxu0
        %v3226 = vadd.f32 %v3137, %v3225
        %3227 = vdwg.mxu0
        %3228 = vmatpush.bf16.msra.mxu0 %v2275
        %3229 = vmatpush.bf16.msra.mxu0 %v2273
        %3230 = vmatpush.bf16.msra.mxu0 %v2271
        %3231 = vmatpush.bf16.msra.mxu0 %v2269
        %3232 = vmatpush.bf16.msra.mxu0 %v2267
        %3233 = vmatpush.bf16.msra.mxu0 %v2265
        %3234 = vmatpush.bf16.msra.mxu0 %v2263
        %3235 = vmatpush.bf16.msra.mxu0 %v2261
        %3236 = vmatmul.bf16.gmra.mxu0 %v1620
        %v3237 = vpop.f32.mrf.mxu0
        %v3238 = vadd.f32 0.0, %v3237
        %v3239 = vpop.f32.mrf.mxu0
        %v3240 = vadd.f32 0.0, %v3239
        %3241 = vmatmul.bf16.gmra.mxu0 %v1628
        %v3242 = vpop.f32.mrf.mxu0
        %v3243 = vadd.f32 0.0, %v3242
        %v3244 = vpop.f32.mrf.mxu0
        %v3245 = vadd.f32 0.0, %v3244
        %3246 = vmatmul.bf16.gmra.mxu0 %v1636
        %v3247 = vpop.f32.mrf.mxu0
        %v3248 = vadd.f32 0.0, %v3247
        %v3249 = vpop.f32.mrf.mxu0
        %v3250 = vadd.f32 0.0, %v3249
        %3251 = vmatmul.bf16.gmra.mxu0 %v1644
        %v3252 = vpop.f32.mrf.mxu0
        %v3253 = vadd.f32 0.0, %v3252
        %v3254 = vpop.f32.mrf.mxu0
        %v3255 = vadd.f32 0.0, %v3254
        %3256 = vmatmul.bf16.gmra.mxu0 %v1652
        %v3257 = vpop.f32.mrf.mxu0
        %v3258 = vadd.f32 0.0, %v3257
        %v3259 = vpop.f32.mrf.mxu0
        %v3260 = vadd.f32 0.0, %v3259
        %3261 = vmatmul.bf16.gmra.mxu0 %v1660
        %v3262 = vpop.f32.mrf.mxu0
        %v3263 = vadd.f32 0.0, %v3262
        %v3264 = vpop.f32.mrf.mxu0
        %v3265 = vadd.f32 0.0, %v3264
        %3266 = vmatmul.bf16.gmra.mxu0 %v1668
        %v3267 = vpop.f32.mrf.mxu0
        %v3268 = vadd.f32 0.0, %v3267
        %v3269 = vpop.f32.mrf.mxu0
        %v3270 = vadd.f32 0.0, %v3269
        %3271 = vmatmul.bf16.gmra.mxu0 %v1676
        %v3272 = vpop.f32.mrf.mxu0
        %v3273 = vadd.f32 0.0, %v3272
        %v3274 = vpop.f32.mrf.mxu0
        %v3275 = vadd.f32 0.0, %v3274
        %3276 = vmatmul.bf16.gmra.mxu0 %v1684
        %v3277 = vpop.f32.mrf.mxu0
        %v3278 = vadd.f32 0.0, %v3277
        %v3279 = vpop.f32.mrf.mxu0
        %v3280 = vadd.f32 0.0, %v3279
        %3281 = vmatmul.bf16.gmra.mxu0 %v1692
        %v3282 = vpop.f32.mrf.mxu0
        %v3283 = vadd.f32 0.0, %v3282
        %v3284 = vpop.f32.mrf.mxu0
        %v3285 = vadd.f32 0.0, %v3284
        %3286 = vmatmul.bf16.gmra.mxu0 %v1700
        %v3287 = vpop.f32.mrf.mxu0
        %v3288 = vadd.f32 0.0, %v3287
        %v3289 = vpop.f32.mrf.mxu0
        %v3290 = vadd.f32 0.0, %v3289
        %3291 = vmatmul.bf16.gmra.mxu0 %v1708
        %v3292 = vpop.f32.mrf.mxu0
        %v3293 = vadd.f32 0.0, %v3292
        %v3294 = vpop.f32.mrf.mxu0
        %v3295 = vadd.f32 0.0, %v3294
        %3296 = vmatmul.bf16.gmra.mxu0 %v1716
        %v3297 = vpop.f32.mrf.mxu0
        %v3298 = vadd.f32 0.0, %v3297
        %v3299 = vpop.f32.mrf.mxu0
        %v3300 = vadd.f32 0.0, %v3299
        %3301 = vmatmul.bf16.gmra.mxu0 %v1724
        %v3302 = vpop.f32.mrf.mxu0
        %v3303 = vadd.f32 0.0, %v3302
        %v3304 = vpop.f32.mrf.mxu0
        %v3305 = vadd.f32 0.0, %v3304
        %3306 = vmatmul.bf16.gmra.mxu0 %v1732
        %v3307 = vpop.f32.mrf.mxu0
        %v3308 = vadd.f32 0.0, %v3307
        %v3309 = vpop.f32.mrf.mxu0
        %v3310 = vadd.f32 0.0, %v3309
        %3311 = vmatmul.bf16.gmra.mxu0 %v1740
        %v3312 = vpop.f32.mrf.mxu0
        %v3313 = vadd.f32 0.0, %v3312
        %v3314 = vpop.f32.mrf.mxu0
        %v3315 = vadd.f32 0.0, %v3314
        %3316 = vdwg.mxu0
        %3317 = vmatpush.bf16.msra.mxu0 %v2291
        %3318 = vmatpush.bf16.msra.mxu0 %v2289
        %3319 = vmatpush.bf16.msra.mxu0 %v2287
        %3320 = vmatpush.bf16.msra.mxu0 %v2285
        %3321 = vmatpush.bf16.msra.mxu0 %v2283
        %3322 = vmatpush.bf16.msra.mxu0 %v2281
        %3323 = vmatpush.bf16.msra.mxu0 %v2279
        %3324 = vmatpush.bf16.msra.mxu0 %v2277
        %3325 = vmatmul.bf16.gmra.mxu0 %v1621
        %v3326 = vpop.f32.mrf.mxu0
        %v3327 = vadd.f32 %v3238, %v3326
        %v3328 = vpop.f32.mrf.mxu0
        %v3329 = vadd.f32 %v3240, %v3328
        %3330 = vmatmul.bf16.gmra.mxu0 %v1629
        %v3331 = vpop.f32.mrf.mxu0
        %v3332 = vadd.f32 %v3243, %v3331
        %v3333 = vpop.f32.mrf.mxu0
        %v3334 = vadd.f32 %v3245, %v3333
        %3335 = vmatmul.bf16.gmra.mxu0 %v1637
        %v3336 = vpop.f32.mrf.mxu0
        %v3337 = vadd.f32 %v3248, %v3336
        %v3338 = vpop.f32.mrf.mxu0
        %v3339 = vadd.f32 %v3250, %v3338
        %3340 = vmatmul.bf16.gmra.mxu0 %v1645
        %v3341 = vpop.f32.mrf.mxu0
        %v3342 = vadd.f32 %v3253, %v3341
        %v3343 = vpop.f32.mrf.mxu0
        %v3344 = vadd.f32 %v3255, %v3343
        %3345 = vmatmul.bf16.gmra.mxu0 %v1653
        %v3346 = vpop.f32.mrf.mxu0
        %v3347 = vadd.f32 %v3258, %v3346
        %v3348 = vpop.f32.mrf.mxu0
        %v3349 = vadd.f32 %v3260, %v3348
        %3350 = vmatmul.bf16.gmra.mxu0 %v1661
        %v3351 = vpop.f32.mrf.mxu0
        %v3352 = vadd.f32 %v3263, %v3351
        %v3353 = vpop.f32.mrf.mxu0
        %v3354 = vadd.f32 %v3265, %v3353
        %3355 = vmatmul.bf16.gmra.mxu0 %v1669
        %v3356 = vpop.f32.mrf.mxu0
        %v3357 = vadd.f32 %v3268, %v3356
        %v3358 = vpop.f32.mrf.mxu0
        %v3359 = vadd.f32 %v3270, %v3358
        %3360 = vmatmul.bf16.gmra.mxu0 %v1677
        %v3361 = vpop.f32.mrf.mxu0
        %v3362 = vadd.f32 %v3273, %v3361
        %v3363 = vpop.f32.mrf.mxu0
        %v3364 = vadd.f32 %v3275, %v3363
        %3365 = vmatmul.bf16.gmra.mxu0 %v1685
        %v3366 = vpop.f32.mrf.mxu0
        %v3367 = vadd.f32 %v3278, %v3366
        %v3368 = vpop.f32.mrf.mxu0
        %v3369 = vadd.f32 %v3280, %v3368
        %3370 = vmatmul.bf16.gmra.mxu0 %v1693
        %v3371 = vpop.f32.mrf.mxu0
        %v3372 = vadd.f32 %v3283, %v3371
        %v3373 = vpop.f32.mrf.mxu0
        %v3374 = vadd.f32 %v3285, %v3373
        %3375 = vmatmul.bf16.gmra.mxu0 %v1701
        %v3376 = vpop.f32.mrf.mxu0
        %v3377 = vadd.f32 %v3288, %v3376
        %v3378 = vpop.f32.mrf.mxu0
        %v3379 = vadd.f32 %v3290, %v3378
        %3380 = vmatmul.bf16.gmra.mxu0 %v1709
        %v3381 = vpop.f32.mrf.mxu0
        %v3382 = vadd.f32 %v3293, %v3381
        %v3383 = vpop.f32.mrf.mxu0
        %v3384 = vadd.f32 %v3295, %v3383
        %3385 = vmatmul.bf16.gmra.mxu0 %v1717
        %v3386 = vpop.f32.mrf.mxu0
        %v3387 = vadd.f32 %v3298, %v3386
        %v3388 = vpop.f32.mrf.mxu0
        %v3389 = vadd.f32 %v3300, %v3388
        %3390 = vmatmul.bf16.gmra.mxu0 %v1725
        %v3391 = vpop.f32.mrf.mxu0
        %v3392 = vadd.f32 %v3303, %v3391
        %v3393 = vpop.f32.mrf.mxu0
        %v3394 = vadd.f32 %v3305, %v3393
        %3395 = vmatmul.bf16.gmra.mxu0 %v1733
        %v3396 = vpop.f32.mrf.mxu0
        %v3397 = vadd.f32 %v3308, %v3396
        %v3398 = vpop.f32.mrf.mxu0
        %v3399 = vadd.f32 %v3310, %v3398
        %3400 = vmatmul.bf16.gmra.mxu0 %v1741
        %v3401 = vpop.f32.mrf.mxu0
        %v3402 = vadd.f32 %v3313, %v3401
        %v3403 = vpop.f32.mrf.mxu0
        %v3404 = vadd.f32 %v3315, %v3403
        %3405 = vdwg.mxu0
        %3406 = vmatpush.bf16.msra.mxu0 %v2307
        %3407 = vmatpush.bf16.msra.mxu0 %v2305
        %3408 = vmatpush.bf16.msra.mxu0 %v2303
        %3409 = vmatpush.bf16.msra.mxu0 %v2301
        %3410 = vmatpush.bf16.msra.mxu0 %v2299
        %3411 = vmatpush.bf16.msra.mxu0 %v2297
        %3412 = vmatpush.bf16.msra.mxu0 %v2295
        %3413 = vmatpush.bf16.msra.mxu0 %v2293
        %3414 = vmatmul.bf16.gmra.mxu0 %v1622
        %v3415 = vpop.f32.mrf.mxu0
        %v3416 = vadd.f32 %v3327, %v3415
        %v3417 = vpop.f32.mrf.mxu0
        %v3418 = vadd.f32 %v3329, %v3417
        %3419 = vmatmul.bf16.gmra.mxu0 %v1630
        %v3420 = vpop.f32.mrf.mxu0
        %v3421 = vadd.f32 %v3332, %v3420
        %v3422 = vpop.f32.mrf.mxu0
        %v3423 = vadd.f32 %v3334, %v3422
        %3424 = vmatmul.bf16.gmra.mxu0 %v1638
        %v3425 = vpop.f32.mrf.mxu0
        %v3426 = vadd.f32 %v3337, %v3425
        %v3427 = vpop.f32.mrf.mxu0
        %v3428 = vadd.f32 %v3339, %v3427
        %3429 = vmatmul.bf16.gmra.mxu0 %v1646
        %v3430 = vpop.f32.mrf.mxu0
        %v3431 = vadd.f32 %v3342, %v3430
        %v3432 = vpop.f32.mrf.mxu0
        %v3433 = vadd.f32 %v3344, %v3432
        %3434 = vmatmul.bf16.gmra.mxu0 %v1654
        %v3435 = vpop.f32.mrf.mxu0
        %v3436 = vadd.f32 %v3347, %v3435
        %v3437 = vpop.f32.mrf.mxu0
        %v3438 = vadd.f32 %v3349, %v3437
        %3439 = vmatmul.bf16.gmra.mxu0 %v1662
        %v3440 = vpop.f32.mrf.mxu0
        %v3441 = vadd.f32 %v3352, %v3440
        %v3442 = vpop.f32.mrf.mxu0
        %v3443 = vadd.f32 %v3354, %v3442
        %3444 = vmatmul.bf16.gmra.mxu0 %v1670
        %v3445 = vpop.f32.mrf.mxu0
        %v3446 = vadd.f32 %v3357, %v3445
        %v3447 = vpop.f32.mrf.mxu0
        %v3448 = vadd.f32 %v3359, %v3447
        %3449 = vmatmul.bf16.gmra.mxu0 %v1678
        %v3450 = vpop.f32.mrf.mxu0
        %v3451 = vadd.f32 %v3362, %v3450
        %v3452 = vpop.f32.mrf.mxu0
        %v3453 = vadd.f32 %v3364, %v3452
        %3454 = vmatmul.bf16.gmra.mxu0 %v1686
        %v3455 = vpop.f32.mrf.mxu0
        %v3456 = vadd.f32 %v3367, %v3455
        %v3457 = vpop.f32.mrf.mxu0
        %v3458 = vadd.f32 %v3369, %v3457
        %3459 = vmatmul.bf16.gmra.mxu0 %v1694
        %v3460 = vpop.f32.mrf.mxu0
        %v3461 = vadd.f32 %v3372, %v3460
        %v3462 = vpop.f32.mrf.mxu0
        %v3463 = vadd.f32 %v3374, %v3462
        %3464 = vmatmul.bf16.gmra.mxu0 %v1702
        %v3465 = vpop.f32.mrf.mxu0
        %v3466 = vadd.f32 %v3377, %v3465
        %v3467 = vpop.f32.mrf.mxu0
        %v3468 = vadd.f32 %v3379, %v3467
        %3469 = vmatmul.bf16.gmra.mxu0 %v1710
        %v3470 = vpop.f32.mrf.mxu0
        %v3471 = vadd.f32 %v3382, %v3470
        %v3472 = vpop.f32.mrf.mxu0
        %v3473 = vadd.f32 %v3384, %v3472
        %3474 = vmatmul.bf16.gmra.mxu0 %v1718
        %v3475 = vpop.f32.mrf.mxu0
        %v3476 = vadd.f32 %v3387, %v3475
        %v3477 = vpop.f32.mrf.mxu0
        %v3478 = vadd.f32 %v3389, %v3477
        %3479 = vmatmul.bf16.gmra.mxu0 %v1726
        %v3480 = vpop.f32.mrf.mxu0
        %v3481 = vadd.f32 %v3392, %v3480
        %v3482 = vpop.f32.mrf.mxu0
        %v3483 = vadd.f32 %v3394, %v3482
        %3484 = vmatmul.bf16.gmra.mxu0 %v1734
        %v3485 = vpop.f32.mrf.mxu0
        %v3486 = vadd.f32 %v3397, %v3485
        %v3487 = vpop.f32.mrf.mxu0
        %v3488 = vadd.f32 %v3399, %v3487
        %3489 = vmatmul.bf16.gmra.mxu0 %v1742
        %v3490 = vpop.f32.mrf.mxu0
        %v3491 = vadd.f32 %v3402, %v3490
        %v3492 = vpop.f32.mrf.mxu0
        %v3493 = vadd.f32 %v3404, %v3492
        %3494 = vdwg.mxu0
        %3495 = vmatpush.bf16.msra.mxu0 %v2323
        %3496 = vmatpush.bf16.msra.mxu0 %v2321
        %3497 = vmatpush.bf16.msra.mxu0 %v2319
        %3498 = vmatpush.bf16.msra.mxu0 %v2317
        %3499 = vmatpush.bf16.msra.mxu0 %v2315
        %3500 = vmatpush.bf16.msra.mxu0 %v2313
        %3501 = vmatpush.bf16.msra.mxu0 %v2311
        %3502 = vmatpush.bf16.msra.mxu0 %v2309
        %3503 = vmatmul.bf16.gmra.mxu0 %v1623
        %v3504 = vpop.f32.mrf.mxu0
        %v3505 = vadd.f32 %v3416, %v3504
        %v3506 = vpop.f32.mrf.mxu0
        %v3507 = vadd.f32 %v3418, %v3506
        %3508 = vmatmul.bf16.gmra.mxu0 %v1631
        %v3509 = vpop.f32.mrf.mxu0
        %v3510 = vadd.f32 %v3421, %v3509
        %v3511 = vpop.f32.mrf.mxu0
        %v3512 = vadd.f32 %v3423, %v3511
        %3513 = vmatmul.bf16.gmra.mxu0 %v1639
        %v3514 = vpop.f32.mrf.mxu0
        %v3515 = vadd.f32 %v3426, %v3514
        %v3516 = vpop.f32.mrf.mxu0
        %v3517 = vadd.f32 %v3428, %v3516
        %3518 = vmatmul.bf16.gmra.mxu0 %v1647
        %v3519 = vpop.f32.mrf.mxu0
        %v3520 = vadd.f32 %v3431, %v3519
        %v3521 = vpop.f32.mrf.mxu0
        %v3522 = vadd.f32 %v3433, %v3521
        %3523 = vmatmul.bf16.gmra.mxu0 %v1655
        %v3524 = vpop.f32.mrf.mxu0
        %v3525 = vadd.f32 %v3436, %v3524
        %v3526 = vpop.f32.mrf.mxu0
        %v3527 = vadd.f32 %v3438, %v3526
        %3528 = vmatmul.bf16.gmra.mxu0 %v1663
        %v3529 = vpop.f32.mrf.mxu0
        %v3530 = vadd.f32 %v3441, %v3529
        %v3531 = vpop.f32.mrf.mxu0
        %v3532 = vadd.f32 %v3443, %v3531
        %3533 = vmatmul.bf16.gmra.mxu0 %v1671
        %v3534 = vpop.f32.mrf.mxu0
        %v3535 = vadd.f32 %v3446, %v3534
        %v3536 = vpop.f32.mrf.mxu0
        %v3537 = vadd.f32 %v3448, %v3536
        %3538 = vmatmul.bf16.gmra.mxu0 %v1679
        %v3539 = vpop.f32.mrf.mxu0
        %v3540 = vadd.f32 %v3451, %v3539
        %v3541 = vpop.f32.mrf.mxu0
        %v3542 = vadd.f32 %v3453, %v3541
        %3543 = vmatmul.bf16.gmra.mxu0 %v1687
        %v3544 = vpop.f32.mrf.mxu0
        %v3545 = vadd.f32 %v3456, %v3544
        %v3546 = vpop.f32.mrf.mxu0
        %v3547 = vadd.f32 %v3458, %v3546
        %3548 = vmatmul.bf16.gmra.mxu0 %v1695
        %v3549 = vpop.f32.mrf.mxu0
        %v3550 = vadd.f32 %v3461, %v3549
        %v3551 = vpop.f32.mrf.mxu0
        %v3552 = vadd.f32 %v3463, %v3551
        %3553 = vmatmul.bf16.gmra.mxu0 %v1703
        %v3554 = vpop.f32.mrf.mxu0
        %v3555 = vadd.f32 %v3466, %v3554
        %v3556 = vpop.f32.mrf.mxu0
        %v3557 = vadd.f32 %v3468, %v3556
        %3558 = vmatmul.bf16.gmra.mxu0 %v1711
        %v3559 = vpop.f32.mrf.mxu0
        %v3560 = vadd.f32 %v3471, %v3559
        %v3561 = vpop.f32.mrf.mxu0
        %v3562 = vadd.f32 %v3473, %v3561
        %3563 = vmatmul.bf16.gmra.mxu0 %v1719
        %v3564 = vpop.f32.mrf.mxu0
        %v3565 = vadd.f32 %v3476, %v3564
        %v3566 = vpop.f32.mrf.mxu0
        %v3567 = vadd.f32 %v3478, %v3566
        %3568 = vmatmul.bf16.gmra.mxu0 %v1727
        %v3569 = vpop.f32.mrf.mxu0
        %v3570 = vadd.f32 %v3481, %v3569
        %v3571 = vpop.f32.mrf.mxu0
        %v3572 = vadd.f32 %v3483, %v3571
        %3573 = vmatmul.bf16.gmra.mxu0 %v1735
        %v3574 = vpop.f32.mrf.mxu0
        %v3575 = vadd.f32 %v3486, %v3574
        %v3576 = vpop.f32.mrf.mxu0
        %v3577 = vadd.f32 %v3488, %v3576
        %3578 = vmatmul.bf16.gmra.mxu0 %v1743
        %v3579 = vpop.f32.mrf.mxu0
        %v3580 = vadd.f32 %v3491, %v3579
        %v3581 = vpop.f32.mrf.mxu0
        %v3582 = vadd.f32 %v3493, %v3581
        %3583 = vdwg.mxu0
        %3584 = vmatpush.bf16.msra.mxu0 %v2339
        %3585 = vmatpush.bf16.msra.mxu0 %v2337
        %3586 = vmatpush.bf16.msra.mxu0 %v2335
        %3587 = vmatpush.bf16.msra.mxu0 %v2333
        %3588 = vmatpush.bf16.msra.mxu0 %v2331
        %3589 = vmatpush.bf16.msra.mxu0 %v2329
        %3590 = vmatpush.bf16.msra.mxu0 %v2327
        %3591 = vmatpush.bf16.msra.mxu0 %v2325
        %3592 = vmatmul.bf16.gmra.mxu0 %v1624
        %v3593 = vpop.f32.mrf.mxu0
        %v3594 = vadd.f32 %v3505, %v3593
        %v3595 = vpop.f32.mrf.mxu0
        %v3596 = vadd.f32 %v3507, %v3595
        %3597 = vmatmul.bf16.gmra.mxu0 %v1632
        %v3598 = vpop.f32.mrf.mxu0
        %v3599 = vadd.f32 %v3510, %v3598
        %v3600 = vpop.f32.mrf.mxu0
        %v3601 = vadd.f32 %v3512, %v3600
        %3602 = vmatmul.bf16.gmra.mxu0 %v1640
        %v3603 = vpop.f32.mrf.mxu0
        %v3604 = vadd.f32 %v3515, %v3603
        %v3605 = vpop.f32.mrf.mxu0
        %v3606 = vadd.f32 %v3517, %v3605
        %3607 = vmatmul.bf16.gmra.mxu0 %v1648
        %v3608 = vpop.f32.mrf.mxu0
        %v3609 = vadd.f32 %v3520, %v3608
        %v3610 = vpop.f32.mrf.mxu0
        %v3611 = vadd.f32 %v3522, %v3610
        %3612 = vmatmul.bf16.gmra.mxu0 %v1656
        %v3613 = vpop.f32.mrf.mxu0
        %v3614 = vadd.f32 %v3525, %v3613
        %v3615 = vpop.f32.mrf.mxu0
        %v3616 = vadd.f32 %v3527, %v3615
        %3617 = vmatmul.bf16.gmra.mxu0 %v1664
        %v3618 = vpop.f32.mrf.mxu0
        %v3619 = vadd.f32 %v3530, %v3618
        %v3620 = vpop.f32.mrf.mxu0
        %v3621 = vadd.f32 %v3532, %v3620
        %3622 = vmatmul.bf16.gmra.mxu0 %v1672
        %v3623 = vpop.f32.mrf.mxu0
        %v3624 = vadd.f32 %v3535, %v3623
        %v3625 = vpop.f32.mrf.mxu0
        %v3626 = vadd.f32 %v3537, %v3625
        %3627 = vmatmul.bf16.gmra.mxu0 %v1680
        %v3628 = vpop.f32.mrf.mxu0
        %v3629 = vadd.f32 %v3540, %v3628
        %v3630 = vpop.f32.mrf.mxu0
        %v3631 = vadd.f32 %v3542, %v3630
        %3632 = vmatmul.bf16.gmra.mxu0 %v1688
        %v3633 = vpop.f32.mrf.mxu0
        %v3634 = vadd.f32 %v3545, %v3633
        %v3635 = vpop.f32.mrf.mxu0
        %v3636 = vadd.f32 %v3547, %v3635
        %3637 = vmatmul.bf16.gmra.mxu0 %v1696
        %v3638 = vpop.f32.mrf.mxu0
        %v3639 = vadd.f32 %v3550, %v3638
        %v3640 = vpop.f32.mrf.mxu0
        %v3641 = vadd.f32 %v3552, %v3640
        %3642 = vmatmul.bf16.gmra.mxu0 %v1704
        %v3643 = vpop.f32.mrf.mxu0
        %v3644 = vadd.f32 %v3555, %v3643
        %v3645 = vpop.f32.mrf.mxu0
        %v3646 = vadd.f32 %v3557, %v3645
        %3647 = vmatmul.bf16.gmra.mxu0 %v1712
        %v3648 = vpop.f32.mrf.mxu0
        %v3649 = vadd.f32 %v3560, %v3648
        %v3650 = vpop.f32.mrf.mxu0
        %v3651 = vadd.f32 %v3562, %v3650
        %3652 = vmatmul.bf16.gmra.mxu0 %v1720
        %v3653 = vpop.f32.mrf.mxu0
        %v3654 = vadd.f32 %v3565, %v3653
        %v3655 = vpop.f32.mrf.mxu0
        %v3656 = vadd.f32 %v3567, %v3655
        %3657 = vmatmul.bf16.gmra.mxu0 %v1728
        %v3658 = vpop.f32.mrf.mxu0
        %v3659 = vadd.f32 %v3570, %v3658
        %v3660 = vpop.f32.mrf.mxu0
        %v3661 = vadd.f32 %v3572, %v3660
        %3662 = vmatmul.bf16.gmra.mxu0 %v1736
        %v3663 = vpop.f32.mrf.mxu0
        %v3664 = vadd.f32 %v3575, %v3663
        %v3665 = vpop.f32.mrf.mxu0
        %v3666 = vadd.f32 %v3577, %v3665
        %3667 = vmatmul.bf16.gmra.mxu0 %v1744
        %v3668 = vpop.f32.mrf.mxu0
        %v3669 = vadd.f32 %v3580, %v3668
        %v3670 = vpop.f32.mrf.mxu0
        %v3671 = vadd.f32 %v3582, %v3670
        %3672 = vdwg.mxu0
        %3673 = vmatpush.bf16.msra.mxu0 %v2355
        %3674 = vmatpush.bf16.msra.mxu0 %v2353
        %3675 = vmatpush.bf16.msra.mxu0 %v2351
        %3676 = vmatpush.bf16.msra.mxu0 %v2349
        %3677 = vmatpush.bf16.msra.mxu0 %v2347
        %3678 = vmatpush.bf16.msra.mxu0 %v2345
        %3679 = vmatpush.bf16.msra.mxu0 %v2343
        %3680 = vmatpush.bf16.msra.mxu0 %v2341
        %3681 = vmatmul.bf16.gmra.mxu0 %v1625
        %v3682 = vpop.f32.mrf.mxu0
        %v3683 = vadd.f32 %v3594, %v3682
        %v3684 = vpop.f32.mrf.mxu0
        %v3685 = vadd.f32 %v3596, %v3684
        %3686 = vmatmul.bf16.gmra.mxu0 %v1633
        %v3687 = vpop.f32.mrf.mxu0
        %v3688 = vadd.f32 %v3599, %v3687
        %v3689 = vpop.f32.mrf.mxu0
        %v3690 = vadd.f32 %v3601, %v3689
        %3691 = vmatmul.bf16.gmra.mxu0 %v1641
        %v3692 = vpop.f32.mrf.mxu0
        %v3693 = vadd.f32 %v3604, %v3692
        %v3694 = vpop.f32.mrf.mxu0
        %v3695 = vadd.f32 %v3606, %v3694
        %3696 = vmatmul.bf16.gmra.mxu0 %v1649
        %v3697 = vpop.f32.mrf.mxu0
        %v3698 = vadd.f32 %v3609, %v3697
        %v3699 = vpop.f32.mrf.mxu0
        %v3700 = vadd.f32 %v3611, %v3699
        %3701 = vmatmul.bf16.gmra.mxu0 %v1657
        %v3702 = vpop.f32.mrf.mxu0
        %v3703 = vadd.f32 %v3614, %v3702
        %v3704 = vpop.f32.mrf.mxu0
        %v3705 = vadd.f32 %v3616, %v3704
        %3706 = vmatmul.bf16.gmra.mxu0 %v1665
        %v3707 = vpop.f32.mrf.mxu0
        %v3708 = vadd.f32 %v3619, %v3707
        %v3709 = vpop.f32.mrf.mxu0
        %v3710 = vadd.f32 %v3621, %v3709
        %3711 = vmatmul.bf16.gmra.mxu0 %v1673
        %v3712 = vpop.f32.mrf.mxu0
        %v3713 = vadd.f32 %v3624, %v3712
        %v3714 = vpop.f32.mrf.mxu0
        %v3715 = vadd.f32 %v3626, %v3714
        %3716 = vmatmul.bf16.gmra.mxu0 %v1681
        %v3717 = vpop.f32.mrf.mxu0
        %v3718 = vadd.f32 %v3629, %v3717
        %v3719 = vpop.f32.mrf.mxu0
        %v3720 = vadd.f32 %v3631, %v3719
        %3721 = vmatmul.bf16.gmra.mxu0 %v1689
        %v3722 = vpop.f32.mrf.mxu0
        %v3723 = vadd.f32 %v3634, %v3722
        %v3724 = vpop.f32.mrf.mxu0
        %v3725 = vadd.f32 %v3636, %v3724
        %3726 = vmatmul.bf16.gmra.mxu0 %v1697
        %v3727 = vpop.f32.mrf.mxu0
        %v3728 = vadd.f32 %v3639, %v3727
        %v3729 = vpop.f32.mrf.mxu0
        %v3730 = vadd.f32 %v3641, %v3729
        %3731 = vmatmul.bf16.gmra.mxu0 %v1705
        %v3732 = vpop.f32.mrf.mxu0
        %v3733 = vadd.f32 %v3644, %v3732
        %v3734 = vpop.f32.mrf.mxu0
        %v3735 = vadd.f32 %v3646, %v3734
        %3736 = vmatmul.bf16.gmra.mxu0 %v1713
        %v3737 = vpop.f32.mrf.mxu0
        %v3738 = vadd.f32 %v3649, %v3737
        %v3739 = vpop.f32.mrf.mxu0
        %v3740 = vadd.f32 %v3651, %v3739
        %3741 = vmatmul.bf16.gmra.mxu0 %v1721
        %v3742 = vpop.f32.mrf.mxu0
        %v3743 = vadd.f32 %v3654, %v3742
        %v3744 = vpop.f32.mrf.mxu0
        %v3745 = vadd.f32 %v3656, %v3744
        %3746 = vmatmul.bf16.gmra.mxu0 %v1729
        %v3747 = vpop.f32.mrf.mxu0
        %v3748 = vadd.f32 %v3659, %v3747
        %v3749 = vpop.f32.mrf.mxu0
        %v3750 = vadd.f32 %v3661, %v3749
        %3751 = vmatmul.bf16.gmra.mxu0 %v1737
        %v3752 = vpop.f32.mrf.mxu0
        %v3753 = vadd.f32 %v3664, %v3752
        %v3754 = vpop.f32.mrf.mxu0
        %v3755 = vadd.f32 %v3666, %v3754
        %3756 = vmatmul.bf16.gmra.mxu0 %v1745
        %v3757 = vpop.f32.mrf.mxu0
        %v3758 = vadd.f32 %v3669, %v3757
        %v3759 = vpop.f32.mrf.mxu0
        %v3760 = vadd.f32 %v3671, %v3759
        %3761 = vdwg.mxu0
        %3762 = vmatpush.bf16.msra.mxu0 %v2371
        %3763 = vmatpush.bf16.msra.mxu0 %v2369
        %3764 = vmatpush.bf16.msra.mxu0 %v2367
        %3765 = vmatpush.bf16.msra.mxu0 %v2365
        %3766 = vmatpush.bf16.msra.mxu0 %v2363
        %3767 = vmatpush.bf16.msra.mxu0 %v2361
        %3768 = vmatpush.bf16.msra.mxu0 %v2359
        %3769 = vmatpush.bf16.msra.mxu0 %v2357
        %3770 = vmatmul.bf16.gmra.mxu0 %v1626
        %v3771 = vpop.f32.mrf.mxu0
        %v3772 = vadd.f32 %v3683, %v3771
        %v3773 = vpop.f32.mrf.mxu0
        %v3774 = vadd.f32 %v3685, %v3773
        %3775 = vmatmul.bf16.gmra.mxu0 %v1634
        %v3776 = vpop.f32.mrf.mxu0
        %v3777 = vadd.f32 %v3688, %v3776
        %v3778 = vpop.f32.mrf.mxu0
        %v3779 = vadd.f32 %v3690, %v3778
        %3780 = vmatmul.bf16.gmra.mxu0 %v1642
        %v3781 = vpop.f32.mrf.mxu0
        %v3782 = vadd.f32 %v3693, %v3781
        %v3783 = vpop.f32.mrf.mxu0
        %v3784 = vadd.f32 %v3695, %v3783
        %3785 = vmatmul.bf16.gmra.mxu0 %v1650
        %v3786 = vpop.f32.mrf.mxu0
        %v3787 = vadd.f32 %v3698, %v3786
        %v3788 = vpop.f32.mrf.mxu0
        %v3789 = vadd.f32 %v3700, %v3788
        %3790 = vmatmul.bf16.gmra.mxu0 %v1658
        %v3791 = vpop.f32.mrf.mxu0
        %v3792 = vadd.f32 %v3703, %v3791
        %v3793 = vpop.f32.mrf.mxu0
        %v3794 = vadd.f32 %v3705, %v3793
        %3795 = vmatmul.bf16.gmra.mxu0 %v1666
        %v3796 = vpop.f32.mrf.mxu0
        %v3797 = vadd.f32 %v3708, %v3796
        %v3798 = vpop.f32.mrf.mxu0
        %v3799 = vadd.f32 %v3710, %v3798
        %3800 = vmatmul.bf16.gmra.mxu0 %v1674
        %v3801 = vpop.f32.mrf.mxu0
        %v3802 = vadd.f32 %v3713, %v3801
        %v3803 = vpop.f32.mrf.mxu0
        %v3804 = vadd.f32 %v3715, %v3803
        %3805 = vmatmul.bf16.gmra.mxu0 %v1682
        %v3806 = vpop.f32.mrf.mxu0
        %v3807 = vadd.f32 %v3718, %v3806
        %v3808 = vpop.f32.mrf.mxu0
        %v3809 = vadd.f32 %v3720, %v3808
        %3810 = vmatmul.bf16.gmra.mxu0 %v1690
        %v3811 = vpop.f32.mrf.mxu0
        %v3812 = vadd.f32 %v3723, %v3811
        %v3813 = vpop.f32.mrf.mxu0
        %v3814 = vadd.f32 %v3725, %v3813
        %3815 = vmatmul.bf16.gmra.mxu0 %v1698
        %v3816 = vpop.f32.mrf.mxu0
        %v3817 = vadd.f32 %v3728, %v3816
        %v3818 = vpop.f32.mrf.mxu0
        %v3819 = vadd.f32 %v3730, %v3818
        %3820 = vmatmul.bf16.gmra.mxu0 %v1706
        %v3821 = vpop.f32.mrf.mxu0
        %v3822 = vadd.f32 %v3733, %v3821
        %v3823 = vpop.f32.mrf.mxu0
        %v3824 = vadd.f32 %v3735, %v3823
        %3825 = vmatmul.bf16.gmra.mxu0 %v1714
        %v3826 = vpop.f32.mrf.mxu0
        %v3827 = vadd.f32 %v3738, %v3826
        %v3828 = vpop.f32.mrf.mxu0
        %v3829 = vadd.f32 %v3740, %v3828
        %3830 = vmatmul.bf16.gmra.mxu0 %v1722
        %v3831 = vpop.f32.mrf.mxu0
        %v3832 = vadd.f32 %v3743, %v3831
        %v3833 = vpop.f32.mrf.mxu0
        %v3834 = vadd.f32 %v3745, %v3833
        %3835 = vmatmul.bf16.gmra.mxu0 %v1730
        %v3836 = vpop.f32.mrf.mxu0
        %v3837 = vadd.f32 %v3748, %v3836
        %v3838 = vpop.f32.mrf.mxu0
        %v3839 = vadd.f32 %v3750, %v3838
        %3840 = vmatmul.bf16.gmra.mxu0 %v1738
        %v3841 = vpop.f32.mrf.mxu0
        %v3842 = vadd.f32 %v3753, %v3841
        %v3843 = vpop.f32.mrf.mxu0
        %v3844 = vadd.f32 %v3755, %v3843
        %3845 = vmatmul.bf16.gmra.mxu0 %v1746
        %v3846 = vpop.f32.mrf.mxu0
        %v3847 = vadd.f32 %v3758, %v3846
        %v3848 = vpop.f32.mrf.mxu0
        %v3849 = vadd.f32 %v3760, %v3848
        %3850 = vdwg.mxu0
        %3851 = vmatpush.bf16.msra.mxu0 %v2387
        %3852 = vmatpush.bf16.msra.mxu0 %v2385
        %3853 = vmatpush.bf16.msra.mxu0 %v2383
        %3854 = vmatpush.bf16.msra.mxu0 %v2381
        %3855 = vmatpush.bf16.msra.mxu0 %v2379
        %3856 = vmatpush.bf16.msra.mxu0 %v2377
        %3857 = vmatpush.bf16.msra.mxu0 %v2375
        %3858 = vmatpush.bf16.msra.mxu0 %v2373
        %3859 = vmatmul.bf16.gmra.mxu0 %v1627
        %v3860 = vpop.f32.mrf.mxu0
        %v3861 = vadd.f32 %v3772, %v3860
        %v3862 = vpop.f32.mrf.mxu0
        %v3863 = vadd.f32 %v3774, %v3862
        %3864 = vmatmul.bf16.gmra.mxu0 %v1635
        %v3865 = vpop.f32.mrf.mxu0
        %v3866 = vadd.f32 %v3777, %v3865
        %v3867 = vpop.f32.mrf.mxu0
        %v3868 = vadd.f32 %v3779, %v3867
        %3869 = vmatmul.bf16.gmra.mxu0 %v1643
        %v3870 = vpop.f32.mrf.mxu0
        %v3871 = vadd.f32 %v3782, %v3870
        %v3872 = vpop.f32.mrf.mxu0
        %v3873 = vadd.f32 %v3784, %v3872
        %3874 = vmatmul.bf16.gmra.mxu0 %v1651
        %v3875 = vpop.f32.mrf.mxu0
        %v3876 = vadd.f32 %v3787, %v3875
        %v3877 = vpop.f32.mrf.mxu0
        %v3878 = vadd.f32 %v3789, %v3877
        %3879 = vmatmul.bf16.gmra.mxu0 %v1659
        %v3880 = vpop.f32.mrf.mxu0
        %v3881 = vadd.f32 %v3792, %v3880
        %v3882 = vpop.f32.mrf.mxu0
        %v3883 = vadd.f32 %v3794, %v3882
        %3884 = vmatmul.bf16.gmra.mxu0 %v1667
        %v3885 = vpop.f32.mrf.mxu0
        %v3886 = vadd.f32 %v3797, %v3885
        %v3887 = vpop.f32.mrf.mxu0
        %v3888 = vadd.f32 %v3799, %v3887
        %3889 = vmatmul.bf16.gmra.mxu0 %v1675
        %v3890 = vpop.f32.mrf.mxu0
        %v3891 = vadd.f32 %v3802, %v3890
        %v3892 = vpop.f32.mrf.mxu0
        %v3893 = vadd.f32 %v3804, %v3892
        %3894 = vmatmul.bf16.gmra.mxu0 %v1683
        %v3895 = vpop.f32.mrf.mxu0
        %v3896 = vadd.f32 %v3807, %v3895
        %v3897 = vpop.f32.mrf.mxu0
        %v3898 = vadd.f32 %v3809, %v3897
        %3899 = vmatmul.bf16.gmra.mxu0 %v1691
        %v3900 = vpop.f32.mrf.mxu0
        %v3901 = vadd.f32 %v3812, %v3900
        %v3902 = vpop.f32.mrf.mxu0
        %v3903 = vadd.f32 %v3814, %v3902
        %3904 = vmatmul.bf16.gmra.mxu0 %v1699
        %v3905 = vpop.f32.mrf.mxu0
        %v3906 = vadd.f32 %v3817, %v3905
        %v3907 = vpop.f32.mrf.mxu0
        %v3908 = vadd.f32 %v3819, %v3907
        %3909 = vmatmul.bf16.gmra.mxu0 %v1707
        %v3910 = vpop.f32.mrf.mxu0
        %v3911 = vadd.f32 %v3822, %v3910
        %v3912 = vpop.f32.mrf.mxu0
        %v3913 = vadd.f32 %v3824, %v3912
        %3914 = vmatmul.bf16.gmra.mxu0 %v1715
        %v3915 = vpop.f32.mrf.mxu0
        %v3916 = vadd.f32 %v3827, %v3915
        %v3917 = vpop.f32.mrf.mxu0
        %v3918 = vadd.f32 %v3829, %v3917
        %3919 = vmatmul.bf16.gmra.mxu0 %v1723
        %v3920 = vpop.f32.mrf.mxu0
        %v3921 = vadd.f32 %v3832, %v3920
        %v3922 = vpop.f32.mrf.mxu0
        %v3923 = vadd.f32 %v3834, %v3922
        %3924 = vmatmul.bf16.gmra.mxu0 %v1731
        %v3925 = vpop.f32.mrf.mxu0
        %v3926 = vadd.f32 %v3837, %v3925
        %v3927 = vpop.f32.mrf.mxu0
        %v3928 = vadd.f32 %v3839, %v3927
        %3929 = vmatmul.bf16.gmra.mxu0 %v1739
        %v3930 = vpop.f32.mrf.mxu0
        %v3931 = vadd.f32 %v3842, %v3930
        %v3932 = vpop.f32.mrf.mxu0
        %v3933 = vadd.f32 %v3844, %v3932
        %3934 = vmatmul.bf16.gmra.mxu0 %v1747
        %v3935 = vpop.f32.mrf.mxu0
        %v3936 = vadd.f32 %v3847, %v3935
        %v3937 = vpop.f32.mrf.mxu0
        %v3938 = vadd.f32 %v3849, %v3937
        %3939 = vdwg.mxu0
        %v3940 = vadd.f32 %v916, %v3149
        %v3941 = vadd.f32 %v917, %v3861
        %v3942 = vadd.f32 %v918, %v3151
        %v3943 = vadd.f32 %v919, %v3863
        %v3944 = vadd.f32 %v920, %v3154
        %v3945 = vadd.f32 %v921, %v3866
        %v3946 = vadd.f32 %v922, %v3156
        %v3947 = vadd.f32 %v923, %v3868
        %v3948 = vadd.f32 %v924, %v3159
        %v3949 = vadd.f32 %v925, %v3871
        %v3950 = vadd.f32 %v926, %v3161
        %v3951 = vadd.f32 %v927, %v3873
        %v3952 = vadd.f32 %v928, %v3164
        %v3953 = vadd.f32 %v929, %v3876
        %v3954 = vadd.f32 %v930, %v3166
        %v3955 = vadd.f32 %v931, %v3878
        %v3956 = vadd.f32 %v932, %v3169
        %v3957 = vadd.f32 %v933, %v3881
        %v3958 = vadd.f32 %v934, %v3171
        %v3959 = vadd.f32 %v935, %v3883
        %v3960 = vadd.f32 %v936, %v3174
        %v3961 = vadd.f32 %v937, %v3886
        %v3962 = vadd.f32 %v938, %v3176
        %v3963 = vadd.f32 %v939, %v3888
        %v3964 = vadd.f32 %v940, %v3179
        %v3965 = vadd.f32 %v941, %v3891
        %v3966 = vadd.f32 %v942, %v3181
        %v3967 = vadd.f32 %v943, %v3893
        %v3968 = vadd.f32 %v944, %v3184
        %v3969 = vadd.f32 %v945, %v3896
        %v3970 = vadd.f32 %v946, %v3186
        %v3971 = vadd.f32 %v947, %v3898
        %v3972 = vadd.f32 %v948, %v3189
        %v3973 = vadd.f32 %v949, %v3901
        %v3974 = vadd.f32 %v950, %v3191
        %v3975 = vadd.f32 %v951, %v3903
        %v3976 = vadd.f32 %v952, %v3194
        %v3977 = vadd.f32 %v953, %v3906
        %v3978 = vadd.f32 %v954, %v3196
        %v3979 = vadd.f32 %v955, %v3908
        %v3980 = vadd.f32 %v956, %v3199
        %v3981 = vadd.f32 %v957, %v3911
        %v3982 = vadd.f32 %v958, %v3201
        %v3983 = vadd.f32 %v959, %v3913
        %v3984 = vadd.f32 %v960, %v3204
        %v3985 = vadd.f32 %v961, %v3916
        %v3986 = vadd.f32 %v962, %v3206
        %v3987 = vadd.f32 %v963, %v3918
        %v3988 = vadd.f32 %v964, %v3209
        %v3989 = vadd.f32 %v965, %v3921
        %v3990 = vadd.f32 %v966, %v3211
        %v3991 = vadd.f32 %v967, %v3923
        %v3992 = vadd.f32 %v968, %v3214
        %v3993 = vadd.f32 %v969, %v3926
        %v3994 = vadd.f32 %v970, %v3216
        %v3995 = vadd.f32 %v971, %v3928
        %v3996 = vadd.f32 %v972, %v3219
        %v3997 = vadd.f32 %v973, %v3931
        %v3998 = vadd.f32 %v974, %v3221
        %v3999 = vadd.f32 %v975, %v3933
        %v4000 = vadd.f32 %v976, %v3224
        %v4001 = vadd.f32 %v977, %v3936
        %v4002 = vadd.f32 %v978, %v3226
        %v4003 = vadd.f32 %v979, %v3938
        %4004 = vst [vmem:[%s820] sm:$0xff] %v3940
        %4005 = vst [vmem:[%s820 + $0x8] sm:$0xff] %v3941
        %4006 = vst [vmem:[%s820 + $0x10] sm:$0xff] %v3942
        %4007 = vst [vmem:[%s820 + $0x18] sm:$0xff] %v3943
        %4008 = vst [vmem:[%s820 + $0x20] sm:$0xff] %v3944
        %4009 = vst [vmem:[%s820 + $0x28] sm:$0xff] %v3945
        %4010 = vst [vmem:[%s820 + $0x30] sm:$0xff] %v3946
        %4011 = vst [vmem:[%s820 + $0x38] sm:$0xff] %v3947
        %4012 = vst [vmem:[%s820 + $0x40] sm:$0xff] %v3948
        %4013 = vst [vmem:[%s820 + $0x48] sm:$0xff] %v3949
        %4014 = vst [vmem:[%s820 + $0x50] sm:$0xff] %v3950
        %4015 = vst [vmem:[%s820 + $0x58] sm:$0xff] %v3951
        %4016 = vst [vmem:[%s820 + $0x60] sm:$0xff] %v3952
        %4017 = vst [vmem:[%s820 + $0x68] sm:$0xff] %v3953
        %4018 = vst [vmem:[%s820 + $0x70] sm:$0xff] %v3954
        %4019 = vst [vmem:[%s820 + $0x78] sm:$0xff] %v3955
        %4020 = vst [vmem:[%s820 + $0x80] sm:$0xff] %v3956
        %4021 = vst [vmem:[%s820 + $0x88] sm:$0xff] %v3957
        %4022 = vst [vmem:[%s820 + $0x90] sm:$0xff] %v3958
        %4023 = vst [vmem:[%s820 + $0x98] sm:$0xff] %v3959
        %4024 = vst [vmem:[%s820 + $0xa0] sm:$0xff] %v3960
        %4025 = vst [vmem:[%s820 + $0xa8] sm:$0xff] %v3961
        %4026 = vst [vmem:[%s820 + $0xb0] sm:$0xff] %v3962
        %4027 = vst [vmem:[%s820 + $0xb8] sm:$0xff] %v3963
        %4028 = vst [vmem:[%s820 + $0xc0] sm:$0xff] %v3964
        %4029 = vst [vmem:[%s820 + $0xc8] sm:$0xff] %v3965
        %4030 = vst [vmem:[%s820 + $0xd0] sm:$0xff] %v3966
        %4031 = vst [vmem:[%s820 + $0xd8] sm:$0xff] %v3967
        %4032 = vst [vmem:[%s820 + $0xe0] sm:$0xff] %v3968
        %4033 = vst [vmem:[%s820 + $0xe8] sm:$0xff] %v3969
        %4034 = vst [vmem:[%s820 + $0xf0] sm:$0xff] %v3970
        %4035 = vst [vmem:[%s820 + $0xf8] sm:$0xff] %v3971
        %4036 = vst [vmem:[%s820 + $0x100] sm:$0xff] %v3972
        %4037 = vst [vmem:[%s820 + $0x108] sm:$0xff] %v3973
        %4038 = vst [vmem:[%s820 + $0x110] sm:$0xff] %v3974
        %4039 = vst [vmem:[%s820 + $0x118] sm:$0xff] %v3975
        %4040 = vst [vmem:[%s820 + $0x120] sm:$0xff] %v3976
        %4041 = vst [vmem:[%s820 + $0x128] sm:$0xff] %v3977
        %4042 = vst [vmem:[%s820 + $0x130] sm:$0xff] %v3978
        %4043 = vst [vmem:[%s820 + $0x138] sm:$0xff] %v3979
        %4044 = vst [vmem:[%s820 + $0x140] sm:$0xff] %v3980
        %4045 = vst [vmem:[%s820 + $0x148] sm:$0xff] %v3981
        %4046 = vst [vmem:[%s820 + $0x150] sm:$0xff] %v3982
        %4047 = vst [vmem:[%s820 + $0x158] sm:$0xff] %v3983
        %4048 = vst [vmem:[%s820 + $0x160] sm:$0xff] %v3984
        %4049 = vst [vmem:[%s820 + $0x168] sm:$0xff] %v3985
        %4050 = vst [vmem:[%s820 + $0x170] sm:$0xff] %v3986
        %4051 = vst [vmem:[%s820 + $0x178] sm:$0xff] %v3987
        %4052 = vst [vmem:[%s820 + $0x180] sm:$0xff] %v3988
        %4053 = vst [vmem:[%s820 + $0x188] sm:$0xff] %v3989
        %4054 = vst [vmem:[%s820 + $0x190] sm:$0xff] %v3990
        %4055 = vst [vmem:[%s820 + $0x198] sm:$0xff] %v3991
        %4056 = vst [vmem:[%s820 + $0x1a0] sm:$0xff] %v3992
        %4057 = vst [vmem:[%s820 + $0x1a8] sm:$0xff] %v3993
        %4058 = vst [vmem:[%s820 + $0x1b0] sm:$0xff] %v3994
        %4059 = vst [vmem:[%s820 + $0x1b8] sm:$0xff] %v3995
        %4060 = vst [vmem:[%s820 + $0x1c0] sm:$0xff] %v3996
        %4061 = vst [vmem:[%s820 + $0x1c8] sm:$0xff] %v3997
        %4062 = vst [vmem:[%s820 + $0x1d0] sm:$0xff] %v3998
        %4063 = vst [vmem:[%s820 + $0x1d8] sm:$0xff] %v3999
        %4064 = vst [vmem:[%s820 + $0x1e0] sm:$0xff] %v4000
        %4065 = vst [vmem:[%s820 + $0x1e8] sm:$0xff] %v4001
        %4066 = vst [vmem:[%s820 + $0x1f0] sm:$0xff] %v4002
        %4067 = vst [vmem:[%s820 + $0x1f8] sm:$0xff] %v4003
        // Predicated region
        $region79: #{_normed_linear_pallas.1} parent=69 // pred_check
          %p4068 = pneg %p848
        $region80: #{_normed_linear_pallas.1} parent=69 // pred_check_branch
          %4070 = sbr.rel (%p4068) target = $region82
        $region81: #{_normed_linear_pallas.1} parent=69 // pred_region
          %v4071 = vld [vmem:[%s820] sm:$0xff]
          %v4072 = vld [vmem:[%s820 + $0x8] sm:$0xff]
          %v4073 = vld [vmem:[%s820 + $0x10] sm:$0xff]
          %v4074 = vld [vmem:[%s820 + $0x18] sm:$0xff]
          %v4075 = vld [vmem:[%s820 + $0x20] sm:$0xff]
          %v4076 = vld [vmem:[%s820 + $0x28] sm:$0xff]
          %v4077 = vld [vmem:[%s820 + $0x30] sm:$0xff]
          %v4078 = vld [vmem:[%s820 + $0x38] sm:$0xff]
          %v4079 = vld [vmem:[%s820 + $0x40] sm:$0xff]
          %v4080 = vld [vmem:[%s820 + $0x48] sm:$0xff]
          %v4081 = vld [vmem:[%s820 + $0x50] sm:$0xff]
          %v4082 = vld [vmem:[%s820 + $0x58] sm:$0xff]
          %v4083 = vld [vmem:[%s820 + $0x60] sm:$0xff]
          %v4084 = vld [vmem:[%s820 + $0x68] sm:$0xff]
          %v4085 = vld [vmem:[%s820 + $0x70] sm:$0xff]
          %v4086 = vld [vmem:[%s820 + $0x78] sm:$0xff]
          %v4087 = vld [vmem:[%s820 + $0x80] sm:$0xff]
          %v4088 = vld [vmem:[%s820 + $0x88] sm:$0xff]
          %v4089 = vld [vmem:[%s820 + $0x90] sm:$0xff]
          %v4090 = vld [vmem:[%s820 + $0x98] sm:$0xff]
          %v4091 = vld [vmem:[%s820 + $0xa0] sm:$0xff]
          %v4092 = vld [vmem:[%s820 + $0xa8] sm:$0xff]
          %v4093 = vld [vmem:[%s820 + $0xb0] sm:$0xff]
          %v4094 = vld [vmem:[%s820 + $0xb8] sm:$0xff]
          %v4095 = vld [vmem:[%s820 + $0xc0] sm:$0xff]
          %v4096 = vld [vmem:[%s820 + $0xc8] sm:$0xff]
          %v4097 = vld [vmem:[%s820 + $0xd0] sm:$0xff]
          %v4098 = vld [vmem:[%s820 + $0xd8] sm:$0xff]
          %v4099 = vld [vmem:[%s820 + $0xe0] sm:$0xff]
          %v4100 = vld [vmem:[%s820 + $0xe8] sm:$0xff]
          %v4101 = vld [vmem:[%s820 + $0xf0] sm:$0xff]
          %v4102 = vld [vmem:[%s820 + $0xf8] sm:$0xff]
          %v4103 = vld [vmem:[%s820 + $0x100] sm:$0xff]
          %v4104 = vld [vmem:[%s820 + $0x108] sm:$0xff]
          %v4105 = vld [vmem:[%s820 + $0x110] sm:$0xff]
          %v4106 = vld [vmem:[%s820 + $0x118] sm:$0xff]
          %v4107 = vld [vmem:[%s820 + $0x120] sm:$0xff]
          %v4108 = vld [vmem:[%s820 + $0x128] sm:$0xff]
          %v4109 = vld [vmem:[%s820 + $0x130] sm:$0xff]
          %v4110 = vld [vmem:[%s820 + $0x138] sm:$0xff]
          %v4111 = vld [vmem:[%s820 + $0x140] sm:$0xff]
          %v4112 = vld [vmem:[%s820 + $0x148] sm:$0xff]
          %v4113 = vld [vmem:[%s820 + $0x150] sm:$0xff]
          %v4114 = vld [vmem:[%s820 + $0x158] sm:$0xff]
          %v4115 = vld [vmem:[%s820 + $0x160] sm:$0xff]
          %v4116 = vld [vmem:[%s820 + $0x168] sm:$0xff]
          %v4117 = vld [vmem:[%s820 + $0x170] sm:$0xff]
          %v4118 = vld [vmem:[%s820 + $0x178] sm:$0xff]
          %v4119 = vld [vmem:[%s820 + $0x180] sm:$0xff]
          %v4120 = vld [vmem:[%s820 + $0x188] sm:$0xff]
          %v4121 = vld [vmem:[%s820 + $0x190] sm:$0xff]
          %v4122 = vld [vmem:[%s820 + $0x198] sm:$0xff]
          %v4123 = vld [vmem:[%s820 + $0x1a0] sm:$0xff]
          %v4124 = vld [vmem:[%s820 + $0x1a8] sm:$0xff]
          %v4125 = vld [vmem:[%s820 + $0x1b0] sm:$0xff]
          %v4126 = vld [vmem:[%s820 + $0x1b8] sm:$0xff]
          %v4127 = vld [vmem:[%s820 + $0x1c0] sm:$0xff]
          %v4128 = vld [vmem:[%s820 + $0x1c8] sm:$0xff]
          %v4129 = vld [vmem:[%s820 + $0x1d0] sm:$0xff]
          %v4130 = vld [vmem:[%s820 + $0x1d8] sm:$0xff]
          %v4131 = vld [vmem:[%s820 + $0x1e0] sm:$0xff]
          %v4132 = vld [vmem:[%s820 + $0x1e8] sm:$0xff]
          %v4133 = vld [vmem:[%s820 + $0x1f0] sm:$0xff]
          %v4134 = vld [vmem:[%s820 + $0x1f8] sm:$0xff]
          %v4135 = vld [vmem:[%s839] sm:$0xff]
          %v4136 = vld [vmem:[%s839 + $0x8] sm:$0xff]
          %v4137 = vld [vmem:[%s839 + $0x10] sm:$0xff]
          %v4138 = vld [vmem:[%s839 + $0x18] sm:$0xff]
          %v4139 = vld [vmem:[%s839 + $0x20] sm:$0xff]
          %v4140 = vld [vmem:[%s839 + $0x28] sm:$0xff]
          %v4141 = vld [vmem:[%s839 + $0x30] sm:$0xff]
          %v4142 = vld [vmem:[%s839 + $0x38] sm:$0xff]
          %v4143 = vld [vmem:[%s839 + $0x40] sm:$0xff]
          %v4144 = vld [vmem:[%s839 + $0x48] sm:$0xff]
          %v4145 = vld [vmem:[%s839 + $0x50] sm:$0xff]
          %v4146 = vld [vmem:[%s839 + $0x58] sm:$0xff]
          %v4147 = vld [vmem:[%s839 + $0x60] sm:$0xff]
          %v4148 = vld [vmem:[%s839 + $0x68] sm:$0xff]
          %v4149 = vld [vmem:[%s839 + $0x70] sm:$0xff]
          %v4150 = vld [vmem:[%s839 + $0x78] sm:$0xff]
          %v4151 = vld [vmem:[%s839 + $0x80] sm:$0xff]
          %v4152 = vld [vmem:[%s839 + $0x88] sm:$0xff]
          %v4153 = vld [vmem:[%s839 + $0x90] sm:$0xff]
          %v4154 = vld [vmem:[%s839 + $0x98] sm:$0xff]
          %v4155 = vld [vmem:[%s839 + $0xa0] sm:$0xff]
          %v4156 = vld [vmem:[%s839 + $0xa8] sm:$0xff]
          %v4157 = vld [vmem:[%s839 + $0xb0] sm:$0xff]
          %v4158 = vld [vmem:[%s839 + $0xb8] sm:$0xff]
          %v4159 = vld [vmem:[%s839 + $0xc0] sm:$0xff]
          %v4160 = vld [vmem:[%s839 + $0xc8] sm:$0xff]
          %v4161 = vld [vmem:[%s839 + $0xd0] sm:$0xff]
          %v4162 = vld [vmem:[%s839 + $0xd8] sm:$0xff]
          %v4163 = vld [vmem:[%s839 + $0xe0] sm:$0xff]
          %v4164 = vld [vmem:[%s839 + $0xe8] sm:$0xff]
          %v4165 = vld [vmem:[%s839 + $0xf0] sm:$0xff]
          %v4166 = vld [vmem:[%s839 + $0xf8] sm:$0xff]
          %4168 = vset.pattern.permute.xlu0 0
          %4169 = vperm.xlu0 %4168, %v4135
          %v4170 = vpop.permute.xlu0 %4169
          %4173 = vset.pattern.permute.xlu0 0
          %4174 = vperm.xlu0 %4173, %v4136
          %v4175 = vpop.permute.xlu0 %4174
          %4178 = vset.pattern.permute.xlu0 0
          %4179 = vperm.xlu0 %4178, %v4137
          %v4180 = vpop.permute.xlu0 %4179
          %4183 = vset.pattern.permute.xlu0 0
          %4184 = vperm.xlu0 %4183, %v4138
          %v4185 = vpop.permute.xlu0 %4184
          %4188 = vset.pattern.permute.xlu0 0
          %4189 = vperm.xlu0 %4188, %v4139
          %v4190 = vpop.permute.xlu0 %4189
          %4193 = vset.pattern.permute.xlu0 0
          %4194 = vperm.xlu0 %4193, %v4140
          %v4195 = vpop.permute.xlu0 %4194
          %4198 = vset.pattern.permute.xlu0 0
          %4199 = vperm.xlu0 %4198, %v4141
          %v4200 = vpop.permute.xlu0 %4199
          %4203 = vset.pattern.permute.xlu0 0
          %4204 = vperm.xlu0 %4203, %v4142
          %v4205 = vpop.permute.xlu0 %4204
          %4208 = vset.pattern.permute.xlu0 0
          %4209 = vperm.xlu0 %4208, %v4143
          %v4210 = vpop.permute.xlu0 %4209
          %4213 = vset.pattern.permute.xlu0 0
          %4214 = vperm.xlu0 %4213, %v4144
          %v4215 = vpop.permute.xlu0 %4214
          %4218 = vset.pattern.permute.xlu0 0
          %4219 = vperm.xlu0 %4218, %v4145
          %v4220 = vpop.permute.xlu0 %4219
          %4223 = vset.pattern.permute.xlu0 0
          %4224 = vperm.xlu0 %4223, %v4146
          %v4225 = vpop.permute.xlu0 %4224
          %4228 = vset.pattern.permute.xlu0 0
          %4229 = vperm.xlu0 %4228, %v4147
          %v4230 = vpop.permute.xlu0 %4229
          %4233 = vset.pattern.permute.xlu0 0
          %4234 = vperm.xlu0 %4233, %v4148
          %v4235 = vpop.permute.xlu0 %4234
          %4238 = vset.pattern.permute.xlu0 0
          %4239 = vperm.xlu0 %4238, %v4149
          %v4240 = vpop.permute.xlu0 %4239
          %4243 = vset.pattern.permute.xlu0 0
          %4244 = vperm.xlu0 %4243, %v4150
          %v4245 = vpop.permute.xlu0 %4244
          %4248 = vset.pattern.permute.xlu0 0
          %4249 = vperm.xlu0 %4248, %v4151
          %v4250 = vpop.permute.xlu0 %4249
          %4253 = vset.pattern.permute.xlu0 0
          %4254 = vperm.xlu0 %4253, %v4152
          %v4255 = vpop.permute.xlu0 %4254
          %4258 = vset.pattern.permute.xlu0 0
          %4259 = vperm.xlu0 %4258, %v4153
          %v4260 = vpop.permute.xlu0 %4259
          %4263 = vset.pattern.permute.xlu0 0
          %4264 = vperm.xlu0 %4263, %v4154
          %v4265 = vpop.permute.xlu0 %4264
          %4268 = vset.pattern.permute.xlu0 0
          %4269 = vperm.xlu0 %4268, %v4155
          %v4270 = vpop.permute.xlu0 %4269
          %4273 = vset.pattern.permute.xlu0 0
          %4274 = vperm.xlu0 %4273, %v4156
          %v4275 = vpop.permute.xlu0 %4274
          %4278 = vset.pattern.permute.xlu0 0
          %4279 = vperm.xlu0 %4278, %v4157
          %v4280 = vpop.permute.xlu0 %4279
          %4283 = vset.pattern.permute.xlu0 0
          %4284 = vperm.xlu0 %4283, %v4158
          %v4285 = vpop.permute.xlu0 %4284
          %4288 = vset.pattern.permute.xlu0 0
          %4289 = vperm.xlu0 %4288, %v4159
          %v4290 = vpop.permute.xlu0 %4289
          %4293 = vset.pattern.permute.xlu0 0
          %4294 = vperm.xlu0 %4293, %v4160
          %v4295 = vpop.permute.xlu0 %4294
          %4298 = vset.pattern.permute.xlu0 0
          %4299 = vperm.xlu0 %4298, %v4161
          %v4300 = vpop.permute.xlu0 %4299
          %4303 = vset.pattern.permute.xlu0 0
          %4304 = vperm.xlu0 %4303, %v4162
          %v4305 = vpop.permute.xlu0 %4304
          %4308 = vset.pattern.permute.xlu0 0
          %4309 = vperm.xlu0 %4308, %v4163
          %v4310 = vpop.permute.xlu0 %4309
          %4313 = vset.pattern.permute.xlu0 0
          %4314 = vperm.xlu0 %4313, %v4164
          %v4315 = vpop.permute.xlu0 %4314
          %4318 = vset.pattern.permute.xlu0 0
          %4319 = vperm.xlu0 %4318, %v4165
          %v4320 = vpop.permute.xlu0 %4319
          %4323 = vset.pattern.permute.xlu0 0
          %4324 = vperm.xlu0 %4323, %v4166
          %v4325 = vpop.permute.xlu0 %4324
          %v4327 = vmul.f32 %v4071, %v4170
          %v4328 = vmul.f32 %v4072, %v4170
          %v4329 = vmul.f32 %v4073, %v4175
          %v4330 = vmul.f32 %v4074, %v4175
          %v4331 = vmul.f32 %v4075, %v4180
          %v4332 = vmul.f32 %v4076, %v4180
          %v4333 = vmul.f32 %v4077, %v4185
          %v4334 = vmul.f32 %v4078, %v4185
          %v4335 = vmul.f32 %v4079, %v4190
          %v4336 = vmul.f32 %v4080, %v4190
          %v4337 = vmul.f32 %v4081, %v4195
          %v4338 = vmul.f32 %v4082, %v4195
          %v4339 = vmul.f32 %v4083, %v4200
          %v4340 = vmul.f32 %v4084, %v4200
          %v4341 = vmul.f32 %v4085, %v4205
          %v4342 = vmul.f32 %v4086, %v4205
          %v4343 = vmul.f32 %v4087, %v4210
          %v4344 = vmul.f32 %v4088, %v4210
          %v4345 = vmul.f32 %v4089, %v4215
          %v4346 = vmul.f32 %v4090, %v4215
          %v4347 = vmul.f32 %v4091, %v4220
          %v4348 = vmul.f32 %v4092, %v4220
          %v4349 = vmul.f32 %v4093, %v4225
          %v4350 = vmul.f32 %v4094, %v4225
          %v4351 = vmul.f32 %v4095, %v4230
          %v4352 = vmul.f32 %v4096, %v4230
          %v4353 = vmul.f32 %v4097, %v4235
          %v4354 = vmul.f32 %v4098, %v4235
          %v4355 = vmul.f32 %v4099, %v4240
          %v4356 = vmul.f32 %v4100, %v4240
          %v4357 = vmul.f32 %v4101, %v4245
          %v4358 = vmul.f32 %v4102, %v4245
          %v4359 = vmul.f32 %v4103, %v4250
          %v4360 = vmul.f32 %v4104, %v4250
          %v4361 = vmul.f32 %v4105, %v4255
          %v4362 = vmul.f32 %v4106, %v4255
          %v4363 = vmul.f32 %v4107, %v4260
          %v4364 = vmul.f32 %v4108, %v4260
          %v4365 = vmul.f32 %v4109, %v4265
          %v4366 = vmul.f32 %v4110, %v4265
          %v4367 = vmul.f32 %v4111, %v4270
          %v4368 = vmul.f32 %v4112, %v4270
          %v4369 = vmul.f32 %v4113, %v4275
          %v4370 = vmul.f32 %v4114, %v4275
          %v4371 = vmul.f32 %v4115, %v4280
          %v4372 = vmul.f32 %v4116, %v4280
          %v4373 = vmul.f32 %v4117, %v4285
          %v4374 = vmul.f32 %v4118, %v4285
          %v4375 = vmul.f32 %v4119, %v4290
          %v4376 = vmul.f32 %v4120, %v4290
          %v4377 = vmul.f32 %v4121, %v4295
          %v4378 = vmul.f32 %v4122, %v4295
          %v4379 = vmul.f32 %v4123, %v4300
          %v4380 = vmul.f32 %v4124, %v4300
          %v4381 = vmul.f32 %v4125, %v4305
          %v4382 = vmul.f32 %v4126, %v4305
          %v4383 = vmul.f32 %v4127, %v4310
          %v4384 = vmul.f32 %v4128, %v4310
          %v4385 = vmul.f32 %v4129, %v4315
          %v4386 = vmul.f32 %v4130, %v4315
          %v4387 = vmul.f32 %v4131, %v4320
          %v4388 = vmul.f32 %v4132, %v4320
          %v4389 = vmul.f32 %v4133, %v4325
          %v4390 = vmul.f32 %v4134, %v4325
          %v4391 = vld [vmem:[%s844] sm:$0x3]
          %v4393 = vperm.slane %v4391, 0
          %v4394 = vperm.slane %v4391, 1
          %v4397 = vmul.f32 %v4327, %v4393
          %v4398 = vmul.f32 %v4328, %v4394
          %v4399 = vmul.f32 %v4329, %v4393
          %v4400 = vmul.f32 %v4330, %v4394
          %v4401 = vmul.f32 %v4331, %v4393
          %v4402 = vmul.f32 %v4332, %v4394
          %v4403 = vmul.f32 %v4333, %v4393
          %v4404 = vmul.f32 %v4334, %v4394
          %v4405 = vmul.f32 %v4335, %v4393
          %v4406 = vmul.f32 %v4336, %v4394
          %v4407 = vmul.f32 %v4337, %v4393
          %v4408 = vmul.f32 %v4338, %v4394
          %v4409 = vmul.f32 %v4339, %v4393
          %v4410 = vmul.f32 %v4340, %v4394
          %v4411 = vmul.f32 %v4341, %v4393
          %v4412 = vmul.f32 %v4342, %v4394
          %v4413 = vmul.f32 %v4343, %v4393
          %v4414 = vmul.f32 %v4344, %v4394
          %v4415 = vmul.f32 %v4345, %v4393
          %v4416 = vmul.f32 %v4346, %v4394
          %v4417 = vmul.f32 %v4347, %v4393
          %v4418 = vmul.f32 %v4348, %v4394
          %v4419 = vmul.f32 %v4349, %v4393
          %v4420 = vmul.f32 %v4350, %v4394
          %v4421 = vmul.f32 %v4351, %v4393
          %v4422 = vmul.f32 %v4352, %v4394
          %v4423 = vmul.f32 %v4353, %v4393
          %v4424 = vmul.f32 %v4354, %v4394
          %v4425 = vmul.f32 %v4355, %v4393
          %v4426 = vmul.f32 %v4356, %v4394
          %v4427 = vmul.f32 %v4357, %v4393
          %v4428 = vmul.f32 %v4358, %v4394
          %v4429 = vmul.f32 %v4359, %v4393
          %v4430 = vmul.f32 %v4360, %v4394
          %v4431 = vmul.f32 %v4361, %v4393
          %v4432 = vmul.f32 %v4362, %v4394
          %v4433 = vmul.f32 %v4363, %v4393
          %v4434 = vmul.f32 %v4364, %v4394
          %v4435 = vmul.f32 %v4365, %v4393
          %v4436 = vmul.f32 %v4366, %v4394
          %v4437 = vmul.f32 %v4367, %v4393
          %v4438 = vmul.f32 %v4368, %v4394
          %v4439 = vmul.f32 %v4369, %v4393
          %v4440 = vmul.f32 %v4370, %v4394
          %v4441 = vmul.f32 %v4371, %v4393
          %v4442 = vmul.f32 %v4372, %v4394
          %v4443 = vmul.f32 %v4373, %v4393
          %v4444 = vmul.f32 %v4374, %v4394
          %v4445 = vmul.f32 %v4375, %v4393
          %v4446 = vmul.f32 %v4376, %v4394
          %v4447 = vmul.f32 %v4377, %v4393
          %v4448 = vmul.f32 %v4378, %v4394
          %v4449 = vmul.f32 %v4379, %v4393
          %v4450 = vmul.f32 %v4380, %v4394
          %v4451 = vmul.f32 %v4381, %v4393
          %v4452 = vmul.f32 %v4382, %v4394
          %v4453 = vmul.f32 %v4383, %v4393
          %v4454 = vmul.f32 %v4384, %v4394
          %v4455 = vmul.f32 %v4385, %v4393
          %v4456 = vmul.f32 %v4386, %v4394
          %v4457 = vmul.f32 %v4387, %v4393
          %v4458 = vmul.f32 %v4388, %v4394
          %v4459 = vmul.f32 %v4389, %v4393
          %v4460 = vmul.f32 %v4390, %v4394
          %4461 = vst [vmem:[%s820] sm:$0xff] %v4397
          %4462 = vst [vmem:[%s820 + $0x8] sm:$0xff] %v4398
          %4463 = vst [vmem:[%s820 + $0x10] sm:$0xff] %v4399
          %4464 = vst [vmem:[%s820 + $0x18] sm:$0xff] %v4400
          %4465 = vst [vmem:[%s820 + $0x20] sm:$0xff] %v4401
          %4466 = vst [vmem:[%s820 + $0x28] sm:$0xff] %v4402
          %4467 = vst [vmem:[%s820 + $0x30] sm:$0xff] %v4403
          %4468 = vst [vmem:[%s820 + $0x38] sm:$0xff] %v4404
          %4469 = vst [vmem:[%s820 + $0x40] sm:$0xff] %v4405
          %4470 = vst [vmem:[%s820 + $0x48] sm:$0xff] %v4406
          %4471 = vst [vmem:[%s820 + $0x50] sm:$0xff] %v4407
          %4472 = vst [vmem:[%s820 + $0x58] sm:$0xff] %v4408
          %4473 = vst [vmem:[%s820 + $0x60] sm:$0xff] %v4409
          %4474 = vst [vmem:[%s820 + $0x68] sm:$0xff] %v4410
          %4475 = vst [vmem:[%s820 + $0x70] sm:$0xff] %v4411
          %4476 = vst [vmem:[%s820 + $0x78] sm:$0xff] %v4412
          %4477 = vst [vmem:[%s820 + $0x80] sm:$0xff] %v4413
          %4478 = vst [vmem:[%s820 + $0x88] sm:$0xff] %v4414
          %4479 = vst [vmem:[%s820 + $0x90] sm:$0xff] %v4415
          %4480 = vst [vmem:[%s820 + $0x98] sm:$0xff] %v4416
          %4481 = vst [vmem:[%s820 + $0xa0] sm:$0xff] %v4417
          %4482 = vst [vmem:[%s820 + $0xa8] sm:$0xff] %v4418
          %4483 = vst [vmem:[%s820 + $0xb0] sm:$0xff] %v4419
          %4484 = vst [vmem:[%s820 + $0xb8] sm:$0xff] %v4420
          %4485 = vst [vmem:[%s820 + $0xc0] sm:$0xff] %v4421
          %4486 = vst [vmem:[%s820 + $0xc8] sm:$0xff] %v4422
          %4487 = vst [vmem:[%s820 + $0xd0] sm:$0xff] %v4423
          %4488 = vst [vmem:[%s820 + $0xd8] sm:$0xff] %v4424
          %4489 = vst [vmem:[%s820 + $0xe0] sm:$0xff] %v4425
          %4490 = vst [vmem:[%s820 + $0xe8] sm:$0xff] %v4426
          %4491 = vst [vmem:[%s820 + $0xf0] sm:$0xff] %v4427
          %4492 = vst [vmem:[%s820 + $0xf8] sm:$0xff] %v4428
          %4493 = vst [vmem:[%s820 + $0x100] sm:$0xff] %v4429
          %4494 = vst [vmem:[%s820 + $0x108] sm:$0xff] %v4430
          %4495 = vst [vmem:[%s820 + $0x110] sm:$0xff] %v4431
          %4496 = vst [vmem:[%s820 + $0x118] sm:$0xff] %v4432
          %4497 = vst [vmem:[%s820 + $0x120] sm:$0xff] %v4433
          %4498 = vst [vmem:[%s820 + $0x128] sm:$0xff] %v4434
          %4499 = vst [vmem:[%s820 + $0x130] sm:$0xff] %v4435
          %4500 = vst [vmem:[%s820 + $0x138] sm:$0xff] %v4436
          %4501 = vst [vmem:[%s820 + $0x140] sm:$0xff] %v4437
          %4502 = vst [vmem:[%s820 + $0x148] sm:$0xff] %v4438
          %4503 = vst [vmem:[%s820 + $0x150] sm:$0xff] %v4439
          %4504 = vst [vmem:[%s820 + $0x158] sm:$0xff] %v4440
          %4505 = vst [vmem:[%s820 + $0x160] sm:$0xff] %v4441
          %4506 = vst [vmem:[%s820 + $0x168] sm:$0xff] %v4442
          %4507 = vst [vmem:[%s820 + $0x170] sm:$0xff] %v4443
          %4508 = vst [vmem:[%s820 + $0x178] sm:$0xff] %v4444
          %4509 = vst [vmem:[%s820 + $0x180] sm:$0xff] %v4445
          %4510 = vst [vmem:[%s820 + $0x188] sm:$0xff] %v4446
          %4511 = vst [vmem:[%s820 + $0x190] sm:$0xff] %v4447
          %4512 = vst [vmem:[%s820 + $0x198] sm:$0xff] %v4448
          %4513 = vst [vmem:[%s820 + $0x1a0] sm:$0xff] %v4449
          %4514 = vst [vmem:[%s820 + $0x1a8] sm:$0xff] %v4450
          %4515 = vst [vmem:[%s820 + $0x1b0] sm:$0xff] %v4451
          %4516 = vst [vmem:[%s820 + $0x1b8] sm:$0xff] %v4452
          %4517 = vst [vmem:[%s820 + $0x1c0] sm:$0xff] %v4453
          %4518 = vst [vmem:[%s820 + $0x1c8] sm:$0xff] %v4454
          %4519 = vst [vmem:[%s820 + $0x1d0] sm:$0xff] %v4455
          %4520 = vst [vmem:[%s820 + $0x1d8] sm:$0xff] %v4456
          %4521 = vst [vmem:[%s820 + $0x1e0] sm:$0xff] %v4457
          %4522 = vst [vmem:[%s820 + $0x1e8] sm:$0xff] %v4458
          %4523 = vst [vmem:[%s820 + $0x1f0] sm:$0xff] %v4459
          %4524 = vst [vmem:[%s820 + $0x1f8] sm:$0xff] %v4460
        $region82: #{_normed_linear_pallas.1} parent=69 // pred_fallthru
          _
        %s4525 = sand.u32 %s152, 1
        %s4526 = sand.u32 %s152, 1
        %s4527 = smul.addr %s4526, 512
        %s4528 = scalar_lea.vmem [#allocation3], %s4527
        // Predicated region
        $region83: #{_normed_linear_pallas.1} parent=69 // pred_check
          %p4529 = pneg %p162
        $region84: #{_normed_linear_pallas.1} parent=69 // pred_check_branch
          %4531 = sbr.rel (%p4529) target = $region86
        $region85: #{_normed_linear_pallas.1} parent=69 // pred_region
          %s4532 = smul.u32 32, %s20
          %s4533 = smul.u32 2, %s21
          %s4534 = smul.addr %s4532, 4
          %s4535 = sadd.s32 %s4533, %s4534
          %s4536 = smul.addr %s4535, 8
          %s4537 = scalar_lea.vmem %s4, %s4536
          // Predicated region
          $region87: #{_normed_linear_pallas.1} parent=85 // pred_check
            _
          $region88: #{_normed_linear_pallas.1} parent=85 // pred_check_branch
            %4539 = sbr.rel (0) target = $region90
          $region89: #{_normed_linear_pallas.1} parent=85 // pred_region
            // Predicated region
            $region91: #{_normed_linear_pallas.1} parent=89 // pred_check
              _
            $region92: #{_normed_linear_pallas.1} parent=89 // pred_check_branch
              %4541 = sbr.rel (0) target = $region94
            $region93: #{_normed_linear_pallas.1} parent=89 // pred_region
              loop: start=0, step=1, limit=1
              $region95: #{_normed_linear_pallas.1} parent=93 // loop_pre_header
                _
              $region96: #{_normed_linear_pallas.1} parent=93 // loop_header
                %s4543 = sphi 0, %s4547
                %p4544 = scmp.ge.s32.totalorder %s4543, 1
                %s4548 = sphi %s4528, %s4528
                %s4549 = sphi %s4537, %s4537
              $region97: #{_normed_linear_pallas.1} parent=93 // loop_header_branch
                %4546 = sbr.rel (%p4544) target = $region101
              $region98: #{_normed_linear_pallas.1} parent=93 // loop_body
                %v4550 = vld [vmem:[%s4548] sm:$0xff]
                %4551 = vst [vmem:[%s4549] sm:$0xff] %v4550
                %v4552 = vld [vmem:[%s4548 + $0x8] sm:$0xff]
                %4553 = vst [vmem:[%s4549 + $0x8] sm:$0xff] %v4552
                %v4554 = vld [vmem:[%s4548 + $0x10] sm:$0xff]
                %4555 = vst [vmem:[%s4549 + $0x20] sm:$0xff] %v4554
                %v4556 = vld [vmem:[%s4548 + $0x18] sm:$0xff]
                %4557 = vst [vmem:[%s4549 + $0x28] sm:$0xff] %v4556
                %v4558 = vld [vmem:[%s4548 + $0x20] sm:$0xff]
                %4559 = vst [vmem:[%s4549 + $0x40] sm:$0xff] %v4558
                %v4560 = vld [vmem:[%s4548 + $0x28] sm:$0xff]
                %4561 = vst [vmem:[%s4549 + $0x48] sm:$0xff] %v4560
                %v4562 = vld [vmem:[%s4548 + $0x30] sm:$0xff]
                %4563 = vst [vmem:[%s4549 + $0x60] sm:$0xff] %v4562
                %v4564 = vld [vmem:[%s4548 + $0x38] sm:$0xff]
                %4565 = vst [vmem:[%s4549 + $0x68] sm:$0xff] %v4564
                %v4566 = vld [vmem:[%s4548 + $0x40] sm:$0xff]
                %4567 = vst [vmem:[%s4549 + $0x80] sm:$0xff] %v4566
                %v4568 = vld [vmem:[%s4548 + $0x48] sm:$0xff]
                %4569 = vst [vmem:[%s4549 + $0x88] sm:$0xff] %v4568
                %v4570 = vld [vmem:[%s4548 + $0x50] sm:$0xff]
                %4571 = vst [vmem:[%s4549 + $0xa0] sm:$0xff] %v4570
                %v4572 = vld [vmem:[%s4548 + $0x58] sm:$0xff]
                %4573 = vst [vmem:[%s4549 + $0xa8] sm:$0xff] %v4572
                %v4574 = vld [vmem:[%s4548 + $0x60] sm:$0xff]
                %4575 = vst [vmem:[%s4549 + $0xc0] sm:$0xff] %v4574
                %v4576 = vld [vmem:[%s4548 + $0x68] sm:$0xff]
                %4577 = vst [vmem:[%s4549 + $0xc8] sm:$0xff] %v4576
                %v4578 = vld [vmem:[%s4548 + $0x70] sm:$0xff]
                %4579 = vst [vmem:[%s4549 + $0xe0] sm:$0xff] %v4578
                %v4580 = vld [vmem:[%s4548 + $0x78] sm:$0xff]
                %4581 = vst [vmem:[%s4549 + $0xe8] sm:$0xff] %v4580
                %v4582 = vld [vmem:[%s4548 + $0x80] sm:$0xff]
                %4583 = vst [vmem:[%s4549 + $0x100] sm:$0xff] %v4582
                %v4584 = vld [vmem:[%s4548 + $0x88] sm:$0xff]
                %4585 = vst [vmem:[%s4549 + $0x108] sm:$0xff] %v4584
                %v4586 = vld [vmem:[%s4548 + $0x90] sm:$0xff]
                %4587 = vst [vmem:[%s4549 + $0x120] sm:$0xff] %v4586
                %v4588 = vld [vmem:[%s4548 + $0x98] sm:$0xff]
                %4589 = vst [vmem:[%s4549 + $0x128] sm:$0xff] %v4588
                %v4590 = vld [vmem:[%s4548 + $0xa0] sm:$0xff]
                %4591 = vst [vmem:[%s4549 + $0x140] sm:$0xff] %v4590
                %v4592 = vld [vmem:[%s4548 + $0xa8] sm:$0xff]
                %4593 = vst [vmem:[%s4549 + $0x148] sm:$0xff] %v4592
                %v4594 = vld [vmem:[%s4548 + $0xb0] sm:$0xff]
                %4595 = vst [vmem:[%s4549 + $0x160] sm:$0xff] %v4594
                %v4596 = vld [vmem:[%s4548 + $0xb8] sm:$0xff]
                %4597 = vst [vmem:[%s4549 + $0x168] sm:$0xff] %v4596
                %v4598 = vld [vmem:[%s4548 + $0xc0] sm:$0xff]
                %4599 = vst [vmem:[%s4549 + $0x180] sm:$0xff] %v4598
                %v4600 = vld [vmem:[%s4548 + $0xc8] sm:$0xff]
                %4601 = vst [vmem:[%s4549 + $0x188] sm:$0xff] %v4600
                %v4602 = vld [vmem:[%s4548 + $0xd0] sm:$0xff]
                %4603 = vst [vmem:[%s4549 + $0x1a0] sm:$0xff] %v4602
                %v4604 = vld [vmem:[%s4548 + $0xd8] sm:$0xff]
                %4605 = vst [vmem:[%s4549 + $0x1a8] sm:$0xff] %v4604
                %v4606 = vld [vmem:[%s4548 + $0xe0] sm:$0xff]
                %4607 = vst [vmem:[%s4549 + $0x1c0] sm:$0xff] %v4606
                %v4608 = vld [vmem:[%s4548 + $0xe8] sm:$0xff]
                %4609 = vst [vmem:[%s4549 + $0x1c8] sm:$0xff] %v4608
                %v4610 = vld [vmem:[%s4548 + $0xf0] sm:$0xff]
                %4611 = vst [vmem:[%s4549 + $0x1e0] sm:$0xff] %v4610
                %v4612 = vld [vmem:[%s4548 + $0xf8] sm:$0xff]
                %4613 = vst [vmem:[%s4549 + $0x1e8] sm:$0xff] %v4612
                %v4614 = vld [vmem:[%s4548 + $0x100] sm:$0xff]
                %4615 = vst [vmem:[%s4549 + $0x200] sm:$0xff] %v4614
                %v4616 = vld [vmem:[%s4548 + $0x108] sm:$0xff]
                %4617 = vst [vmem:[%s4549 + $0x208] sm:$0xff] %v4616
                %v4618 = vld [vmem:[%s4548 + $0x110] sm:$0xff]
                %4619 = vst [vmem:[%s4549 + $0x220] sm:$0xff] %v4618
                %v4620 = vld [vmem:[%s4548 + $0x118] sm:$0xff]
                %4621 = vst [vmem:[%s4549 + $0x228] sm:$0xff] %v4620
                %v4622 = vld [vmem:[%s4548 + $0x120] sm:$0xff]
                %4623 = vst [vmem:[%s4549 + $0x240] sm:$0xff] %v4622
                %v4624 = vld [vmem:[%s4548 + $0x128] sm:$0xff]
                %4625 = vst [vmem:[%s4549 + $0x248] sm:$0xff] %v4624
                %v4626 = vld [vmem:[%s4548 + $0x130] sm:$0xff]
                %4627 = vst [vmem:[%s4549 + $0x260] sm:$0xff] %v4626
                %v4628 = vld [vmem:[%s4548 + $0x138] sm:$0xff]
                %4629 = vst [vmem:[%s4549 + $0x268] sm:$0xff] %v4628
                %v4630 = vld [vmem:[%s4548 + $0x140] sm:$0xff]
                %4631 = vst [vmem:[%s4549 + $0x280] sm:$0xff] %v4630
                %v4632 = vld [vmem:[%s4548 + $0x148] sm:$0xff]
                %4633 = vst [vmem:[%s4549 + $0x288] sm:$0xff] %v4632
                %v4634 = vld [vmem:[%s4548 + $0x150] sm:$0xff]
                %4635 = vst [vmem:[%s4549 + $0x2a0] sm:$0xff] %v4634
                %v4636 = vld [vmem:[%s4548 + $0x158] sm:$0xff]
                %4637 = vst [vmem:[%s4549 + $0x2a8] sm:$0xff] %v4636
                %v4638 = vld [vmem:[%s4548 + $0x160] sm:$0xff]
                %4639 = vst [vmem:[%s4549 + $0x2c0] sm:$0xff] %v4638
                %v4640 = vld [vmem:[%s4548 + $0x168] sm:$0xff]
                %4641 = vst [vmem:[%s4549 + $0x2c8] sm:$0xff] %v4640
                %v4642 = vld [vmem:[%s4548 + $0x170] sm:$0xff]
                %4643 = vst [vmem:[%s4549 + $0x2e0] sm:$0xff] %v4642
                %v4644 = vld [vmem:[%s4548 + $0x178] sm:$0xff]
                %4645 = vst [vmem:[%s4549 + $0x2e8] sm:$0xff] %v4644
                %v4646 = vld [vmem:[%s4548 + $0x180] sm:$0xff]
                %4647 = vst [vmem:[%s4549 + $0x300] sm:$0xff] %v4646
                %v4648 = vld [vmem:[%s4548 + $0x188] sm:$0xff]
                %4649 = vst [vmem:[%s4549 + $0x308] sm:$0xff] %v4648
                %v4650 = vld [vmem:[%s4548 + $0x190] sm:$0xff]
                %4651 = vst [vmem:[%s4549 + $0x320] sm:$0xff] %v4650
                %v4652 = vld [vmem:[%s4548 + $0x198] sm:$0xff]
                %4653 = vst [vmem:[%s4549 + $0x328] sm:$0xff] %v4652
                %v4654 = vld [vmem:[%s4548 + $0x1a0] sm:$0xff]
                %4655 = vst [vmem:[%s4549 + $0x340] sm:$0xff] %v4654
                %v4656 = vld [vmem:[%s4548 + $0x1a8] sm:$0xff]
                %4657 = vst [vmem:[%s4549 + $0x348] sm:$0xff] %v4656
                %v4658 = vld [vmem:[%s4548 + $0x1b0] sm:$0xff]
                %4659 = vst [vmem:[%s4549 + $0x360] sm:$0xff] %v4658
                %v4660 = vld [vmem:[%s4548 + $0x1b8] sm:$0xff]
                %4661 = vst [vmem:[%s4549 + $0x368] sm:$0xff] %v4660
                %v4662 = vld [vmem:[%s4548 + $0x1c0] sm:$0xff]
                %4663 = vst [vmem:[%s4549 + $0x380] sm:$0xff] %v4662
                %v4664 = vld [vmem:[%s4548 + $0x1c8] sm:$0xff]
                %4665 = vst [vmem:[%s4549 + $0x388] sm:$0xff] %v4664
                %v4666 = vld [vmem:[%s4548 + $0x1d0] sm:$0xff]
                %4667 = vst [vmem:[%s4549 + $0x3a0] sm:$0xff] %v4666
                %v4668 = vld [vmem:[%s4548 + $0x1d8] sm:$0xff]
                %4669 = vst [vmem:[%s4549 + $0x3a8] sm:$0xff] %v4668
                %v4670 = vld [vmem:[%s4548 + $0x1e0] sm:$0xff]
                %4671 = vst [vmem:[%s4549 + $0x3c0] sm:$0xff] %v4670
                %v4672 = vld [vmem:[%s4548 + $0x1e8] sm:$0xff]
                %4673 = vst [vmem:[%s4549 + $0x3c8] sm:$0xff] %v4672
                %v4674 = vld [vmem:[%s4548 + $0x1f0] sm:$0xff]
                %4675 = vst [vmem:[%s4549 + $0x3e0] sm:$0xff] %v4674
                %v4676 = vld [vmem:[%s4548 + $0x1f8] sm:$0xff]
                %4677 = vst [vmem:[%s4549 + $0x3e8] sm:$0xff] %v4676
              $region99: #{_normed_linear_pallas.1} parent=93 // loop_footer
                %s4547 = sadd.s32 1, %s4543
              $region100: #{_normed_linear_pallas.1} parent=93 // loop_footer_branch
                %4542 = sbr.rel target = $region96
              $region101: #{_normed_linear_pallas.1} parent=93 // loop_exit
                _
            $region94: #{_normed_linear_pallas.1} parent=89 // pred_fallthru
              _
            // Predicated region
            $region102: #{_normed_linear_pallas.1} parent=89 // pred_check
              _
            $region103: #{_normed_linear_pallas.1} parent=89 // pred_check_branch
              %4679 = sbr.rel target = $region105
            $region104: #{_normed_linear_pallas.1} parent=89 // pred_region
              _
            $region105: #{_normed_linear_pallas.1} parent=89 // pred_fallthru
              _
          $region90: #{_normed_linear_pallas.1} parent=85 // pred_fallthru
            _
          %4680 = vnop
        $region86: #{_normed_linear_pallas.1} parent=69 // pred_fallthru
          _
      $region70: #{_normed_linear_pallas.1} parent=5 // pred_fallthru
        _
      %p4681 = scmp.le.s32.totalorder 2, %s10
      // Predicated region
      $region106: #{_normed_linear_pallas.1} parent=5 // pred_check
        %p4682 = pneg %p4681
      $region107: #{_normed_linear_pallas.1} parent=5 // pred_check_branch
        %4684 = sbr.rel (%p4682) target = $region109
      $region108: #{_normed_linear_pallas.1} parent=5 // pred_region
        %s4685 = ssub.s32 %s10, 2
        // Predicated region
        $region110: #{_normed_linear_pallas.1} parent=108 // pred_check
          %p4686 = pneg %p168
        $region111: #{_normed_linear_pallas.1} parent=108 // pred_check_branch
          %4688 = sbr.rel (%p4686) target = $region113
        $region112: #{_normed_linear_pallas.1} parent=108 // pred_region
          %s4689 = sand.u32 %s153, 1
          %s4690 = sand.u32 %s153, 1
          %s4691 = smul.addr %s4690, 512
          %s4692 = scalar_lea.vmem [#allocation3], %s4691
        $region113: #{_normed_linear_pallas.1} parent=108 // pred_fallthru
          _
      $region109: #{_normed_linear_pallas.1} parent=5 // pred_fallthru
        _
    $region6: #{_normed_linear_pallas.1} parent=1 // loop_footer
      %s14 = sadd.s32 1, %s10
    $region7: #{_normed_linear_pallas.1} parent=1 // loop_footer_branch
      %9 = sbr.rel target = $region3
    $region8: #{_normed_linear_pallas.1} parent=1 // loop_exit
      _

</llo_original>
